<compile_context>
chip_gen: v7x
topology: tpu7x:2x2x1
jax: 0.10.0
libtpu: 0.0.40
codegen_flags: <defaults>
</compile_context>

<pallas_src>
import functools

import jax
import jax.numpy as jnp
from jax import lax
from jax.experimental import pallas as pl
from jax.experimental.pallas import tpu as pltpu


# ------------------------------ fused kernel --------------------------------

def _c2f_tsa_fused_kernel(*refs, n, c, H, W, inv_temp):
    """Processes one batch element per grid step.  Activations are (C, H*W) f32."""
    HW = H * W
    n_feats = 2 + n

    x_ref = refs[0]
    masks_ref = refs[1]
    w1_ref, s1_ref, b1_ref = refs[2:5]
    m_refs = refs[5:5 + 6 * n]
    w2_refs = refs[5 + 6 * n:5 + 6 * n + n_feats]
    s2_ref, b2_ref = refs[5 + 6 * n + n_feats:7 + 6 * n + n_feats]
    o_ref = refs[7 + 6 * n + n_feats]

    masks = masks_ref[...]                                  # (9, HW) f32, host-built

    def conv3x3_bn_silu(xc, w_ref_, s_ref_, b_ref_):
        # xc: (Cin, HW)   w_ref_: (9, Cout, Cin)   s/b: (Cout, 1)
        w = w_ref_[...]
        cout = w.shape[1]
        acc = jnp.zeros((cout, HW), jnp.float32)
        for t in range(9):
            dy, dx = divmod(t, 3)
            off = (dy - 1) * W + (dx - 1)
            shifted = xc if off == 0 else pltpu.roll(xc, (-off) % HW, axis=1)
            if t != 4:                                      # center tap has no halo
                shifted = shifted * masks[t:t + 1, :]       # zero the wrapped halo
            acc = acc + jnp.dot(w[t], shifted, preferred_element_type=jnp.float32)
        y = acc * s_ref_[...] + b_ref_[...]                 # folded BN
        return y * jax.nn.sigmoid(y)                        # SiLU

    def channel_attention(xc):
        # ScaledDotProductAttention over channels: (C, HW) -> (C, HW)
        g = lax.dot_general(xc, xc, (((1,), (1,)), ((), ())),
                            preferred_element_type=jnp.float32) * inv_temp
        g = g - jnp.max(g, axis=-1, keepdims=True)
        p = jnp.exp(g)
        attn = p / jnp.sum(p, axis=-1, keepdims=True)
        # TODO(synk): nn.Dropout(0.1) on attn -> eval-mode identity.
        return jnp.dot(attn, xc, preferred_element_type=jnp.float32)

    # ---- cv1: 1x1 conv + BN + SiLU (lane-dense (2c, HW) output) ----
    x = x_ref[0]                                            # (C1, HW)
    y = jnp.dot(w1_ref[...], x, preferred_element_type=jnp.float32)
    y = y * s1_ref[...] + b1_ref[...]
    y = y * jax.nn.sigmoid(y)

    # ---- chunk(2) along channels + n bottlenecks (shortcut=False) ----
    feats = [y[:c], y[c:]]
    cur = feats[-1]
    for i in range(n):
        mw1, ms1, mb1, mw2, ms2, mb2 = m_refs[6 * i:6 * i + 6]
        h = conv3x3_bn_silu(cur, mw1, ms1, mb1)
        h = conv3x3_bn_silu(h, mw2, ms2, mb2)
        cur = channel_attention(h)
        feats.append(cur)

    # ---- cv2: 1x1 conv + BN + SiLU over the (virtual) channel concat ----
    c2 = s2_ref.shape[0]
    acc = jnp.zeros((c2, HW), jnp.float32)
    for idx, f in enumerate(feats):                         # per-chunk weight, no concat
        acc = acc + jnp.dot(w2_refs[idx][...], f,
                            preferred_element_type=jnp.float32)
    out = acc * s2_ref[...] + b2_ref[...]
    o_ref[0] = out * jax.nn.sigmoid(out)                    # lane-dense store


# ------------------------------- host wrapper --------------------------------

def c2f_tsa_forward(x_nchw, params, c, n):
    N, C1, H, W = x_nchw.shape
    HW = H * W
    x_flat = x_nchw.reshape(N, C1, HW)         # NCHW is already channel-major

    # Boundary masks for the 9 taps of a 3x3 'same' conv on the flat HW axis
    # (constant per (H, W); built once on host, shared by all convs / batches).
    pos = jnp.arange(HW, dtype=jnp.int32)
    row, col = pos // W, pos % W
    mask_list = []
    for t in range(9):
        dy, dx = divmod(t, 3)
        ry = row + (dy - 1)
        cx = col + (dx - 1)
        valid = (ry >= 0) & (ry < H) & (cx >= 0) & (cx < W)
        mask_list.append(valid.astype(jnp.float32))
    masks = jnp.stack(mask_list, axis=0)                    # (9, HW)

    w1, s1, b1 = params["cv1"]
    w2, s2, b2 = params["cv2"]
    c2 = w2.shape[1]
    n_feats = 2 + n

    inputs = [x_flat, masks,
              jnp.transpose(w1), s1.reshape(-1, 1), b1.reshape(-1, 1)]
    for i in range(n):
        p = params["m"][i]
        for key_ in ("cv1", "cv2"):
            w9, s, b = p[key_]
            inputs += [jnp.transpose(w9, (0, 2, 1)),        # (9, Cout, Cin)
                       s.reshape(-1, 1), b.reshape(-1, 1)]
    w2t = jnp.transpose(w2)                                 # (c2, (2+n)*c)
    for idx in range(n_feats):                              # pre-split per feature
        inputs.append(w2t[:, idx * c:(idx + 1) * c])
    inputs += [s2.reshape(-1, 1), b2.reshape(-1, 1)]

    def _bcast_spec(a):
        nd = a.ndim
        return pl.BlockSpec(a.shape, lambda b, _nd=nd: (0,) * _nd)

    in_specs = [pl.BlockSpec((1, C1, HW), lambda b: (b, 0, 0))]
    in_specs += [_bcast_spec(a) for a in inputs[1:]]

    kernel = functools.partial(_c2f_tsa_fused_kernel, n=n, c=c, H=H, W=W,
                               inv_temp=1.0 / (float(c) ** 0.5))

    out = pl.pallas_call(
        kernel,
        out_shape=jax.ShapeDtypeStruct((N, c2, HW), jnp.float32),
        grid=(N,),
        in_specs=in_specs,
        out_specs=pl.BlockSpec((1, c2, HW), lambda b: (b, 0, 0)),
        compiler_params=pltpu.CompilerParams(
            dimension_semantics=("parallel",)),
    )(*inputs)
    return out.reshape(N, c2, H, W)             # already NCHW


# --------------------------- parameters (synthetic) ---------------------------

def _fold_bn(gamma, beta, mean, var, eps=1e-5):
    scale = gamma / jnp.sqrt(var + eps)
    bias = beta - mean * scale
    return scale, bias


def make_conv_params(key, cin, cout, k):
    """Deterministic synthetic Conv(cin, cout, k) + BatchNorm params (BN folded)."""
    kw, kg, kb, km, kv = jax.random.split(key, 5)
    if k == 1:
        w = 0.2 * jax.random.normal(kw, (cin, cout), jnp.float32)
    else:
        w = 0.2 * jax.random.normal(kw, (k * k, cin, cout), jnp.float32)
    gamma = 1.0 + 0.1 * jax.random.normal(kg, (cout,), jnp.float32)
    beta = 0.1 * jax.random.normal(kb, (cout,), jnp.float32)
    mean = 0.1 * jax.random.normal(km, (cout,), jnp.float32)
    var = 1.0 + 0.1 * jax.random.uniform(kv, (cout,), jnp.float32)
    scale, bias = _fold_bn(gamma, beta, mean, var)
    return w, scale, bias


# --------------------------- pure-JAX reference -------------------------------

def _ref_pw(x, w, s, b):
    y = jnp.einsum("nhwc,cd->nhwd", x, w) * s + b
    return y * jax.nn.sigmoid(y)


def _ref_conv3(x, w9, s, b):
    cin, cout = w9.shape[1], w9.shape[2]
    w = w9.reshape(3, 3, cin, cout)
    y = lax.conv_general_dilated(x, w, (1, 1), "SAME",
                                 dimension_numbers=("NHWC", "HWIO", "NHWC"))
    y = y * s + b
    return y * jax.nn.sigmoid(y)


def _ref_attn(x, temperature):
    N, H, W, C = x.shape
    xf = x.reshape(N, H * W, C)
    g = jnp.einsum("npi,npj->nij", xf, xf) / temperature
    attn = jax.nn.softmax(g, axis=-1)
    out = jnp.einsum("nij,npj->npi", attn, xf)
    return out.reshape(N, H, W, C)


def c2f_tsa_reference(x_nchw, params, c, n):
    x = jnp.transpose(x_nchw, (0, 2, 3, 1))
    w1, s1, b1 = params["cv1"]
    y = _ref_pw(x, w1, s1, b1)
    ys = [y[..., :c], y[..., c:]]
    cur = ys[-1]
    for i in range(n):
        p = params["m"][i]
        h = _ref_conv3(cur, *p["cv1"])
        h = _ref_conv3(h, *p["cv2"])
        cur = _ref_attn(h, float(c) ** 0.5)
        ys.append(cur)
    ycat = jnp.concatenate(ys, axis=-1)
    w2, s2, b2 = params["cv2"]
    out = _ref_pw(ycat, w2, s2, b2)
    return jnp.transpose(out, (0, 3, 1, 2))


# ----------------------------------- main -------------------------------------

if __name__ == "__main__":
    key = jax.random.PRNGKey(0)
    N, C1, H, W = 2, 8, 16, 16          # input NCHW (matches PyTorch convention)
    c2 = 8
    n = 1
    e = 0.5
    c = int(c2 * e)                     # hidden width of the CSP split = 4

    k_x, k_p = jax.random.split(key)
    x = jax.random.normal(k_x, (N, C1, H, W), jnp.float32)

    keys = jax.random.split(k_p, 2 + 2 * n)
    params = {
        "cv1": make_conv_params(keys[0], C1, 2 * c, 1),
        "cv2": make_conv_params(keys[1], (2 + n) * c, c2, 1),
        "m": [],
    }
    for i in range(n):
        params["m"].append({
            "cv1": make_conv_params(keys[2 + 2 * i], c, c, 3),
            "cv2": make_conv_params(keys[3 + 2 * i], c, c, 3),
        })

    out = c2f_tsa_forward(x, params, c, n)
    out = jax.block_until_ready(out)
    assert out.shape == (N, c2, H, W), out.shape

    ref = jax.block_until_ready(c2f_tsa_reference(x, params, c, n))
    max_err = float(jnp.max(jnp.abs(out - ref)))
    assert jnp.allclose(out, ref, rtol=1e-3, atol=1e-3), f"max_err={max_err}"

    print("KERNEL_OK")
</pallas_src>

<mosaic_0001>
module attributes {stable_mosaic.version = 11 : i64} {
  func.func @_c2f_tsa_fused_kernel(%arg0: i32, %arg1: memref<1x8x256xf32, #tpu.memory_space<vmem>>, %arg2: memref<9x256xf32, #tpu.memory_space<vmem>>, %arg3: memref<8x8xf32, #tpu.memory_space<vmem>>, %arg4: memref<8x1xf32, #tpu.memory_space<vmem>>, %arg5: memref<8x1xf32, #tpu.memory_space<vmem>>, %arg6: memref<9x4x4xf32, #tpu.memory_space<vmem>>, %arg7: memref<4x1xf32, #tpu.memory_space<vmem>>, %arg8: memref<4x1xf32, #tpu.memory_space<vmem>>, %arg9: memref<9x4x4xf32, #tpu.memory_space<vmem>>, %arg10: memref<4x1xf32, #tpu.memory_space<vmem>>, %arg11: memref<4x1xf32, #tpu.memory_space<vmem>>, %arg12: memref<8x4xf32, #tpu.memory_space<vmem>>, %arg13: memref<8x4xf32, #tpu.memory_space<vmem>>, %arg14: memref<8x4xf32, #tpu.memory_space<vmem>>, %arg15: memref<8x1xf32, #tpu.memory_space<vmem>>, %arg16: memref<8x1xf32, #tpu.memory_space<vmem>>, %arg17: memref<1x8x256xf32, #tpu.memory_space<vmem>>) attributes {dimension_semantics = [#tpu.dimension_semantics<parallel>], iteration_bounds = array<i64: 2>, scalar_prefetch = 0 : i64, scratch_operands = 0 : i64, tpu.core_type = #tpu.core_type<tc>, window_params = [{transform_indices = @transform_0, window_bounds = array<i64: 1, 8, 256>}, {pipeline_mode = #tpu.pipeline_mode<synchronous>, transform_indices = @transform_1, window_bounds = array<i64: 9, 256>}, {pipeline_mode = #tpu.pipeline_mode<synchronous>, transform_indices = @transform_2, window_bounds = array<i64: 8, 8>}, {pipeline_mode = #tpu.pipeline_mode<synchronous>, transform_indices = @transform_3, window_bounds = array<i64: 8, 1>}, {pipeline_mode = #tpu.pipeline_mode<synchronous>, transform_indices = @transform_4, window_bounds = array<i64: 8, 1>}, {pipeline_mode = #tpu.pipeline_mode<synchronous>, transform_indices = @transform_5, window_bounds = array<i64: 9, 4, 4>}, {pipeline_mode = #tpu.pipeline_mode<synchronous>, transform_indices = @transform_6, window_bounds = array<i64: 4, 1>}, {pipeline_mode = #tpu.pipeline_mode<synchronous>, transform_indices = @transform_7, window_bounds = array<i64: 4, 1>}, {pipeline_mode = #tpu.pipeline_mode<synchronous>, transform_indices = @transform_8, window_bounds = array<i64: 9, 4, 4>}, {pipeline_mode = #tpu.pipeline_mode<synchronous>, transform_indices = @transform_9, window_bounds = array<i64: 4, 1>}, {pipeline_mode = #tpu.pipeline_mode<synchronous>, transform_indices = @transform_10, window_bounds = array<i64: 4, 1>}, {pipeline_mode = #tpu.pipeline_mode<synchronous>, transform_indices = @transform_11, window_bounds = array<i64: 8, 4>}, {pipeline_mode = #tpu.pipeline_mode<synchronous>, transform_indices = @transform_12, window_bounds = array<i64: 8, 4>}, {pipeline_mode = #tpu.pipeline_mode<synchronous>, transform_indices = @transform_13, window_bounds = array<i64: 8, 4>}, {pipeline_mode = #tpu.pipeline_mode<synchronous>, transform_indices = @transform_14, window_bounds = array<i64: 8, 1>}, {pipeline_mode = #tpu.pipeline_mode<synchronous>, transform_indices = @transform_15, window_bounds = array<i64: 8, 1>}, {transform_indices = @transform_16, window_bounds = array<i64: 1, 8, 256>}]} {
    %c0 = arith.constant 0 : index
    %c0_0 = arith.constant 0 : index
    %0 = vector.load %arg2[%c0, %c0_0] : memref<9x256xf32, #tpu.memory_space<vmem>>, vector<9x256xf32>
    %c0_1 = arith.constant 0 : index
    %c0_2 = arith.constant 0 : index
    %c0_3 = arith.constant 0 : index
    %1 = vector.load %arg1[%c0_1, %c0_2, %c0_3] : memref<1x8x256xf32, #tpu.memory_space<vmem>>, vector<1x8x256xf32>
    %2 = vector.shape_cast %1 : vector<1x8x256xf32> to vector<8x256xf32>
    %c0_4 = arith.constant 0 : index
    %c0_5 = arith.constant 0 : index
    %3 = vector.load %arg3[%c0_4, %c0_5] : memref<8x8xf32, #tpu.memory_space<vmem>>, vector<8x8xf32>
    %cst = arith.constant dense<0.000000e+00> : vector<8x256xf32>
    %4 = tpu.matmul %3, %2, %cst {dimension_numbers = #tpu.dot_dimension_numbers<[1], [0], [0], [1], [0, 0, 1, 1], [], []>} : vector<8x8xf32>, vector<8x256xf32>, vector<8x256xf32> -> vector<8x256xf32>
    %c0_6 = arith.constant 0 : index
    %c0_7 = arith.constant 0 : index
    %5 = vector.load %arg4[%c0_6, %c0_7] : memref<8x1xf32, #tpu.memory_space<vmem>>, vector<8x1xf32>
    %6 = vector.broadcast %5 : vector<8x1xf32> to vector<8x256xf32>
    %7 = arith.mulf %4, %6 : vector<8x256xf32>
    %c0_8 = arith.constant 0 : index
    %c0_9 = arith.constant 0 : index
    %8 = vector.load %arg5[%c0_8, %c0_9] : memref<8x1xf32, #tpu.memory_space<vmem>>, vector<8x1xf32>
    %9 = vector.broadcast %8 : vector<8x1xf32> to vector<8x256xf32>
    %10 = arith.addf %7, %9 : vector<8x256xf32>
    %11 = arith.negf %10 : vector<8x256xf32>
    %12 = math.exp %11 : vector<8x256xf32>
    %cst_10 = arith.constant 1.000000e+00 : f32
    %13 = vector.broadcast %cst_10 : f32 to vector<8x256xf32>
    %14 = arith.addf %13, %12 : vector<8x256xf32>
    %15 = arith.divf %13, %14 : vector<8x256xf32>
    %16 = arith.mulf %10, %15 : vector<8x256xf32>
    %17 = vector.extract_strided_slice %16 {offsets = [0, 0], sizes = [4, 256], strides = [1, 1]} : vector<8x256xf32> to vector<4x256xf32>
    %18 = vector.extract_strided_slice %16 {offsets = [4, 0], sizes = [4, 256], strides = [1, 1]} : vector<8x256xf32> to vector<4x256xf32>
    %c0_11 = arith.constant 0 : index
    %c0_12 = arith.constant 0 : index
    %c0_13 = arith.constant 0 : index
    %19 = vector.load %arg6[%c0_11, %c0_12, %c0_13] : memref<9x4x4xf32, #tpu.memory_space<vmem>>, vector<9x4x4xf32>
    %cst_14 = arith.constant 0.000000e+00 : f32
    %20 = vector.broadcast %cst_14 : f32 to vector<4x256xf32>
    %c17_i32 = arith.constant 17 : i32
    %21 = tpu.dynamic_rotate %18 by %c17_i32 dim 1 : vector<4x256xf32>, i32 -> vector<4x256xf32>
    %22 = vector.extract_strided_slice %0 {offsets = [0, 0], sizes = [1, 256], strides = [1, 1]} : vector<9x256xf32> to vector<1x256xf32>
    %23 = vector.broadcast %22 : vector<1x256xf32> to vector<4x256xf32>
    %24 = arith.mulf %21, %23 : vector<4x256xf32>
    %25 = vector.extract_strided_slice %19 {offsets = [0, 0, 0], sizes = [1, 4, 4], strides = [1, 1, 1]} : vector<9x4x4xf32> to vector<1x4x4xf32>
    %26 = vector.shape_cast %25 : vector<1x4x4xf32> to vector<4x4xf32>
    %cst_15 = arith.constant dense<0.000000e+00> : vector<4x256xf32>
    %27 = tpu.matmul %26, %24, %cst_15 {dimension_numbers = #tpu.dot_dimension_numbers<[1], [0], [0], [1], [0, 0, 1, 1], [], []>} : vector<4x4xf32>, vector<4x256xf32>, vector<4x256xf32> -> vector<4x256xf32>
    %28 = arith.addf %20, %27 : vector<4x256xf32>
    %c16_i32 = arith.constant 16 : i32
    %29 = tpu.dynamic_rotate %18 by %c16_i32 dim 1 : vector<4x256xf32>, i32 -> vector<4x256xf32>
    %30 = vector.extract_strided_slice %0 {offsets = [1, 0], sizes = [1, 256], strides = [1, 1]} : vector<9x256xf32> to vector<1x256xf32>
    %31 = vector.broadcast %30 : vector<1x256xf32> to vector<4x256xf32>
    %32 = arith.mulf %29, %31 : vector<4x256xf32>
    %33 = vector.extract_strided_slice %19 {offsets = [1, 0, 0], sizes = [1, 4, 4], strides = [1, 1, 1]} : vector<9x4x4xf32> to vector<1x4x4xf32>
    %34 = vector.shape_cast %33 : vector<1x4x4xf32> to vector<4x4xf32>
    %cst_16 = arith.constant dense<0.000000e+00> : vector<4x256xf32>
    %35 = tpu.matmul %34, %32, %cst_16 {dimension_numbers = #tpu.dot_dimension_numbers<[1], [0], [0], [1], [0, 0, 1, 1], [], []>} : vector<4x4xf32>, vector<4x256xf32>, vector<4x256xf32> -> vector<4x256xf32>
    %36 = arith.addf %28, %35 : vector<4x256xf32>
    %c15_i32 = arith.constant 15 : i32
    %37 = tpu.dynamic_rotate %18 by %c15_i32 dim 1 : vector<4x256xf32>, i32 -> vector<4x256xf32>
    %38 = vector.extract_strided_slice %0 {offsets = [2, 0], sizes = [1, 256], strides = [1, 1]} : vector<9x256xf32> to vector<1x256xf32>
    %39 = vector.broadcast %38 : vector<1x256xf32> to vector<4x256xf32>
    %40 = arith.mulf %37, %39 : vector<4x256xf32>
    %41 = vector.extract_strided_slice %19 {offsets = [2, 0, 0], sizes = [1, 4, 4], strides = [1, 1, 1]} : vector<9x4x4xf32> to vector<1x4x4xf32>
    %42 = vector.shape_cast %41 : vector<1x4x4xf32> to vector<4x4xf32>
    %cst_17 = arith.constant dense<0.000000e+00> : vector<4x256xf32>
    %43 = tpu.matmul %42, %40, %cst_17 {dimension_numbers = #tpu.dot_dimension_numbers<[1], [0], [0], [1], [0, 0, 1, 1], [], []>} : vector<4x4xf32>, vector<4x256xf32>, vector<4x256xf32> -> vector<4x256xf32>
    %44 = arith.addf %36, %43 : vector<4x256xf32>
    %c1_i32 = arith.constant 1 : i32
    %45 = tpu.dynamic_rotate %18 by %c1_i32 dim 1 : vector<4x256xf32>, i32 -> vector<4x256xf32>
    %46 = vector.extract_strided_slice %0 {offsets = [3, 0], sizes = [1, 256], strides = [1, 1]} : vector<9x256xf32> to vector<1x256xf32>
    %47 = vector.broadcast %46 : vector<1x256xf32> to vector<4x256xf32>
    %48 = arith.mulf %45, %47 : vector<4x256xf32>
    %49 = vector.extract_strided_slice %19 {offsets = [3, 0, 0], sizes = [1, 4, 4], strides = [1, 1, 1]} : vector<9x4x4xf32> to vector<1x4x4xf32>
    %50 = vector.shape_cast %49 : vector<1x4x4xf32> to vector<4x4xf32>
    %cst_18 = arith.constant dense<0.000000e+00> : vector<4x256xf32>
    %51 = tpu.matmul %50, %48, %cst_18 {dimension_numbers = #tpu.dot_dimension_numbers<[1], [0], [0], [1], [0, 0, 1, 1], [], []>} : vector<4x4xf32>, vector<4x256xf32>, vector<4x256xf32> -> vector<4x256xf32>
    %52 = arith.addf %44, %51 : vector<4x256xf32>
    %53 = vector.extract_strided_slice %19 {offsets = [4, 0, 0], sizes = [1, 4, 4], strides = [1, 1, 1]} : vector<9x4x4xf32> to vector<1x4x4xf32>
    %54 = vector.shape_cast %53 : vector<1x4x4xf32> to vector<4x4xf32>
    %cst_19 = arith.constant dense<0.000000e+00> : vector<4x256xf32>
    %55 = tpu.matmul %54, %18, %cst_19 {dimension_numbers = #tpu.dot_dimension_numbers<[1], [0], [0], [1], [0, 0, 1, 1], [], []>} : vector<4x4xf32>, vector<4x256xf32>, vector<4x256xf32> -> vector<4x256xf32>
    %56 = arith.addf %52, %55 : vector<4x256xf32>
    %c255_i32 = arith.constant 255 : i32
    %57 = tpu.dynamic_rotate %18 by %c255_i32 dim 1 : vector<4x256xf32>, i32 -> vector<4x256xf32>
    %58 = vector.extract_strided_slice %0 {offsets = [5, 0], sizes = [1, 256], strides = [1, 1]} : vector<9x256xf32> to vector<1x256xf32>
    %59 = vector.broadcast %58 : vector<1x256xf32> to vector<4x256xf32>
    %60 = arith.mulf %57, %59 : vector<4x256xf32>
    %61 = vector.extract_strided_slice %19 {offsets = [5, 0, 0], sizes = [1, 4, 4], strides = [1, 1, 1]} : vector<9x4x4xf32> to vector<1x4x4xf32>
    %62 = vector.shape_cast %61 : vector<1x4x4xf32> to vector<4x4xf32>
    %cst_20 = arith.constant dense<0.000000e+00> : vector<4x256xf32>
    %63 = tpu.matmul %62, %60, %cst_20 {dimension_numbers = #tpu.dot_dimension_numbers<[1], [0], [0], [1], [0, 0, 1, 1], [], []>} : vector<4x4xf32>, vector<4x256xf32>, vector<4x256xf32> -> vector<4x256xf32>
    %64 = arith.addf %56, %63 : vector<4x256xf32>
    %c241_i32 = arith.constant 241 : i32
    %65 = tpu.dynamic_rotate %18 by %c241_i32 dim 1 : vector<4x256xf32>, i32 -> vector<4x256xf32>
    %66 = vector.extract_strided_slice %0 {offsets = [6, 0], sizes = [1, 256], strides = [1, 1]} : vector<9x256xf32> to vector<1x256xf32>
    %67 = vector.broadcast %66 : vector<1x256xf32> to vector<4x256xf32>
    %68 = arith.mulf %65, %67 : vector<4x256xf32>
    %69 = vector.extract_strided_slice %19 {offsets = [6, 0, 0], sizes = [1, 4, 4], strides = [1, 1, 1]} : vector<9x4x4xf32> to vector<1x4x4xf32>
    %70 = vector.shape_cast %69 : vector<1x4x4xf32> to vector<4x4xf32>
    %cst_21 = arith.constant dense<0.000000e+00> : vector<4x256xf32>
    %71 = tpu.matmul %70, %68, %cst_21 {dimension_numbers = #tpu.dot_dimension_numbers<[1], [0], [0], [1], [0, 0, 1, 1], [], []>} : vector<4x4xf32>, vector<4x256xf32>, vector<4x256xf32> -> vector<4x256xf32>
    %72 = arith.addf %64, %71 : vector<4x256xf32>
    %c240_i32 = arith.constant 240 : i32
    %73 = tpu.dynamic_rotate %18 by %c240_i32 dim 1 : vector<4x256xf32>, i32 -> vector<4x256xf32>
    %74 = vector.extract_strided_slice %0 {offsets = [7, 0], sizes = [1, 256], strides = [1, 1]} : vector<9x256xf32> to vector<1x256xf32>
    %75 = vector.broadcast %74 : vector<1x256xf32> to vector<4x256xf32>
    %76 = arith.mulf %73, %75 : vector<4x256xf32>
    %77 = vector.extract_strided_slice %19 {offsets = [7, 0, 0], sizes = [1, 4, 4], strides = [1, 1, 1]} : vector<9x4x4xf32> to vector<1x4x4xf32>
    %78 = vector.shape_cast %77 : vector<1x4x4xf32> to vector<4x4xf32>
    %cst_22 = arith.constant dense<0.000000e+00> : vector<4x256xf32>
    %79 = tpu.matmul %78, %76, %cst_22 {dimension_numbers = #tpu.dot_dimension_numbers<[1], [0], [0], [1], [0, 0, 1, 1], [], []>} : vector<4x4xf32>, vector<4x256xf32>, vector<4x256xf32> -> vector<4x256xf32>
    %80 = arith.addf %72, %79 : vector<4x256xf32>
    %c239_i32 = arith.constant 239 : i32
    %81 = tpu.dynamic_rotate %18 by %c239_i32 dim 1 : vector<4x256xf32>, i32 -> vector<4x256xf32>
    %82 = vector.extract_strided_slice %0 {offsets = [8, 0], sizes = [1, 256], strides = [1, 1]} : vector<9x256xf32> to vector<1x256xf32>
    %83 = vector.broadcast %82 : vector<1x256xf32> to vector<4x256xf32>
    %84 = arith.mulf %81, %83 : vector<4x256xf32>
    %85 = vector.extract_strided_slice %19 {offsets = [8, 0, 0], sizes = [1, 4, 4], strides = [1, 1, 1]} : vector<9x4x4xf32> to vector<1x4x4xf32>
    %86 = vector.shape_cast %85 : vector<1x4x4xf32> to vector<4x4xf32>
    %cst_23 = arith.constant dense<0.000000e+00> : vector<4x256xf32>
    %87 = tpu.matmul %86, %84, %cst_23 {dimension_numbers = #tpu.dot_dimension_numbers<[1], [0], [0], [1], [0, 0, 1, 1], [], []>} : vector<4x4xf32>, vector<4x256xf32>, vector<4x256xf32> -> vector<4x256xf32>
    %88 = arith.addf %80, %87 : vector<4x256xf32>
    %c0_24 = arith.constant 0 : index
    %c0_25 = arith.constant 0 : index
    %89 = vector.load %arg7[%c0_24, %c0_25] : memref<4x1xf32, #tpu.memory_space<vmem>>, vector<4x1xf32>
    %90 = vector.broadcast %89 : vector<4x1xf32> to vector<4x256xf32>
    %91 = arith.mulf %88, %90 : vector<4x256xf32>
    %c0_26 = arith.constant 0 : index
    %c0_27 = arith.constant 0 : index
    %92 = vector.load %arg8[%c0_26, %c0_27] : memref<4x1xf32, #tpu.memory_space<vmem>>, vector<4x1xf32>
    %93 = vector.broadcast %92 : vector<4x1xf32> to vector<4x256xf32>
    %94 = arith.addf %91, %93 : vector<4x256xf32>
    %95 = arith.negf %94 : vector<4x256xf32>
    %96 = math.exp %95 : vector<4x256xf32>
    %cst_28 = arith.constant 1.000000e+00 : f32
    %97 = vector.broadcast %cst_28 : f32 to vector<4x256xf32>
    %98 = arith.addf %97, %96 : vector<4x256xf32>
    %99 = arith.divf %97, %98 : vector<4x256xf32>
    %100 = arith.mulf %94, %99 : vector<4x256xf32>
    %c0_29 = arith.constant 0 : index
    %c0_30 = arith.constant 0 : index
    %c0_31 = arith.constant 0 : index
    %101 = vector.load %arg9[%c0_29, %c0_30, %c0_31] : memref<9x4x4xf32, #tpu.memory_space<vmem>>, vector<9x4x4xf32>
    %cst_32 = arith.constant 0.000000e+00 : f32
    %102 = vector.broadcast %cst_32 : f32 to vector<4x256xf32>
    %c17_i32_33 = arith.constant 17 : i32
    %103 = tpu.dynamic_rotate %100 by %c17_i32_33 dim 1 : vector<4x256xf32>, i32 -> vector<4x256xf32>
    %104 = vector.extract_strided_slice %0 {offsets = [0, 0], sizes = [1, 256], strides = [1, 1]} : vector<9x256xf32> to vector<1x256xf32>
    %105 = vector.broadcast %104 : vector<1x256xf32> to vector<4x256xf32>
    %106 = arith.mulf %103, %105 : vector<4x256xf32>
    %107 = vector.extract_strided_slice %101 {offsets = [0, 0, 0], sizes = [1, 4, 4], strides = [1, 1, 1]} : vector<9x4x4xf32> to vector<1x4x4xf32>
    %108 = vector.shape_cast %107 : vector<1x4x4xf32> to vector<4x4xf32>
    %cst_34 = arith.constant dense<0.000000e+00> : vector<4x256xf32>
    %109 = tpu.matmul %108, %106, %cst_34 {dimension_numbers = #tpu.dot_dimension_numbers<[1], [0], [0], [1], [0, 0, 1, 1], [], []>} : vector<4x4xf32>, vector<4x256xf32>, vector<4x256xf32> -> vector<4x256xf32>
    %110 = arith.addf %102, %109 : vector<4x256xf32>
    %c16_i32_35 = arith.constant 16 : i32
    %111 = tpu.dynamic_rotate %100 by %c16_i32_35 dim 1 : vector<4x256xf32>, i32 -> vector<4x256xf32>
    %112 = vector.extract_strided_slice %0 {offsets = [1, 0], sizes = [1, 256], strides = [1, 1]} : vector<9x256xf32> to vector<1x256xf32>
    %113 = vector.broadcast %112 : vector<1x256xf32> to vector<4x256xf32>
    %114 = arith.mulf %111, %113 : vector<4x256xf32>
    %115 = vector.extract_strided_slice %101 {offsets = [1, 0, 0], sizes = [1, 4, 4], strides = [1, 1, 1]} : vector<9x4x4xf32> to vector<1x4x4xf32>
    %116 = vector.shape_cast %115 : vector<1x4x4xf32> to vector<4x4xf32>
    %cst_36 = arith.constant dense<0.000000e+00> : vector<4x256xf32>
    %117 = tpu.matmul %116, %114, %cst_36 {dimension_numbers = #tpu.dot_dimension_numbers<[1], [0], [0], [1], [0, 0, 1, 1], [], []>} : vector<4x4xf32>, vector<4x256xf32>, vector<4x256xf32> -> vector<4x256xf32>
    %118 = arith.addf %110, %117 : vector<4x256xf32>
    %c15_i32_37 = arith.constant 15 : i32
    %119 = tpu.dynamic_rotate %100 by %c15_i32_37 dim 1 : vector<4x256xf32>, i32 -> vector<4x256xf32>
    %120 = vector.extract_strided_slice %0 {offsets = [2, 0], sizes = [1, 256], strides = [1, 1]} : vector<9x256xf32> to vector<1x256xf32>
    %121 = vector.broadcast %120 : vector<1x256xf32> to vector<4x256xf32>
    %122 = arith.mulf %119, %121 : vector<4x256xf32>
    %123 = vector.extract_strided_slice %101 {offsets = [2, 0, 0], sizes = [1, 4, 4], strides = [1, 1, 1]} : vector<9x4x4xf32> to vector<1x4x4xf32>
    %124 = vector.shape_cast %123 : vector<1x4x4xf32> to vector<4x4xf32>
    %cst_38 = arith.constant dense<0.000000e+00> : vector<4x256xf32>
    %125 = tpu.matmul %124, %122, %cst_38 {dimension_numbers = #tpu.dot_dimension_numbers<[1], [0], [0], [1], [0, 0, 1, 1], [], []>} : vector<4x4xf32>, vector<4x256xf32>, vector<4x256xf32> -> vector<4x256xf32>
    %126 = arith.addf %118, %125 : vector<4x256xf32>
    %c1_i32_39 = arith.constant 1 : i32
    %127 = tpu.dynamic_rotate %100 by %c1_i32_39 dim 1 : vector<4x256xf32>, i32 -> vector<4x256xf32>
    %128 = vector.extract_strided_slice %0 {offsets = [3, 0], sizes = [1, 256], strides = [1, 1]} : vector<9x256xf32> to vector<1x256xf32>
    %129 = vector.broadcast %128 : vector<1x256xf32> to vector<4x256xf32>
    %130 = arith.mulf %127, %129 : vector<4x256xf32>
    %131 = vector.extract_strided_slice %101 {offsets = [3, 0, 0], sizes = [1, 4, 4], strides = [1, 1, 1]} : vector<9x4x4xf32> to vector<1x4x4xf32>
    %132 = vector.shape_cast %131 : vector<1x4x4xf32> to vector<4x4xf32>
    %cst_40 = arith.constant dense<0.000000e+00> : vector<4x256xf32>
    %133 = tpu.matmul %132, %130, %cst_40 {dimension_numbers = #tpu.dot_dimension_numbers<[1], [0], [0], [1], [0, 0, 1, 1], [], []>} : vector<4x4xf32>, vector<4x256xf32>, vector<4x256xf32> -> vector<4x256xf32>
    %134 = arith.addf %126, %133 : vector<4x256xf32>
    %135 = vector.extract_strided_slice %101 {offsets = [4, 0, 0], sizes = [1, 4, 4], strides = [1, 1, 1]} : vector<9x4x4xf32> to vector<1x4x4xf32>
    %136 = vector.shape_cast %135 : vector<1x4x4xf32> to vector<4x4xf32>
    %cst_41 = arith.constant dense<0.000000e+00> : vector<4x256xf32>
    %137 = tpu.matmul %136, %100, %cst_41 {dimension_numbers = #tpu.dot_dimension_numbers<[1], [0], [0], [1], [0, 0, 1, 1], [], []>} : vector<4x4xf32>, vector<4x256xf32>, vector<4x256xf32> -> vector<4x256xf32>
    %138 = arith.addf %134, %137 : vector<4x256xf32>
    %c255_i32_42 = arith.constant 255 : i32
    %139 = tpu.dynamic_rotate %100 by %c255_i32_42 dim 1 : vector<4x256xf32>, i32 -> vector<4x256xf32>
    %140 = vector.extract_strided_slice %0 {offsets = [5, 0], sizes = [1, 256], strides = [1, 1]} : vector<9x256xf32> to vector<1x256xf32>
    %141 = vector.broadcast %140 : vector<1x256xf32> to vector<4x256xf32>
    %142 = arith.mulf %139, %141 : vector<4x256xf32>
    %143 = vector.extract_strided_slice %101 {offsets = [5, 0, 0], sizes = [1, 4, 4], strides = [1, 1, 1]} : vector<9x4x4xf32> to vector<1x4x4xf32>
    %144 = vector.shape_cast %143 : vector<1x4x4xf32> to vector<4x4xf32>
    %cst_43 = arith.constant dense<0.000000e+00> : vector<4x256xf32>
    %145 = tpu.matmul %144, %142, %cst_43 {dimension_numbers = #tpu.dot_dimension_numbers<[1], [0], [0], [1], [0, 0, 1, 1], [], []>} : vector<4x4xf32>, vector<4x256xf32>, vector<4x256xf32> -> vector<4x256xf32>
    %146 = arith.addf %138, %145 : vector<4x256xf32>
    %c241_i32_44 = arith.constant 241 : i32
    %147 = tpu.dynamic_rotate %100 by %c241_i32_44 dim 1 : vector<4x256xf32>, i32 -> vector<4x256xf32>
    %148 = vector.extract_strided_slice %0 {offsets = [6, 0], sizes = [1, 256], strides = [1, 1]} : vector<9x256xf32> to vector<1x256xf32>
    %149 = vector.broadcast %148 : vector<1x256xf32> to vector<4x256xf32>
    %150 = arith.mulf %147, %149 : vector<4x256xf32>
    %151 = vector.extract_strided_slice %101 {offsets = [6, 0, 0], sizes = [1, 4, 4], strides = [1, 1, 1]} : vector<9x4x4xf32> to vector<1x4x4xf32>
    %152 = vector.shape_cast %151 : vector<1x4x4xf32> to vector<4x4xf32>
    %cst_45 = arith.constant dense<0.000000e+00> : vector<4x256xf32>
    %153 = tpu.matmul %152, %150, %cst_45 {dimension_numbers = #tpu.dot_dimension_numbers<[1], [0], [0], [1], [0, 0, 1, 1], [], []>} : vector<4x4xf32>, vector<4x256xf32>, vector<4x256xf32> -> vector<4x256xf32>
    %154 = arith.addf %146, %153 : vector<4x256xf32>
    %c240_i32_46 = arith.constant 240 : i32
    %155 = tpu.dynamic_rotate %100 by %c240_i32_46 dim 1 : vector<4x256xf32>, i32 -> vector<4x256xf32>
    %156 = vector.extract_strided_slice %0 {offsets = [7, 0], sizes = [1, 256], strides = [1, 1]} : vector<9x256xf32> to vector<1x256xf32>
    %157 = vector.broadcast %156 : vector<1x256xf32> to vector<4x256xf32>
    %158 = arith.mulf %155, %157 : vector<4x256xf32>
    %159 = vector.extract_strided_slice %101 {offsets = [7, 0, 0], sizes = [1, 4, 4], strides = [1, 1, 1]} : vector<9x4x4xf32> to vector<1x4x4xf32>
    %160 = vector.shape_cast %159 : vector<1x4x4xf32> to vector<4x4xf32>
    %cst_47 = arith.constant dense<0.000000e+00> : vector<4x256xf32>
    %161 = tpu.matmul %160, %158, %cst_47 {dimension_numbers = #tpu.dot_dimension_numbers<[1], [0], [0], [1], [0, 0, 1, 1], [], []>} : vector<4x4xf32>, vector<4x256xf32>, vector<4x256xf32> -> vector<4x256xf32>
    %162 = arith.addf %154, %161 : vector<4x256xf32>
    %c239_i32_48 = arith.constant 239 : i32
    %163 = tpu.dynamic_rotate %100 by %c239_i32_48 dim 1 : vector<4x256xf32>, i32 -> vector<4x256xf32>
    %164 = vector.extract_strided_slice %0 {offsets = [8, 0], sizes = [1, 256], strides = [1, 1]} : vector<9x256xf32> to vector<1x256xf32>
    %165 = vector.broadcast %164 : vector<1x256xf32> to vector<4x256xf32>
    %166 = arith.mulf %163, %165 : vector<4x256xf32>
    %167 = vector.extract_strided_slice %101 {offsets = [8, 0, 0], sizes = [1, 4, 4], strides = [1, 1, 1]} : vector<9x4x4xf32> to vector<1x4x4xf32>
    %168 = vector.shape_cast %167 : vector<1x4x4xf32> to vector<4x4xf32>
    %cst_49 = arith.constant dense<0.000000e+00> : vector<4x256xf32>
    %169 = tpu.matmul %168, %166, %cst_49 {dimension_numbers = #tpu.dot_dimension_numbers<[1], [0], [0], [1], [0, 0, 1, 1], [], []>} : vector<4x4xf32>, vector<4x256xf32>, vector<4x256xf32> -> vector<4x256xf32>
    %170 = arith.addf %162, %169 : vector<4x256xf32>
    %c0_50 = arith.constant 0 : index
    %c0_51 = arith.constant 0 : index
    %171 = vector.load %arg10[%c0_50, %c0_51] : memref<4x1xf32, #tpu.memory_space<vmem>>, vector<4x1xf32>
    %172 = vector.broadcast %171 : vector<4x1xf32> to vector<4x256xf32>
    %173 = arith.mulf %170, %172 : vector<4x256xf32>
    %c0_52 = arith.constant 0 : index
    %c0_53 = arith.constant 0 : index
    %174 = vector.load %arg11[%c0_52, %c0_53] : memref<4x1xf32, #tpu.memory_space<vmem>>, vector<4x1xf32>
    %175 = vector.broadcast %174 : vector<4x1xf32> to vector<4x256xf32>
    %176 = arith.addf %173, %175 : vector<4x256xf32>
    %177 = arith.negf %176 : vector<4x256xf32>
    %178 = math.exp %177 : vector<4x256xf32>
    %cst_54 = arith.constant 1.000000e+00 : f32
    %179 = vector.broadcast %cst_54 : f32 to vector<4x256xf32>
    %180 = arith.addf %179, %178 : vector<4x256xf32>
    %181 = arith.divf %179, %180 : vector<4x256xf32>
    %182 = arith.mulf %176, %181 : vector<4x256xf32>
    %cst_55 = arith.constant dense<0.000000e+00> : vector<4x4xf32>
    %183 = tpu.matmul %182, %182, %cst_55 {dimension_numbers = #tpu.dot_dimension_numbers<[1], [1], [0], [0], [0, 0, 1, 0], [], []>} : vector<4x256xf32>, vector<4x256xf32>, vector<4x4xf32> -> vector<4x4xf32>
    %cst_56 = arith.constant 5.000000e-01 : f32
    %184 = vector.broadcast %cst_56 : f32 to vector<4x4xf32>
    %185 = arith.mulf %183, %184 : vector<4x4xf32>
    %cst_57 = arith.constant dense<0xFF800000> : vector<4xf32>
    %186 = vector.multi_reduction <maximumf>, %185, %cst_57 [1] : vector<4x4xf32> to vector<4xf32>
    %187 = vector.shape_cast %186 : vector<4xf32> to vector<4x1xf32>
    %188 = vector.broadcast %187 : vector<4x1xf32> to vector<4x4xf32>
    %189 = arith.subf %185, %188 : vector<4x4xf32>
    %190 = math.exp %189 : vector<4x4xf32>
    %cst_58 = arith.constant dense<0.000000e+00> : vector<4xf32>
    %191 = vector.multi_reduction <add>, %190, %cst_58 [1] : vector<4x4xf32> to vector<4xf32>
    %192 = vector.shape_cast %191 : vector<4xf32> to vector<4x1xf32>
    %193 = vector.broadcast %192 : vector<4x1xf32> to vector<4x4xf32>
    %194 = arith.divf %190, %193 : vector<4x4xf32>
    %cst_59 = arith.constant dense<0.000000e+00> : vector<4x256xf32>
    %195 = tpu.matmul %194, %182, %cst_59 {dimension_numbers = #tpu.dot_dimension_numbers<[1], [0], [0], [1], [0, 0, 1, 1], [], []>} : vector<4x4xf32>, vector<4x256xf32>, vector<4x256xf32> -> vector<4x256xf32>
    %cst_60 = arith.constant 0.000000e+00 : f32
    %196 = vector.broadcast %cst_60 : f32 to vector<8x256xf32>
    %c0_61 = arith.constant 0 : index
    %c0_62 = arith.constant 0 : index
    %197 = vector.load %arg12[%c0_61, %c0_62] : memref<8x4xf32, #tpu.memory_space<vmem>>, vector<8x4xf32>
    %cst_63 = arith.constant dense<0.000000e+00> : vector<8x256xf32>
    %198 = tpu.matmul %197, %17, %cst_63 {dimension_numbers = #tpu.dot_dimension_numbers<[1], [0], [0], [1], [0, 0, 1, 1], [], []>} : vector<8x4xf32>, vector<4x256xf32>, vector<8x256xf32> -> vector<8x256xf32>
    %199 = arith.addf %196, %198 : vector<8x256xf32>
    %c0_64 = arith.constant 0 : index
    %c0_65 = arith.constant 0 : index
    %200 = vector.load %arg13[%c0_64, %c0_65] : memref<8x4xf32, #tpu.memory_space<vmem>>, vector<8x4xf32>
    %cst_66 = arith.constant dense<0.000000e+00> : vector<8x256xf32>
    %201 = tpu.matmul %200, %18, %cst_66 {dimension_numbers = #tpu.dot_dimension_numbers<[1], [0], [0], [1], [0, 0, 1, 1], [], []>} : vector<8x4xf32>, vector<4x256xf32>, vector<8x256xf32> -> vector<8x256xf32>
    %202 = arith.addf %199, %201 : vector<8x256xf32>
    %c0_67 = arith.constant 0 : index
    %c0_68 = arith.constant 0 : index
    %203 = vector.load %arg14[%c0_67, %c0_68] : memref<8x4xf32, #tpu.memory_space<vmem>>, vector<8x4xf32>
    %cst_69 = arith.constant dense<0.000000e+00> : vector<8x256xf32>
    %204 = tpu.matmul %203, %195, %cst_69 {dimension_numbers = #tpu.dot_dimension_numbers<[1], [0], [0], [1], [0, 0, 1, 1], [], []>} : vector<8x4xf32>, vector<4x256xf32>, vector<8x256xf32> -> vector<8x256xf32>
    %205 = arith.addf %202, %204 : vector<8x256xf32>
    %c0_70 = arith.constant 0 : index
    %c0_71 = arith.constant 0 : index
    %206 = vector.load %arg15[%c0_70, %c0_71] : memref<8x1xf32, #tpu.memory_space<vmem>>, vector<8x1xf32>
    %207 = vector.broadcast %206 : vector<8x1xf32> to vector<8x256xf32>
    %208 = arith.mulf %205, %207 : vector<8x256xf32>
    %c0_72 = arith.constant 0 : index
    %c0_73 = arith.constant 0 : index
    %209 = vector.load %arg16[%c0_72, %c0_73] : memref<8x1xf32, #tpu.memory_space<vmem>>, vector<8x1xf32>
    %210 = vector.broadcast %209 : vector<8x1xf32> to vector<8x256xf32>
    %211 = arith.addf %208, %210 : vector<8x256xf32>
    %212 = arith.negf %211 : vector<8x256xf32>
    %213 = math.exp %212 : vector<8x256xf32>
    %cst_74 = arith.constant 1.000000e+00 : f32
    %214 = vector.broadcast %cst_74 : f32 to vector<8x256xf32>
    %215 = arith.addf %214, %213 : vector<8x256xf32>
    %216 = arith.divf %214, %215 : vector<8x256xf32>
    %217 = arith.mulf %211, %216 : vector<8x256xf32>
    %c0_75 = arith.constant 0 : index
    %c0_76 = arith.constant 0 : index
    %c0_77 = arith.constant 0 : index
    %218 = vector.load %arg17[%c0_75, %c0_76, %c0_77] : memref<1x8x256xf32, #tpu.memory_space<vmem>>, vector<1x8x256xf32>
    %219 = vector.shape_cast %218 : vector<1x8x256xf32> to vector<8x256xf32>
    %220 = vector.shape_cast %217 : vector<8x256xf32> to vector<1x8x256xf32>
    tpu.vector_store %arg17[%c0_75, %c0_76, %c0_77], %220 {strides = array<i32>} : memref<1x8x256xf32, #tpu.memory_space<vmem>>, vector<1x8x256xf32>,
    return
  }
  func.func @transform_0(%arg0: i32) -> (i32, i32, i32) {
    %c0_i32 = arith.constant 0 : i32
    %c0_i32_0 = arith.constant 0 : i32
    %c0_i32_1 = arith.constant 0 : i32
    return %arg0, %c0_i32, %c0_i32_0 : i32, i32, i32
  }
  func.func @transform_1(%arg0: i32) -> (i32, i32) {
    %c0_i32 = arith.constant 0 : i32
    %c0_i32_0 = arith.constant 0 : i32
    %c0_i32_1 = arith.constant 0 : i32
    return %c0_i32, %c0_i32_0 : i32, i32
  }
  func.func @transform_2(%arg0: i32) -> (i32, i32) {
    %c0_i32 = arith.constant 0 : i32
    %c0_i32_0 = arith.constant 0 : i32
    %c0_i32_1 = arith.constant 0 : i32
    return %c0_i32, %c0_i32_0 : i32, i32
  }
  func.func @transform_3(%arg0: i32) -> (i32, i32) {
    %c0_i32 = arith.constant 0 : i32
    %c0_i32_0 = arith.constant 0 : i32
    %c0_i32_1 = arith.constant 0 : i32
    return %c0_i32, %c0_i32_0 : i32, i32
  }
  func.func @transform_4(%arg0: i32) -> (i32, i32) {
    %c0_i32 = arith.constant 0 : i32
    %c0_i32_0 = arith.constant 0 : i32
    %c0_i32_1 = arith.constant 0 : i32
    return %c0_i32, %c0_i32_0 : i32, i32
  }
  func.func @transform_5(%arg0: i32) -> (i32, i32, i32) {
    %c0_i32 = arith.constant 0 : i32
    %c0_i32_0 = arith.constant 0 : i32
    %c0_i32_1 = arith.constant 0 : i32
    %c0_i32_2 = arith.constant 0 : i32
    return %c0_i32, %c0_i32_0, %c0_i32_1 : i32, i32, i32
  }
  func.func @transform_6(%arg0: i32) -> (i32, i32) {
    %c0_i32 = arith.constant 0 : i32
    %c0_i32_0 = arith.constant 0 : i32
    %c0_i32_1 = arith.constant 0 : i32
    return %c0_i32, %c0_i32_0 : i32, i32
  }
  func.func @transform_7(%arg0: i32) -> (i32, i32) {
    %c0_i32 = arith.constant 0 : i32
    %c0_i32_0 = arith.constant 0 : i32
    %c0_i32_1 = arith.constant 0 : i32
    return %c0_i32, %c0_i32_0 : i32, i32
  }
  func.func @transform_8(%arg0: i32) -> (i32, i32, i32) {
    %c0_i32 = arith.constant 0 : i32
    %c0_i32_0 = arith.constant 0 : i32
    %c0_i32_1 = arith.constant 0 : i32
    %c0_i32_2 = arith.constant 0 : i32
    return %c0_i32, %c0_i32_0, %c0_i32_1 : i32, i32, i32
  }
  func.func @transform_9(%arg0: i32) -> (i32, i32) {
    %c0_i32 = arith.constant 0 : i32
    %c0_i32_0 = arith.constant 0 : i32
    %c0_i32_1 = arith.constant 0 : i32
    return %c0_i32, %c0_i32_0 : i32, i32
  }
  func.func @transform_10(%arg0: i32) -> (i32, i32) {
    %c0_i32 = arith.constant 0 : i32
    %c0_i32_0 = arith.constant 0 : i32
    %c0_i32_1 = arith.constant 0 : i32
    return %c0_i32, %c0_i32_0 : i32, i32
  }
  func.func @transform_11(%arg0: i32) -> (i32, i32) {
    %c0_i32 = arith.constant 0 : i32
    %c0_i32_0 = arith.constant 0 : i32
    %c0_i32_1 = arith.constant 0 : i32
    return %c0_i32, %c0_i32_0 : i32, i32
  }
  func.func @transform_12(%arg0: i32) -> (i32, i32) {
    %c0_i32 = arith.constant 0 : i32
    %c0_i32_0 = arith.constant 0 : i32
    %c0_i32_1 = arith.constant 0 : i32
    return %c0_i32, %c0_i32_0 : i32, i32
  }
  func.func @transform_13(%arg0: i32) -> (i32, i32) {
    %c0_i32 = arith.constant 0 : i32
    %c0_i32_0 = arith.constant 0 : i32
    %c0_i32_1 = arith.constant 0 : i32
    return %c0_i32, %c0_i32_0 : i32, i32
  }
  func.func @transform_14(%arg0: i32) -> (i32, i32) {
    %c0_i32 = arith.constant 0 : i32
    %c0_i32_0 = arith.constant 0 : i32
    %c0_i32_1 = arith.constant 0 : i32
    return %c0_i32, %c0_i32_0 : i32, i32
  }
  func.func @transform_15(%arg0: i32) -> (i32, i32) {
    %c0_i32 = arith.constant 0 : i32
    %c0_i32_0 = arith.constant 0 : i32
    %c0_i32_1 = arith.constant 0 : i32
    return %c0_i32, %c0_i32_0 : i32, i32
  }
  func.func @transform_16(%arg0: i32) -> (i32, i32, i32) {
    %c0_i32 = arith.constant 0 : i32
    %c0_i32_0 = arith.constant 0 : i32
    %c0_i32_1 = arith.constant 0 : i32
    return %arg0, %c0_i32, %c0_i32_0 : i32, i32, i32
  }
}

</mosaic_0001>

<llo_original>
// kernel: tpu_custom_call.1
$region0: #{tpu_custom_call.1}
  #allocation0 [shape = 'u32[]', space=smem, size = 0x4, offset = 0x4, fixed_abs, tag = 'smem constant byte address 0x4 - core index']
  #allocation1 [shape = 'u32[144,128]{1,0:T(1,128)}', space=vmem, size = 0x12000, scoped, tag = 'internal scratch']
  %s0 = inlined_call_operand.vmem [shape: f32[2,8,256], index: 0, kind: input, shape index: {}]
  %s1 = inlined_call_operand.vmem [shape: f32[9,256], index: 1, kind: input, shape index: {}]
  %s2 = inlined_call_operand.vmem [shape: f32[8,8], index: 2, kind: input, shape index: {}]
  %s3 = inlined_call_operand.vmem [shape: f32[8,1], index: 3, kind: input, shape index: {}]
  %s4 = inlined_call_operand.vmem [shape: f32[8,1], index: 4, kind: input, shape index: {}]
  %s5 = inlined_call_operand.vmem [shape: f32[9,4,4], index: 5, kind: input, shape index: {}]
  %s6 = inlined_call_operand.vmem [shape: f32[4,1], index: 6, kind: input, shape index: {}]
  %s7 = inlined_call_operand.vmem [shape: f32[4,1], index: 7, kind: input, shape index: {}]
  %s8 = inlined_call_operand.vmem [shape: f32[9,4,4], index: 8, kind: input, shape index: {}]
  %s9 = inlined_call_operand.vmem [shape: f32[4,1], index: 9, kind: input, shape index: {}]
  %s10 = inlined_call_operand.vmem [shape: f32[4,1], index: 10, kind: input, shape index: {}]
  %s11 = inlined_call_operand.vmem [shape: f32[8,4], index: 11, kind: input, shape index: {}]
  %s12 = inlined_call_operand.vmem [shape: f32[8,4], index: 12, kind: input, shape index: {}]
  %s13 = inlined_call_operand.vmem [shape: f32[8,4], index: 13, kind: input, shape index: {}]
  %s14 = inlined_call_operand.vmem [shape: f32[8,1], index: 14, kind: input, shape index: {}]
  %s15 = inlined_call_operand.vmem [shape: f32[8,1], index: 15, kind: input, shape index: {}]
  %s16 = inlined_call_operand.hbm [shape: f32[2,8,256], index: 16, kind: output, shape index: {}]
  %s17 = sld [smem:[#allocation0]]
  $region97: #{tpu_custom_call.1} parent=0
    _
  %s19 = ssub.s32 1, %s17
  %s20 = scalar_select 0, %s19, %s17
  $region1: #{tpu_custom_call.1} parent=0
    #allocation2 [shape = 'u8[16384]{0}', space=vmem, size = 0x4000, scoped, tag = 'output window, operand 0']
    #allocation3 [shape = 's32[2]{0}', space=sflag, size = 0x8, scoped, tag = 'scoped memory for tpu_custom_call.1']
    %21 = vsyncpa [#allocation3], 0
    %s22 = scalar_lea.sflag [#allocation3], 1
    %23 = vsyncpa %s22, 0
    loop: start=0, step=1, limit=4
    $region2: #{tpu_custom_call.1} parent=1 // loop_pre_header
      _
    $region3: #{tpu_custom_call.1} parent=1 // loop_header
      %s25 = sphi 0, %s29
      %p26 = scmp.ge.s32.totalorder %s25, 4
      %s35 = sphi 0, %s37
      %s38 = sphi 0, %s35
      %s39 = sphi 0, %s38
      %s55 = sphi 0, %s39
      %s59 = sphi 0, %s59
      %s61 = sphi 0, %s59
      %s62 = sphi 0, %s61
      %s76 = sphi 0, %s62
      %s80 = sphi 0, %s80
      %s82 = sphi 0, %s80
      %s83 = sphi 0, %s82
      %s97 = sphi 0, %s83
      %s101 = sphi 0, %s101
      %s103 = sphi 0, %s101
      %s104 = sphi 0, %s103
      %s118 = sphi 0, %s104
      %s122 = sphi 0, %s122
      %s124 = sphi 0, %s122
      %s125 = sphi 0, %s124
      %s139 = sphi 0, %s125
      %s143 = sphi 0, %s143
      %s145 = sphi 0, %s143
      %s146 = sphi 0, %s145
      %s160 = sphi 0, %s146
      %s164 = sphi 0, %s164
      %s166 = sphi 0, %s164
      %s167 = sphi 0, %s166
      %s181 = sphi 0, %s167
      %s185 = sphi 0, %s185
      %s187 = sphi 0, %s185
      %s188 = sphi 0, %s187
      %s202 = sphi 0, %s188
      %s206 = sphi 0, %s206
      %s208 = sphi 0, %s206
      %s209 = sphi 0, %s208
      %s223 = sphi 0, %s209
      %s227 = sphi 0, %s227
      %s229 = sphi 0, %s227
      %s230 = sphi 0, %s229
      %s244 = sphi 0, %s230
      %s248 = sphi 0, %s248
      %s250 = sphi 0, %s248
      %s251 = sphi 0, %s250
      %s265 = sphi 0, %s251
      %s269 = sphi 0, %s269
      %s271 = sphi 0, %s269
      %s272 = sphi 0, %s271
      %s286 = sphi 0, %s272
      %s290 = sphi 0, %s290
      %s292 = sphi 0, %s290
      %s293 = sphi 0, %s292
      %s307 = sphi 0, %s293
      %s311 = sphi 0, %s311
      %s313 = sphi 0, %s311
      %s314 = sphi 0, %s313
      %s328 = sphi 0, %s314
      %s332 = sphi 0, %s332
      %s334 = sphi 0, %s332
      %s335 = sphi 0, %s334
      %s349 = sphi 0, %s335
      %s353 = sphi 0, %s353
      %s355 = sphi 0, %s353
      %s356 = sphi 0, %s355
      %s370 = sphi 0, %s356
      %s376 = sphi 0, %s378
      %s379 = sphi 0, %s376
      %s380 = sphi 0, %s379
      %s396 = sphi 0, %s380
    $region4: #{tpu_custom_call.1} parent=1 // loop_header_branch
      %28 = sbr.rel (%p26) target = $region8
    $region5: #{tpu_custom_call.1} parent=1 // loop_body
      %s30 = ssub.s32 %s25, 1
      %s31 = ssub.s32 %s25, 2
      %s32 = sadd.s32 %s25, 1
      %s33 = ssub.s32 %s25, %s32
      %p34 = scmp.eq.s32.totalorder %s33, 0
      %s36 = sadd.s32 %s35, 1
      %s37 = scalar_select %p34, %s35, %s36
      %p40 = pneg %p34
      %p41 = scmp.eq.s32.totalorder %s25, 1
      %p42 = por %p40, %p41
      %p43 = scmp.ne.s32.totalorder %s35, %s38
      %p44 = scmp.eq.s32.totalorder %s25, 0
      %p45 = por %p43, %p44
      %p46 = scmp.ne.s32.totalorder %s35, %s38
      %p47 = scmp.eq.s32.totalorder %s30, 1
      %p48 = por %p46, %p47
      %p49 = scmp.ne.s32.totalorder %s38, %s39
      %p50 = scmp.eq.s32.totalorder %s30, 0
      %p51 = por %p49, %p50
      %p52 = scmp.ne.s32.totalorder %s38, %s39
      %p53 = scmp.eq.s32.totalorder %s31, 1
      %p54 = por %p52, %p53
      %p56 = scmp.ne.s32.totalorder %s39, %s55
      %p57 = scmp.eq.s32.totalorder %s31, 0
      %p58 = por %p56, %p57
      %s60 = sadd.s32 %s59, 1
      %p63 = scmp.eq.s32.totalorder %s25, 1
      %p64 = scmp.ne.s32.totalorder %s59, %s61
      %p65 = scmp.eq.s32.totalorder %s25, 0
      %p66 = por %p64, %p65
      %p67 = scmp.ne.s32.totalorder %s59, %s61
      %p68 = scmp.eq.s32.totalorder %s30, 1
      %p69 = por %p67, %p68
      %p70 = scmp.ne.s32.totalorder %s61, %s62
      %p71 = scmp.eq.s32.totalorder %s30, 0
      %p72 = por %p70, %p71
      %p73 = scmp.ne.s32.totalorder %s61, %s62
      %p74 = scmp.eq.s32.totalorder %s31, 1
      %p75 = por %p73, %p74
      %p77 = scmp.ne.s32.totalorder %s62, %s76
      %p78 = scmp.eq.s32.totalorder %s31, 0
      %p79 = por %p77, %p78
      %s81 = sadd.s32 %s80, 1
      %p84 = scmp.eq.s32.totalorder %s25, 1
      %p85 = scmp.ne.s32.totalorder %s80, %s82
      %p86 = scmp.eq.s32.totalorder %s25, 0
      %p87 = por %p85, %p86
      %p88 = scmp.ne.s32.totalorder %s80, %s82
      %p89 = scmp.eq.s32.totalorder %s30, 1
      %p90 = por %p88, %p89
      %p91 = scmp.ne.s32.totalorder %s82, %s83
      %p92 = scmp.eq.s32.totalorder %s30, 0
      %p93 = por %p91, %p92
      %p94 = scmp.ne.s32.totalorder %s82, %s83
      %p95 = scmp.eq.s32.totalorder %s31, 1
      %p96 = por %p94, %p95
      %p98 = scmp.ne.s32.totalorder %s83, %s97
      %p99 = scmp.eq.s32.totalorder %s31, 0
      %p100 = por %p98, %p99
      %s102 = sadd.s32 %s101, 1
      %p105 = scmp.eq.s32.totalorder %s25, 1
      %p106 = scmp.ne.s32.totalorder %s101, %s103
      %p107 = scmp.eq.s32.totalorder %s25, 0
      %p108 = por %p106, %p107
      %p109 = scmp.ne.s32.totalorder %s101, %s103
      %p110 = scmp.eq.s32.totalorder %s30, 1
      %p111 = por %p109, %p110
      %p112 = scmp.ne.s32.totalorder %s103, %s104
      %p113 = scmp.eq.s32.totalorder %s30, 0
      %p114 = por %p112, %p113
      %p115 = scmp.ne.s32.totalorder %s103, %s104
      %p116 = scmp.eq.s32.totalorder %s31, 1
      %p117 = por %p115, %p116
      %p119 = scmp.ne.s32.totalorder %s104, %s118
      %p120 = scmp.eq.s32.totalorder %s31, 0
      %p121 = por %p119, %p120
      %s123 = sadd.s32 %s122, 1
      %p126 = scmp.eq.s32.totalorder %s25, 1
      %p127 = scmp.ne.s32.totalorder %s122, %s124
      %p128 = scmp.eq.s32.totalorder %s25, 0
      %p129 = por %p127, %p128
      %p130 = scmp.ne.s32.totalorder %s122, %s124
      %p131 = scmp.eq.s32.totalorder %s30, 1
      %p132 = por %p130, %p131
      %p133 = scmp.ne.s32.totalorder %s124, %s125
      %p134 = scmp.eq.s32.totalorder %s30, 0
      %p135 = por %p133, %p134
      %p136 = scmp.ne.s32.totalorder %s124, %s125
      %p137 = scmp.eq.s32.totalorder %s31, 1
      %p138 = por %p136, %p137
      %p140 = scmp.ne.s32.totalorder %s125, %s139
      %p141 = scmp.eq.s32.totalorder %s31, 0
      %p142 = por %p140, %p141
      %s144 = sadd.s32 %s143, 1
      %p147 = scmp.eq.s32.totalorder %s25, 1
      %p148 = scmp.ne.s32.totalorder %s143, %s145
      %p149 = scmp.eq.s32.totalorder %s25, 0
      %p150 = por %p148, %p149
      %p151 = scmp.ne.s32.totalorder %s143, %s145
      %p152 = scmp.eq.s32.totalorder %s30, 1
      %p153 = por %p151, %p152
      %p154 = scmp.ne.s32.totalorder %s145, %s146
      %p155 = scmp.eq.s32.totalorder %s30, 0
      %p156 = por %p154, %p155
      %p157 = scmp.ne.s32.totalorder %s145, %s146
      %p158 = scmp.eq.s32.totalorder %s31, 1
      %p159 = por %p157, %p158
      %p161 = scmp.ne.s32.totalorder %s146, %s160
      %p162 = scmp.eq.s32.totalorder %s31, 0
      %p163 = por %p161, %p162
      %s165 = sadd.s32 %s164, 1
      %p168 = scmp.eq.s32.totalorder %s25, 1
      %p169 = scmp.ne.s32.totalorder %s164, %s166
      %p170 = scmp.eq.s32.totalorder %s25, 0
      %p171 = por %p169, %p170
      %p172 = scmp.ne.s32.totalorder %s164, %s166
      %p173 = scmp.eq.s32.totalorder %s30, 1
      %p174 = por %p172, %p173
      %p175 = scmp.ne.s32.totalorder %s166, %s167
      %p176 = scmp.eq.s32.totalorder %s30, 0
      %p177 = por %p175, %p176
      %p178 = scmp.ne.s32.totalorder %s166, %s167
      %p179 = scmp.eq.s32.totalorder %s31, 1
      %p180 = por %p178, %p179
      %p182 = scmp.ne.s32.totalorder %s167, %s181
      %p183 = scmp.eq.s32.totalorder %s31, 0
      %p184 = por %p182, %p183
      %s186 = sadd.s32 %s185, 1
      %p189 = scmp.eq.s32.totalorder %s25, 1
      %p190 = scmp.ne.s32.totalorder %s185, %s187
      %p191 = scmp.eq.s32.totalorder %s25, 0
      %p192 = por %p190, %p191
      %p193 = scmp.ne.s32.totalorder %s185, %s187
      %p194 = scmp.eq.s32.totalorder %s30, 1
      %p195 = por %p193, %p194
      %p196 = scmp.ne.s32.totalorder %s187, %s188
      %p197 = scmp.eq.s32.totalorder %s30, 0
      %p198 = por %p196, %p197
      %p199 = scmp.ne.s32.totalorder %s187, %s188
      %p200 = scmp.eq.s32.totalorder %s31, 1
      %p201 = por %p199, %p200
      %p203 = scmp.ne.s32.totalorder %s188, %s202
      %p204 = scmp.eq.s32.totalorder %s31, 0
      %p205 = por %p203, %p204
      %s207 = sadd.s32 %s206, 1
      %p210 = scmp.eq.s32.totalorder %s25, 1
      %p211 = scmp.ne.s32.totalorder %s206, %s208
      %p212 = scmp.eq.s32.totalorder %s25, 0
      %p213 = por %p211, %p212
      %p214 = scmp.ne.s32.totalorder %s206, %s208
      %p215 = scmp.eq.s32.totalorder %s30, 1
      %p216 = por %p214, %p215
      %p217 = scmp.ne.s32.totalorder %s208, %s209
      %p218 = scmp.eq.s32.totalorder %s30, 0
      %p219 = por %p217, %p218
      %p220 = scmp.ne.s32.totalorder %s208, %s209
      %p221 = scmp.eq.s32.totalorder %s31, 1
      %p222 = por %p220, %p221
      %p224 = scmp.ne.s32.totalorder %s209, %s223
      %p225 = scmp.eq.s32.totalorder %s31, 0
      %p226 = por %p224, %p225
      %s228 = sadd.s32 %s227, 1
      %p231 = scmp.eq.s32.totalorder %s25, 1
      %p232 = scmp.ne.s32.totalorder %s227, %s229
      %p233 = scmp.eq.s32.totalorder %s25, 0
      %p234 = por %p232, %p233
      %p235 = scmp.ne.s32.totalorder %s227, %s229
      %p236 = scmp.eq.s32.totalorder %s30, 1
      %p237 = por %p235, %p236
      %p238 = scmp.ne.s32.totalorder %s229, %s230
      %p239 = scmp.eq.s32.totalorder %s30, 0
      %p240 = por %p238, %p239
      %p241 = scmp.ne.s32.totalorder %s229, %s230
      %p242 = scmp.eq.s32.totalorder %s31, 1
      %p243 = por %p241, %p242
      %p245 = scmp.ne.s32.totalorder %s230, %s244
      %p246 = scmp.eq.s32.totalorder %s31, 0
      %p247 = por %p245, %p246
      %s249 = sadd.s32 %s248, 1
      %p252 = scmp.eq.s32.totalorder %s25, 1
      %p253 = scmp.ne.s32.totalorder %s248, %s250
      %p254 = scmp.eq.s32.totalorder %s25, 0
      %p255 = por %p253, %p254
      %p256 = scmp.ne.s32.totalorder %s248, %s250
      %p257 = scmp.eq.s32.totalorder %s30, 1
      %p258 = por %p256, %p257
      %p259 = scmp.ne.s32.totalorder %s250, %s251
      %p260 = scmp.eq.s32.totalorder %s30, 0
      %p261 = por %p259, %p260
      %p262 = scmp.ne.s32.totalorder %s250, %s251
      %p263 = scmp.eq.s32.totalorder %s31, 1
      %p264 = por %p262, %p263
      %p266 = scmp.ne.s32.totalorder %s251, %s265
      %p267 = scmp.eq.s32.totalorder %s31, 0
      %p268 = por %p266, %p267
      %s270 = sadd.s32 %s269, 1
      %p273 = scmp.eq.s32.totalorder %s25, 1
      %p274 = scmp.ne.s32.totalorder %s269, %s271
      %p275 = scmp.eq.s32.totalorder %s25, 0
      %p276 = por %p274, %p275
      %p277 = scmp.ne.s32.totalorder %s269, %s271
      %p278 = scmp.eq.s32.totalorder %s30, 1
      %p279 = por %p277, %p278
      %p280 = scmp.ne.s32.totalorder %s271, %s272
      %p281 = scmp.eq.s32.totalorder %s30, 0
      %p282 = por %p280, %p281
      %p283 = scmp.ne.s32.totalorder %s271, %s272
      %p284 = scmp.eq.s32.totalorder %s31, 1
      %p285 = por %p283, %p284
      %p287 = scmp.ne.s32.totalorder %s272, %s286
      %p288 = scmp.eq.s32.totalorder %s31, 0
      %p289 = por %p287, %p288
      %s291 = sadd.s32 %s290, 1
      %p294 = scmp.eq.s32.totalorder %s25, 1
      %p295 = scmp.ne.s32.totalorder %s290, %s292
      %p296 = scmp.eq.s32.totalorder %s25, 0
      %p297 = por %p295, %p296
      %p298 = scmp.ne.s32.totalorder %s290, %s292
      %p299 = scmp.eq.s32.totalorder %s30, 1
      %p300 = por %p298, %p299
      %p301 = scmp.ne.s32.totalorder %s292, %s293
      %p302 = scmp.eq.s32.totalorder %s30, 0
      %p303 = por %p301, %p302
      %p304 = scmp.ne.s32.totalorder %s292, %s293
      %p305 = scmp.eq.s32.totalorder %s31, 1
      %p306 = por %p304, %p305
      %p308 = scmp.ne.s32.totalorder %s293, %s307
      %p309 = scmp.eq.s32.totalorder %s31, 0
      %p310 = por %p308, %p309
      %s312 = sadd.s32 %s311, 1
      %p315 = scmp.eq.s32.totalorder %s25, 1
      %p316 = scmp.ne.s32.totalorder %s311, %s313
      %p317 = scmp.eq.s32.totalorder %s25, 0
      %p318 = por %p316, %p317
      %p319 = scmp.ne.s32.totalorder %s311, %s313
      %p320 = scmp.eq.s32.totalorder %s30, 1
      %p321 = por %p319, %p320
      %p322 = scmp.ne.s32.totalorder %s313, %s314
      %p323 = scmp.eq.s32.totalorder %s30, 0
      %p324 = por %p322, %p323
      %p325 = scmp.ne.s32.totalorder %s313, %s314
      %p326 = scmp.eq.s32.totalorder %s31, 1
      %p327 = por %p325, %p326
      %p329 = scmp.ne.s32.totalorder %s314, %s328
      %p330 = scmp.eq.s32.totalorder %s31, 0
      %p331 = por %p329, %p330
      %s333 = sadd.s32 %s332, 1
      %p336 = scmp.eq.s32.totalorder %s25, 1
      %p337 = scmp.ne.s32.totalorder %s332, %s334
      %p338 = scmp.eq.s32.totalorder %s25, 0
      %p339 = por %p337, %p338
      %p340 = scmp.ne.s32.totalorder %s332, %s334
      %p341 = scmp.eq.s32.totalorder %s30, 1
      %p342 = por %p340, %p341
      %p343 = scmp.ne.s32.totalorder %s334, %s335
      %p344 = scmp.eq.s32.totalorder %s30, 0
      %p345 = por %p343, %p344
      %p346 = scmp.ne.s32.totalorder %s334, %s335
      %p347 = scmp.eq.s32.totalorder %s31, 1
      %p348 = por %p346, %p347
      %p350 = scmp.ne.s32.totalorder %s335, %s349
      %p351 = scmp.eq.s32.totalorder %s31, 0
      %p352 = por %p350, %p351
      %s354 = sadd.s32 %s353, 1
      %p357 = scmp.eq.s32.totalorder %s25, 1
      %p358 = scmp.ne.s32.totalorder %s353, %s355
      %p359 = scmp.eq.s32.totalorder %s25, 0
      %p360 = por %p358, %p359
      %p361 = scmp.ne.s32.totalorder %s353, %s355
      %p362 = scmp.eq.s32.totalorder %s30, 1
      %p363 = por %p361, %p362
      %p364 = scmp.ne.s32.totalorder %s355, %s356
      %p365 = scmp.eq.s32.totalorder %s30, 0
      %p366 = por %p364, %p365
      %p367 = scmp.ne.s32.totalorder %s355, %s356
      %p368 = scmp.eq.s32.totalorder %s31, 1
      %p369 = por %p367, %p368
      %p371 = scmp.ne.s32.totalorder %s356, %s370
      %p372 = scmp.eq.s32.totalorder %s31, 0
      %p373 = por %p371, %p372
      %s374 = ssub.s32 %s25, %s32
      %p375 = scmp.eq.s32.totalorder %s374, 0
      %s377 = sadd.s32 %s376, 1
      %s378 = scalar_select %p375, %s376, %s377
      %p381 = pneg %p375
      %p382 = scmp.eq.s32.totalorder %s25, 1
      %p383 = por %p381, %p382
      %p384 = scmp.ne.s32.totalorder %s376, %s379
      %p385 = scmp.eq.s32.totalorder %s25, 0
      %p386 = por %p384, %p385
      %p387 = scmp.ne.s32.totalorder %s376, %s379
      %p388 = scmp.eq.s32.totalorder %s30, 1
      %p389 = por %p387, %p388
      %p390 = scmp.ne.s32.totalorder %s379, %s380
      %p391 = scmp.eq.s32.totalorder %s30, 0
      %p392 = por %p390, %p391
      %p393 = scmp.ne.s32.totalorder %s379, %s380
      %p394 = scmp.eq.s32.totalorder %s31, 1
      %p395 = por %p393, %p394
      %p397 = scmp.ne.s32.totalorder %s380, %s396
      %p398 = scmp.eq.s32.totalorder %s31, 0
      %p399 = por %p397, %p398
      %p400 = scmp.le.s32.totalorder 1, %s25
      %p401 = scmp.lt.s32.totalorder %s25, 3
      %p402 = pnand %p400, %p401
      %p403 = pneg %p402
      // Predicated region
      $region9: #{tpu_custom_call.1} parent=5 // pred_check
        _
      $region10: #{tpu_custom_call.1} parent=5 // pred_check_branch
        %405 = sbr.rel (%p402) target = $region12
      $region11: #{tpu_custom_call.1} parent=5 // pred_region
        %s406 = ssub.s32 %s25, 1
        // Predicated region
        $region13: #{tpu_custom_call.1} parent=11 // pred_check
          %p407 = pneg %p72
        $region14: #{tpu_custom_call.1} parent=11 // pred_check_branch
          %409 = sbr.rel (%p407) target = $region16
        $region15: #{tpu_custom_call.1} parent=11 // pred_region
          _
        $region16: #{tpu_custom_call.1} parent=11 // pred_fallthru
          _
        // Predicated region
        $region17: #{tpu_custom_call.1} parent=11 // pred_check
          %p410 = pneg %p93
        $region18: #{tpu_custom_call.1} parent=11 // pred_check_branch
          %412 = sbr.rel (%p410) target = $region20
        $region19: #{tpu_custom_call.1} parent=11 // pred_region
          _
        $region20: #{tpu_custom_call.1} parent=11 // pred_fallthru
          _
        // Predicated region
        $region21: #{tpu_custom_call.1} parent=11 // pred_check
          %p413 = pneg %p114
        $region22: #{tpu_custom_call.1} parent=11 // pred_check_branch
          %415 = sbr.rel (%p413) target = $region24
        $region23: #{tpu_custom_call.1} parent=11 // pred_region
          _
        $region24: #{tpu_custom_call.1} parent=11 // pred_fallthru
          _
        // Predicated region
        $region25: #{tpu_custom_call.1} parent=11 // pred_check
          %p416 = pneg %p135
        $region26: #{tpu_custom_call.1} parent=11 // pred_check_branch
          %418 = sbr.rel (%p416) target = $region28
        $region27: #{tpu_custom_call.1} parent=11 // pred_region
          _
        $region28: #{tpu_custom_call.1} parent=11 // pred_fallthru
          _
        // Predicated region
        $region29: #{tpu_custom_call.1} parent=11 // pred_check
          %p419 = pneg %p156
        $region30: #{tpu_custom_call.1} parent=11 // pred_check_branch
          %421 = sbr.rel (%p419) target = $region32
        $region31: #{tpu_custom_call.1} parent=11 // pred_region
          _
        $region32: #{tpu_custom_call.1} parent=11 // pred_fallthru
          _
        // Predicated region
        $region33: #{tpu_custom_call.1} parent=11 // pred_check
          %p422 = pneg %p177
        $region34: #{tpu_custom_call.1} parent=11 // pred_check_branch
          %424 = sbr.rel (%p422) target = $region36
        $region35: #{tpu_custom_call.1} parent=11 // pred_region
          _
        $region36: #{tpu_custom_call.1} parent=11 // pred_fallthru
          _
        // Predicated region
        $region37: #{tpu_custom_call.1} parent=11 // pred_check
          %p425 = pneg %p198
        $region38: #{tpu_custom_call.1} parent=11 // pred_check_branch
          %427 = sbr.rel (%p425) target = $region40
        $region39: #{tpu_custom_call.1} parent=11 // pred_region
          _
        $region40: #{tpu_custom_call.1} parent=11 // pred_fallthru
          _
        // Predicated region
        $region41: #{tpu_custom_call.1} parent=11 // pred_check
          %p428 = pneg %p219
        $region42: #{tpu_custom_call.1} parent=11 // pred_check_branch
          %430 = sbr.rel (%p428) target = $region44
        $region43: #{tpu_custom_call.1} parent=11 // pred_region
          _
        $region44: #{tpu_custom_call.1} parent=11 // pred_fallthru
          _
        // Predicated region
        $region45: #{tpu_custom_call.1} parent=11 // pred_check
          %p431 = pneg %p240
        $region46: #{tpu_custom_call.1} parent=11 // pred_check_branch
          %433 = sbr.rel (%p431) target = $region48
        $region47: #{tpu_custom_call.1} parent=11 // pred_region
          _
        $region48: #{tpu_custom_call.1} parent=11 // pred_fallthru
          _
        // Predicated region
        $region49: #{tpu_custom_call.1} parent=11 // pred_check
          %p434 = pneg %p261
        $region50: #{tpu_custom_call.1} parent=11 // pred_check_branch
          %436 = sbr.rel (%p434) target = $region52
        $region51: #{tpu_custom_call.1} parent=11 // pred_region
          _
        $region52: #{tpu_custom_call.1} parent=11 // pred_fallthru
          _
        // Predicated region
        $region53: #{tpu_custom_call.1} parent=11 // pred_check
          %p437 = pneg %p282
        $region54: #{tpu_custom_call.1} parent=11 // pred_check_branch
          %439 = sbr.rel (%p437) target = $region56
        $region55: #{tpu_custom_call.1} parent=11 // pred_region
          _
        $region56: #{tpu_custom_call.1} parent=11 // pred_fallthru
          _
        // Predicated region
        $region57: #{tpu_custom_call.1} parent=11 // pred_check
          %p440 = pneg %p303
        $region58: #{tpu_custom_call.1} parent=11 // pred_check_branch
          %442 = sbr.rel (%p440) target = $region60
        $region59: #{tpu_custom_call.1} parent=11 // pred_region
          _
        $region60: #{tpu_custom_call.1} parent=11 // pred_fallthru
          _
        // Predicated region
        $region61: #{tpu_custom_call.1} parent=11 // pred_check
          %p443 = pneg %p324
        $region62: #{tpu_custom_call.1} parent=11 // pred_check_branch
          %445 = sbr.rel (%p443) target = $region64
        $region63: #{tpu_custom_call.1} parent=11 // pred_region
          _
        $region64: #{tpu_custom_call.1} parent=11 // pred_fallthru
          _
        // Predicated region
        $region65: #{tpu_custom_call.1} parent=11 // pred_check
          %p446 = pneg %p345
        $region66: #{tpu_custom_call.1} parent=11 // pred_check_branch
          %448 = sbr.rel (%p446) target = $region68
        $region67: #{tpu_custom_call.1} parent=11 // pred_region
          _
        $region68: #{tpu_custom_call.1} parent=11 // pred_fallthru
          _
        // Predicated region
        $region69: #{tpu_custom_call.1} parent=11 // pred_check
          %p449 = pneg %p366
        $region70: #{tpu_custom_call.1} parent=11 // pred_check_branch
          %451 = sbr.rel (%p449) target = $region72
        $region71: #{tpu_custom_call.1} parent=11 // pred_region
          _
        $region72: #{tpu_custom_call.1} parent=11 // pred_fallthru
          _
      $region12: #{tpu_custom_call.1} parent=5 // pred_fallthru
        _
      %p452 = scmp.lt.s32.totalorder %s25, 2
      // Predicated region
      $region73: #{tpu_custom_call.1} parent=5 // pred_check
        %p453 = pneg %p452
      $region74: #{tpu_custom_call.1} parent=5 // pred_check_branch
        %455 = sbr.rel (%p453) target = $region76
      $region75: #{tpu_custom_call.1} parent=5 // pred_region
        // Predicated region
        $region77: #{tpu_custom_call.1} parent=75 // pred_check
          %p456 = pneg %p45
        $region78: #{tpu_custom_call.1} parent=75 // pred_check_branch
          %458 = sbr.rel (%p456) target = $region80
        $region79: #{tpu_custom_call.1} parent=75 // pred_region
          %p459 = scmp.lt.s32.totalorder %s25, 1
          %s460 = scalar_select %p459, %s25, 1
          %s461 = smul.addr %s460, 2
          %s462 = smul.addr %s461, 8
          %s463 = scalar_lea.vmem %s0, %s462
        $region80: #{tpu_custom_call.1} parent=75 // pred_fallthru
          _
      $region76: #{tpu_custom_call.1} parent=5 // pred_fallthru
        _
      %p464 = scmp.le.s32.totalorder 1, %s25
      %p465 = scmp.lt.s32.totalorder %s25, 3
      %p466 = pnand %p464, %p465
      %p467 = pneg %p466
      // Predicated region
      $region81: #{tpu_custom_call.1} parent=5 // pred_check
        _
      $region82: #{tpu_custom_call.1} parent=5 // pred_check_branch
        %469 = sbr.rel (%p466) target = $region84
      $region83: #{tpu_custom_call.1} parent=5 // pred_region
        %s470 = ssub.s32 %s25, 1
        %p471 = scmp.lt.s32.totalorder %s30, 1
        %s472 = scalar_select %p471, %s30, 1
        %s473 = smul.addr %s472, 2
        %s474 = smul.addr %s473, 8
        %s475 = scalar_lea.vmem %s0, %s474
        %p476 = pneg %p51
        %p477 = pneg %p48
        %p478 = pneg %p72
        %p479 = pneg %p69
        %p480 = pneg %p93
        %p481 = pneg %p90
        %p482 = pneg %p114
        %p483 = pneg %p111
        %p484 = pneg %p135
        %p485 = pneg %p132
        %p486 = pneg %p156
        %p487 = pneg %p153
        %p488 = pneg %p177
        %p489 = pneg %p174
        %p490 = pneg %p198
        %p491 = pneg %p195
        %p492 = pneg %p219
        %p493 = pneg %p216
        %p494 = pneg %p240
        %p495 = pneg %p237
        %p496 = pneg %p261
        %p497 = pneg %p258
        %p498 = pneg %p282
        %p499 = pneg %p279
        %p500 = pneg %p303
        %p501 = pneg %p300
        %p502 = pneg %p324
        %p503 = pneg %p321
        %p504 = pneg %p345
        %p505 = pneg %p342
        %p506 = pneg %p366
        %p507 = pneg %p363
        %p508 = pneg %p392
        %p509 = pneg %p389
        %s510 = sand.u32 %s379, 1
        %s511 = scalar_lea.sflag [#allocation3], %s510
        %s512 = sand.u32 %s379, 1
        %s513 = smul.addr %s512, 16
        %s514 = scalar_lea.vmem [#allocation2], %s513
        %p515 = scmp.lt.s32.totalorder %s30, 1
        %s516 = scalar_select %p515, %s30, 1
        %s517 = smul.addr %s516, 2
        %s518 = smul.addr %s517, 8
        %s519 = scalar_lea.vmem %s0, %s518
        %v520 = vld [vmem:[%s1] sm:$0xff]
        %v521 = vld [vmem:[%s1 + $0x8] sm:$0xff]
        %v522 = vld [vmem:[%s1 + $0x10] sm:$0x1]
        %v523 = vld [vmem:[%s1 + $0x18] sm:$0x1]
        %v524 = vld [vmem:[%s519] sm:$0xff]
        %v525 = vld [vmem:[%s519 + $0x8] sm:$0xff]
        %v526 = vld [vmem:[%s2] sm:$0xff]
        %vm527 = vcmask 64512
        %v529 = vsel %vm527, %v526, 0
        %531 = vmatprep.subr.mxu0 %v525
        %532 = vmatpush1.msra.mxu0 %v524
        %533 = vmatprep.subr.mxu0 0.0
        %534 = vmatpush1.msra.mxu0 0.0
        %535 = vmatprep.subr.mxu0 0.0
        %536 = vmatpush1.msra.mxu0 0.0
        %537 = vmatprep.subr.mxu0 0.0
        %538 = vmatpush1.msra.mxu0 0.0
        %539 = vmatprep.subr.mxu0 0.0
        %540 = vmatpush1.msra.mxu0 0.0
        %541 = vmatprep.subr.mxu0 0.0
        %542 = vmatpush1.msra.mxu0 0.0
        %543 = vmatprep.subr.mxu0 0.0
        %544 = vmatpush1.msra.mxu0 0.0
        %545 = vmatprep.subr.mxu0 0.0
        %546 = vmatpush1.msra.mxu0 0.0
        %547 = vmatprep.subr.mxu0 0.0
        %548 = vmatpush1.msra.mxu0 0.0
        %549 = vmatprep.subr.mxu0 0.0
        %550 = vmatpush1.msra.mxu0 0.0
        %551 = vmatprep.subr.mxu0 0.0
        %552 = vmatpush1.msra.mxu0 0.0
        %553 = vmatprep.subr.mxu0 0.0
        %554 = vmatpush1.msra.mxu0 0.0
        %555 = vmatprep.subr.mxu0 0.0
        %556 = vmatpush1.msra.mxu0 0.0
        %557 = vmatprep.subr.mxu0 0.0
        %558 = vmatpush1.msra.mxu0 0.0
        %559 = vmatprep.subr.mxu0 0.0
        %560 = vmatpush1.msra.mxu0 0.0
        %561 = vmatprep.subr.mxu0 0.0
        %562 = vmatpush1.msra.mxu0 0.0
        %563 = vmatprep.subr.mxu0 0.0
        %564 = vmatpush1.msra.mxu0 0.0
        %565 = vmatprep.subr.mxu0 0.0
        %566 = vmatpush1.msra.mxu0 0.0
        %567 = vmatprep.subr.mxu0 0.0
        %568 = vmatpush1.msra.mxu0 0.0
        %569 = vmatprep.subr.mxu0 0.0
        %570 = vmatpush1.msra.mxu0 0.0
        %571 = vmatprep.subr.mxu0 0.0
        %572 = vmatpush1.msra.mxu0 0.0
        %573 = vmatprep.subr.mxu0 0.0
        %574 = vmatpush1.msra.mxu0 0.0
        %575 = vmatprep.subr.mxu0 0.0
        %576 = vmatpush1.msra.mxu0 0.0
        %577 = vmatprep.subr.mxu0 0.0
        %578 = vmatpush1.msra.mxu0 0.0
        %579 = vmatprep.subr.mxu0 0.0
        %580 = vmatpush1.msra.mxu0 0.0
        %581 = vmatprep.subr.mxu0 0.0
        %582 = vmatpush1.msra.mxu0 0.0
        %583 = vmatprep.subr.mxu0 0.0
        %584 = vmatpush1.msra.mxu0 0.0
        %585 = vmatprep.subr.mxu0 0.0
        %586 = vmatpush1.msra.mxu0 0.0
        %587 = vmatprep.subr.mxu0 0.0
        %588 = vmatpush1.msra.mxu0 0.0
        %589 = vmatprep.subr.mxu0 0.0
        %590 = vmatpush1.msra.mxu0 0.0
        %591 = vmatprep.subr.mxu0 0.0
        %592 = vmatpush1.msra.mxu0 0.0
        %593 = vmatprep.subr.mxu0 0.0
        %594 = vmatpush1.msra.mxu0 0.0
        %595 = vmatprep.mubr.f32.mxu0 0.0
        %596 = vmatmul.mubr.f32.gmra.mrb[0].mxu0 %v529
        %v597 = vpop.f32.mrb[0].mxu0
        %v598 = vadd.f32 0.0, %v597
        %v599 = vpop.f32.mrb[0].mxu0
        %v600 = vadd.f32 0.0, %v599
        %601 = vdwg.mxu0
        %v602 = vld [vmem:[%s3] sm:$0xff]
        %604 = vset.pattern.permute.xlu0 0
        %605 = vperm.xlu0 %604, %v602
        %v606 = vpop.permute.xlu0 %605
        %v608 = vmul.f32 %v598, %v606
        %v609 = vmul.f32 %v600, %v606
        %v610 = vld [vmem:[%s4] sm:$0xff]
        %612 = vset.pattern.permute.xlu0 0
        %613 = vperm.xlu0 %612, %v610
        %v614 = vpop.permute.xlu0 %613
        %v616 = vadd.f32 %v608, %v614
        %v617 = vadd.f32 %v609, %v614
        %v618 = vxor.u32 %v616, 2147483648
        %v619 = vxor.u32 %v617, 2147483648
        %v620 = vmul.f32 %v618, 1.442695
        %v621 = vpow.pop %v620
        %v622 = vmul.f32 %v619, 1.442695
        %v623 = vpow.pop %v622
        %v624 = vadd.f32 %v621, 1.0
        %v625 = vadd.f32 %v623, 1.0
        %v626 = vrcp.pop %v624
        %v627 = vmul.f32 1.0, %v626
        %v628 = vrcp.pop %v625
        %v629 = vmul.f32 1.0, %v628
        %v630 = vmul.f32 %v616, %v627
        %v631 = vmul.f32 %v617, %v629
        %v632 = vld [vmem:[%s5] sm:$0xf]
        %v633 = vld [vmem:[%s5 + $0x4] sm:$0xf]
        %v634 = vld [vmem:[%s5 + $0x8] sm:$0xf]
        %v635 = vld [vmem:[%s5 + $0xc] sm:$0xf]
        %v636 = vld [vmem:[%s5 + $0x10] sm:$0xf]
        %v637 = vld [vmem:[%s5 + $0x14] sm:$0xf]
        %v638 = vld [vmem:[%s5 + $0x18] sm:$0xf]
        %v639 = vld [vmem:[%s5 + $0x1c] sm:$0xf]
        %v640 = vld [vmem:[%s5 + $0x20] sm:$0xf]
        %v643 = vrot.slane %v630, 4
        %v644 = vrot.slane %v631, 4
        %647 = vrot.lane.b32.xlu0 %v643, 17
        %v648 = vpop.permute.xlu0 %647
        %649 = vrot.lane.b32.xlu0 %v644, 17
        %v650 = vpop.permute.xlu0 %649
        %v651 = vlaneseq
        %v652 = vand.u32 %v651, 127
        %vm653 = vcmp.lt.s32.totalorder %v652, 17
        %v654 = vsel %vm653, %v648, %v650
        %v655 = vsel %vm653, %v650, %v648
        %v656 = vlaneseq
        %v657 = vshrl.u32 %v656, 7
        %v658 = vsub.s32 0, %v657
        %v659 = vrot.slane %v520, %v658
        %v660 = vlaneseq
        %v661 = vshrl.u32 %v660, 7
        %v662 = vsub.s32 0, %v661
        %v663 = vrot.slane %v521, %v662
        %v664 = vmul.f32 %v655, %v659
        %v665 = vmul.f32 %v654, %v663
        %666 = vrot.lane.b32.xlu0 %v643, 16
        %v667 = vpop.permute.xlu0 %666
        %668 = vrot.lane.b32.xlu0 %v644, 16
        %v669 = vpop.permute.xlu0 %668
        %vm670 = vcmp.lt.s32.totalorder %v652, 16
        %v671 = vsel %vm670, %v667, %v669
        %v672 = vsel %vm670, %v669, %v667
        %v673 = vlaneseq
        %v674 = vshrl.u32 %v673, 7
        %v675 = vsub.s32 1, %v674
        %v676 = vrot.slane %v520, %v675
        %v677 = vlaneseq
        %v678 = vshrl.u32 %v677, 7
        %v679 = vsub.s32 1, %v678
        %v680 = vrot.slane %v521, %v679
        %v681 = vmul.f32 %v672, %v676
        %v682 = vmul.f32 %v671, %v680
        %vm683 = vcmask 31744
        %v685 = vsel %vm683, %v633, 0
        %vm687 = vcmask 1043456
        %v689 = vsel %vm687, %v681, 0
        %v692 = vsel %vm687, %v682, 0
        %694 = vmatprep.subr.mxu0 %v692
        %695 = vmatpush1.msra.mxu0 %v689
        %696 = vmatprep.subr.mxu0 0.0
        %697 = vmatpush1.msra.mxu0 0.0
        %698 = vmatprep.subr.mxu0 0.0
        %699 = vmatpush1.msra.mxu0 0.0
        %700 = vmatprep.subr.mxu0 0.0
        %701 = vmatpush1.msra.mxu0 0.0
        %702 = vmatprep.subr.mxu0 0.0
        %703 = vmatpush1.msra.mxu0 0.0
        %704 = vmatprep.subr.mxu0 0.0
        %705 = vmatpush1.msra.mxu0 0.0
        %706 = vmatprep.subr.mxu0 0.0
        %707 = vmatpush1.msra.mxu0 0.0
        %708 = vmatprep.subr.mxu0 0.0
        %709 = vmatpush1.msra.mxu0 0.0
        %710 = vmatprep.subr.mxu0 0.0
        %711 = vmatpush1.msra.mxu0 0.0
        %712 = vmatprep.subr.mxu0 0.0
        %713 = vmatpush1.msra.mxu0 0.0
        %714 = vmatprep.subr.mxu0 0.0
        %715 = vmatpush1.msra.mxu0 0.0
        %716 = vmatprep.subr.mxu0 0.0
        %717 = vmatpush1.msra.mxu0 0.0
        %718 = vmatprep.subr.mxu0 0.0
        %719 = vmatpush1.msra.mxu0 0.0
        %720 = vmatprep.subr.mxu0 0.0
        %721 = vmatpush1.msra.mxu0 0.0
        %722 = vmatprep.subr.mxu0 0.0
        %723 = vmatpush1.msra.mxu0 0.0
        %724 = vmatprep.subr.mxu0 0.0
        %725 = vmatpush1.msra.mxu0 0.0
        %726 = vmatprep.subr.mxu0 0.0
        %727 = vmatpush1.msra.mxu0 0.0
        %728 = vmatprep.subr.mxu0 0.0
        %729 = vmatpush1.msra.mxu0 0.0
        %730 = vmatprep.subr.mxu0 0.0
        %731 = vmatpush1.msra.mxu0 0.0
        %732 = vmatprep.subr.mxu0 0.0
        %733 = vmatpush1.msra.mxu0 0.0
        %734 = vmatprep.subr.mxu0 0.0
        %735 = vmatpush1.msra.mxu0 0.0
        %736 = vmatprep.subr.mxu0 0.0
        %737 = vmatpush1.msra.mxu0 0.0
        %738 = vmatprep.subr.mxu0 0.0
        %739 = vmatpush1.msra.mxu0 0.0
        %740 = vmatprep.subr.mxu0 0.0
        %741 = vmatpush1.msra.mxu0 0.0
        %742 = vmatprep.subr.mxu0 0.0
        %743 = vmatpush1.msra.mxu0 0.0
        %744 = vmatprep.subr.mxu0 0.0
        %745 = vmatpush1.msra.mxu0 0.0
        %746 = vmatprep.subr.mxu0 0.0
        %747 = vmatpush1.msra.mxu0 0.0
        %748 = vmatprep.subr.mxu0 0.0
        %749 = vmatpush1.msra.mxu0 0.0
        %750 = vmatprep.subr.mxu0 0.0
        %751 = vmatpush1.msra.mxu0 0.0
        %752 = vmatprep.subr.mxu0 0.0
        %753 = vmatpush1.msra.mxu0 0.0
        %754 = vmatprep.subr.mxu0 0.0
        %755 = vmatpush1.msra.mxu0 0.0
        %756 = vmatprep.subr.mxu0 0.0
        %757 = vmatpush1.msra.mxu0 0.0
        %758 = vmatprep.mubr.f32.mxu0 0.0
        %759 = vmatmul.mubr.f32.gmra.mrb[0].mxu0 %v685
        %v760 = vpop.f32.mrb[0].mxu0
        %v761 = vadd.f32 0.0, %v760
        %v762 = vpop.f32.mrb[0].mxu0
        %v763 = vadd.f32 0.0, %v762
        %764 = vdwg.mxu0
        %v766 = vsel %vm683, %v632, 0
        %v769 = vsel %vm687, %v664, 0
        %v772 = vsel %vm687, %v665, 0
        %774 = vmatprep.subr.mxu0 %v772
        %775 = vmatpush1.msra.mxu0 %v769
        %776 = vmatprep.subr.mxu0 0.0
        %777 = vmatpush1.msra.mxu0 0.0
        %778 = vmatprep.subr.mxu0 0.0
        %779 = vmatpush1.msra.mxu0 0.0
        %780 = vmatprep.subr.mxu0 0.0
        %781 = vmatpush1.msra.mxu0 0.0
        %782 = vmatprep.subr.mxu0 0.0
        %783 = vmatpush1.msra.mxu0 0.0
        %784 = vmatprep.subr.mxu0 0.0
        %785 = vmatpush1.msra.mxu0 0.0
        %786 = vmatprep.subr.mxu0 0.0
        %787 = vmatpush1.msra.mxu0 0.0
        %788 = vmatprep.subr.mxu0 0.0
        %789 = vmatpush1.msra.mxu0 0.0
        %790 = vmatprep.subr.mxu0 0.0
        %791 = vmatpush1.msra.mxu0 0.0
        %792 = vmatprep.subr.mxu0 0.0
        %793 = vmatpush1.msra.mxu0 0.0
        %794 = vmatprep.subr.mxu0 0.0
        %795 = vmatpush1.msra.mxu0 0.0
        %796 = vmatprep.subr.mxu0 0.0
        %797 = vmatpush1.msra.mxu0 0.0
        %798 = vmatprep.subr.mxu0 0.0
        %799 = vmatpush1.msra.mxu0 0.0
        %800 = vmatprep.subr.mxu0 0.0
        %801 = vmatpush1.msra.mxu0 0.0
        %802 = vmatprep.subr.mxu0 0.0
        %803 = vmatpush1.msra.mxu0 0.0
        %804 = vmatprep.subr.mxu0 0.0
        %805 = vmatpush1.msra.mxu0 0.0
        %806 = vmatprep.subr.mxu0 0.0
        %807 = vmatpush1.msra.mxu0 0.0
        %808 = vmatprep.subr.mxu0 0.0
        %809 = vmatpush1.msra.mxu0 0.0
        %810 = vmatprep.subr.mxu0 0.0
        %811 = vmatpush1.msra.mxu0 0.0
        %812 = vmatprep.subr.mxu0 0.0
        %813 = vmatpush1.msra.mxu0 0.0
        %814 = vmatprep.subr.mxu0 0.0
        %815 = vmatpush1.msra.mxu0 0.0
        %816 = vmatprep.subr.mxu0 0.0
        %817 = vmatpush1.msra.mxu0 0.0
        %818 = vmatprep.subr.mxu0 0.0
        %819 = vmatpush1.msra.mxu0 0.0
        %820 = vmatprep.subr.mxu0 0.0
        %821 = vmatpush1.msra.mxu0 0.0
        %822 = vmatprep.subr.mxu0 0.0
        %823 = vmatpush1.msra.mxu0 0.0
        %824 = vmatprep.subr.mxu0 0.0
        %825 = vmatpush1.msra.mxu0 0.0
        %826 = vmatprep.subr.mxu0 0.0
        %827 = vmatpush1.msra.mxu0 0.0
        %828 = vmatprep.subr.mxu0 0.0
        %829 = vmatpush1.msra.mxu0 0.0
        %830 = vmatprep.subr.mxu0 0.0
        %831 = vmatpush1.msra.mxu0 0.0
        %832 = vmatprep.subr.mxu0 0.0
        %833 = vmatpush1.msra.mxu0 0.0
        %834 = vmatprep.subr.mxu0 0.0
        %835 = vmatpush1.msra.mxu0 0.0
        %836 = vmatprep.subr.mxu0 0.0
        %837 = vmatpush1.msra.mxu0 0.0
        %838 = vmatprep.mubr.f32.mxu0 0.0
        %839 = vmatmul.mubr.f32.gmra.mrb[0].mxu0 %v766
        %v840 = vpop.f32.mrb[0].mxu0
        %v841 = vadd.f32 %v761, %v840
        %v842 = vpop.f32.mrb[0].mxu0
        %v843 = vadd.f32 %v763, %v842
        %844 = vdwg.mxu0
        %845 = vrot.lane.b32.xlu0 %v643, 15
        %v846 = vpop.permute.xlu0 %845
        %847 = vrot.lane.b32.xlu0 %v644, 15
        %v848 = vpop.permute.xlu0 %847
        %vm849 = vcmp.lt.s32.totalorder %v652, 15
        %v850 = vsel %vm849, %v846, %v848
        %v851 = vsel %vm849, %v848, %v846
        %v852 = vlaneseq
        %v853 = vshrl.u32 %v852, 7
        %v854 = vsub.s32 2, %v853
        %v855 = vrot.slane %v520, %v854
        %v856 = vlaneseq
        %v857 = vshrl.u32 %v856, 7
        %v858 = vsub.s32 2, %v857
        %v859 = vrot.slane %v521, %v858
        %v860 = vmul.f32 %v851, %v855
        %v861 = vmul.f32 %v850, %v859
        %v863 = vsel %vm683, %v634, 0
        %v866 = vsel %vm687, %v860, 0
        %v869 = vsel %vm687, %v861, 0
        %871 = vmatprep.subr.mxu0 %v869
        %872 = vmatpush1.msra.mxu0 %v866
        %873 = vmatprep.subr.mxu0 0.0
        %874 = vmatpush1.msra.mxu0 0.0
        %875 = vmatprep.subr.mxu0 0.0
        %876 = vmatpush1.msra.mxu0 0.0
        %877 = vmatprep.subr.mxu0 0.0
        %878 = vmatpush1.msra.mxu0 0.0
        %879 = vmatprep.subr.mxu0 0.0
        %880 = vmatpush1.msra.mxu0 0.0
        %881 = vmatprep.subr.mxu0 0.0
        %882 = vmatpush1.msra.mxu0 0.0
        %883 = vmatprep.subr.mxu0 0.0
        %884 = vmatpush1.msra.mxu0 0.0
        %885 = vmatprep.subr.mxu0 0.0
        %886 = vmatpush1.msra.mxu0 0.0
        %887 = vmatprep.subr.mxu0 0.0
        %888 = vmatpush1.msra.mxu0 0.0
        %889 = vmatprep.subr.mxu0 0.0
        %890 = vmatpush1.msra.mxu0 0.0
        %891 = vmatprep.subr.mxu0 0.0
        %892 = vmatpush1.msra.mxu0 0.0
        %893 = vmatprep.subr.mxu0 0.0
        %894 = vmatpush1.msra.mxu0 0.0
        %895 = vmatprep.subr.mxu0 0.0
        %896 = vmatpush1.msra.mxu0 0.0
        %897 = vmatprep.subr.mxu0 0.0
        %898 = vmatpush1.msra.mxu0 0.0
        %899 = vmatprep.subr.mxu0 0.0
        %900 = vmatpush1.msra.mxu0 0.0
        %901 = vmatprep.subr.mxu0 0.0
        %902 = vmatpush1.msra.mxu0 0.0
        %903 = vmatprep.subr.mxu0 0.0
        %904 = vmatpush1.msra.mxu0 0.0
        %905 = vmatprep.subr.mxu0 0.0
        %906 = vmatpush1.msra.mxu0 0.0
        %907 = vmatprep.subr.mxu0 0.0
        %908 = vmatpush1.msra.mxu0 0.0
        %909 = vmatprep.subr.mxu0 0.0
        %910 = vmatpush1.msra.mxu0 0.0
        %911 = vmatprep.subr.mxu0 0.0
        %912 = vmatpush1.msra.mxu0 0.0
        %913 = vmatprep.subr.mxu0 0.0
        %914 = vmatpush1.msra.mxu0 0.0
        %915 = vmatprep.subr.mxu0 0.0
        %916 = vmatpush1.msra.mxu0 0.0
        %917 = vmatprep.subr.mxu0 0.0
        %918 = vmatpush1.msra.mxu0 0.0
        %919 = vmatprep.subr.mxu0 0.0
        %920 = vmatpush1.msra.mxu0 0.0
        %921 = vmatprep.subr.mxu0 0.0
        %922 = vmatpush1.msra.mxu0 0.0
        %923 = vmatprep.subr.mxu0 0.0
        %924 = vmatpush1.msra.mxu0 0.0
        %925 = vmatprep.subr.mxu0 0.0
        %926 = vmatpush1.msra.mxu0 0.0
        %927 = vmatprep.subr.mxu0 0.0
        %928 = vmatpush1.msra.mxu0 0.0
        %929 = vmatprep.subr.mxu0 0.0
        %930 = vmatpush1.msra.mxu0 0.0
        %931 = vmatprep.subr.mxu0 0.0
        %932 = vmatpush1.msra.mxu0 0.0
        %933 = vmatprep.subr.mxu0 0.0
        %934 = vmatpush1.msra.mxu0 0.0
        %935 = vmatprep.mubr.f32.mxu0 0.0
        %936 = vmatmul.mubr.f32.gmra.mrb[0].mxu0 %v863
        %v937 = vpop.f32.mrb[0].mxu0
        %v938 = vadd.f32 0.0, %v937
        %v939 = vpop.f32.mrb[0].mxu0
        %v940 = vadd.f32 0.0, %v939
        %941 = vdwg.mxu0
        %v942 = vadd.f32 %v841, %v938
        %v943 = vadd.f32 %v843, %v940
        %944 = vrot.lane.b32.xlu0 %v643, 1
        %v945 = vpop.permute.xlu0 %944
        %946 = vrot.lane.b32.xlu0 %v644, 1
        %v947 = vpop.permute.xlu0 %946
        %vm948 = vcmp.lt.s32.totalorder %v652, 1
        %v949 = vsel %vm948, %v945, %v947
        %v950 = vsel %vm948, %v947, %v945
        %v951 = vlaneseq
        %v952 = vshrl.u32 %v951, 7
        %v953 = vsub.s32 3, %v952
        %v954 = vrot.slane %v520, %v953
        %v955 = vlaneseq
        %v956 = vshrl.u32 %v955, 7
        %v957 = vsub.s32 3, %v956
        %v958 = vrot.slane %v521, %v957
        %v959 = vmul.f32 %v950, %v954
        %v960 = vmul.f32 %v949, %v958
        %v962 = vsel %vm683, %v635, 0
        %v965 = vsel %vm687, %v959, 0
        %v968 = vsel %vm687, %v960, 0
        %970 = vmatprep.subr.mxu0 %v968
        %971 = vmatpush1.msra.mxu0 %v965
        %972 = vmatprep.subr.mxu0 0.0
        %973 = vmatpush1.msra.mxu0 0.0
        %974 = vmatprep.subr.mxu0 0.0
        %975 = vmatpush1.msra.mxu0 0.0
        %976 = vmatprep.subr.mxu0 0.0
        %977 = vmatpush1.msra.mxu0 0.0
        %978 = vmatprep.subr.mxu0 0.0
        %979 = vmatpush1.msra.mxu0 0.0
        %980 = vmatprep.subr.mxu0 0.0
        %981 = vmatpush1.msra.mxu0 0.0
        %982 = vmatprep.subr.mxu0 0.0
        %983 = vmatpush1.msra.mxu0 0.0
        %984 = vmatprep.subr.mxu0 0.0
        %985 = vmatpush1.msra.mxu0 0.0
        %986 = vmatprep.subr.mxu0 0.0
        %987 = vmatpush1.msra.mxu0 0.0
        %988 = vmatprep.subr.mxu0 0.0
        %989 = vmatpush1.msra.mxu0 0.0
        %990 = vmatprep.subr.mxu0 0.0
        %991 = vmatpush1.msra.mxu0 0.0
        %992 = vmatprep.subr.mxu0 0.0
        %993 = vmatpush1.msra.mxu0 0.0
        %994 = vmatprep.subr.mxu0 0.0
        %995 = vmatpush1.msra.mxu0 0.0
        %996 = vmatprep.subr.mxu0 0.0
        %997 = vmatpush1.msra.mxu0 0.0
        %998 = vmatprep.subr.mxu0 0.0
        %999 = vmatpush1.msra.mxu0 0.0
        %1000 = vmatprep.subr.mxu0 0.0
        %1001 = vmatpush1.msra.mxu0 0.0
        %1002 = vmatprep.subr.mxu0 0.0
        %1003 = vmatpush1.msra.mxu0 0.0
        %1004 = vmatprep.subr.mxu0 0.0
        %1005 = vmatpush1.msra.mxu0 0.0
        %1006 = vmatprep.subr.mxu0 0.0
        %1007 = vmatpush1.msra.mxu0 0.0
        %1008 = vmatprep.subr.mxu0 0.0
        %1009 = vmatpush1.msra.mxu0 0.0
        %1010 = vmatprep.subr.mxu0 0.0
        %1011 = vmatpush1.msra.mxu0 0.0
        %1012 = vmatprep.subr.mxu0 0.0
        %1013 = vmatpush1.msra.mxu0 0.0
        %1014 = vmatprep.subr.mxu0 0.0
        %1015 = vmatpush1.msra.mxu0 0.0
        %1016 = vmatprep.subr.mxu0 0.0
        %1017 = vmatpush1.msra.mxu0 0.0
        %1018 = vmatprep.subr.mxu0 0.0
        %1019 = vmatpush1.msra.mxu0 0.0
        %1020 = vmatprep.subr.mxu0 0.0
        %1021 = vmatpush1.msra.mxu0 0.0
        %1022 = vmatprep.subr.mxu0 0.0
        %1023 = vmatpush1.msra.mxu0 0.0
        %1024 = vmatprep.subr.mxu0 0.0
        %1025 = vmatpush1.msra.mxu0 0.0
        %1026 = vmatprep.subr.mxu0 0.0
        %1027 = vmatpush1.msra.mxu0 0.0
        %1028 = vmatprep.subr.mxu0 0.0
        %1029 = vmatpush1.msra.mxu0 0.0
        %1030 = vmatprep.subr.mxu0 0.0
        %1031 = vmatpush1.msra.mxu0 0.0
        %1032 = vmatprep.subr.mxu0 0.0
        %1033 = vmatpush1.msra.mxu0 0.0
        %1034 = vmatprep.mubr.f32.mxu0 0.0
        %1035 = vmatmul.mubr.f32.gmra.mrb[0].mxu0 %v962
        %v1036 = vpop.f32.mrb[0].mxu0
        %v1037 = vadd.f32 0.0, %v1036
        %v1038 = vpop.f32.mrb[0].mxu0
        %v1039 = vadd.f32 0.0, %v1038
        %1040 = vdwg.mxu0
        %v1041 = vadd.f32 %v942, %v1037
        %v1042 = vadd.f32 %v943, %v1039
        %v1044 = vsel %vm683, %v636, 0
        %v1046 = vsel %vm687, %v643, 0
        %v1048 = vsel %vm687, %v644, 0
        %1050 = vmatprep.subr.mxu0 %v1048
        %1051 = vmatpush1.msra.mxu0 %v1046
        %1052 = vmatprep.subr.mxu0 0.0
        %1053 = vmatpush1.msra.mxu0 0.0
        %1054 = vmatprep.subr.mxu0 0.0
        %1055 = vmatpush1.msra.mxu0 0.0
        %1056 = vmatprep.subr.mxu0 0.0
        %1057 = vmatpush1.msra.mxu0 0.0
        %1058 = vmatprep.subr.mxu0 0.0
        %1059 = vmatpush1.msra.mxu0 0.0
        %1060 = vmatprep.subr.mxu0 0.0
        %1061 = vmatpush1.msra.mxu0 0.0
        %1062 = vmatprep.subr.mxu0 0.0
        %1063 = vmatpush1.msra.mxu0 0.0
        %1064 = vmatprep.subr.mxu0 0.0
        %1065 = vmatpush1.msra.mxu0 0.0
        %1066 = vmatprep.subr.mxu0 0.0
        %1067 = vmatpush1.msra.mxu0 0.0
        %1068 = vmatprep.subr.mxu0 0.0
        %1069 = vmatpush1.msra.mxu0 0.0
        %1070 = vmatprep.subr.mxu0 0.0
        %1071 = vmatpush1.msra.mxu0 0.0
        %1072 = vmatprep.subr.mxu0 0.0
        %1073 = vmatpush1.msra.mxu0 0.0
        %1074 = vmatprep.subr.mxu0 0.0
        %1075 = vmatpush1.msra.mxu0 0.0
        %1076 = vmatprep.subr.mxu0 0.0
        %1077 = vmatpush1.msra.mxu0 0.0
        %1078 = vmatprep.subr.mxu0 0.0
        %1079 = vmatpush1.msra.mxu0 0.0
        %1080 = vmatprep.subr.mxu0 0.0
        %1081 = vmatpush1.msra.mxu0 0.0
        %1082 = vmatprep.subr.mxu0 0.0
        %1083 = vmatpush1.msra.mxu0 0.0
        %1084 = vmatprep.subr.mxu0 0.0
        %1085 = vmatpush1.msra.mxu0 0.0
        %1086 = vmatprep.subr.mxu0 0.0
        %1087 = vmatpush1.msra.mxu0 0.0
        %1088 = vmatprep.subr.mxu0 0.0
        %1089 = vmatpush1.msra.mxu0 0.0
        %1090 = vmatprep.subr.mxu0 0.0
        %1091 = vmatpush1.msra.mxu0 0.0
        %1092 = vmatprep.subr.mxu0 0.0
        %1093 = vmatpush1.msra.mxu0 0.0
        %1094 = vmatprep.subr.mxu0 0.0
        %1095 = vmatpush1.msra.mxu0 0.0
        %1096 = vmatprep.subr.mxu0 0.0
        %1097 = vmatpush1.msra.mxu0 0.0
        %1098 = vmatprep.subr.mxu0 0.0
        %1099 = vmatpush1.msra.mxu0 0.0
        %1100 = vmatprep.subr.mxu0 0.0
        %1101 = vmatpush1.msra.mxu0 0.0
        %1102 = vmatprep.subr.mxu0 0.0
        %1103 = vmatpush1.msra.mxu0 0.0
        %1104 = vmatprep.subr.mxu0 0.0
        %1105 = vmatpush1.msra.mxu0 0.0
        %1106 = vmatprep.subr.mxu0 0.0
        %1107 = vmatpush1.msra.mxu0 0.0
        %1108 = vmatprep.subr.mxu0 0.0
        %1109 = vmatpush1.msra.mxu0 0.0
        %1110 = vmatprep.subr.mxu0 0.0
        %1111 = vmatpush1.msra.mxu0 0.0
        %1112 = vmatprep.subr.mxu0 0.0
        %1113 = vmatpush1.msra.mxu0 0.0
        %1114 = vmatprep.mubr.f32.mxu0 0.0
        %1115 = vmatmul.mubr.f32.gmra.mrb[0].mxu0 %v1044
        %v1116 = vpop.f32.mrb[0].mxu0
        %v1117 = vadd.f32 0.0, %v1116
        %v1118 = vpop.f32.mrb[0].mxu0
        %v1119 = vadd.f32 0.0, %v1118
        %1120 = vdwg.mxu0
        %v1121 = vadd.f32 %v1041, %v1117
        %v1122 = vadd.f32 %v1042, %v1119
        %1123 = vrot.lane.b32.xlu0 %v643, 127
        %v1124 = vpop.permute.xlu0 %1123
        %1125 = vrot.lane.b32.xlu0 %v644, 127
        %v1126 = vpop.permute.xlu0 %1125
        %vm1127 = vcmp.lt.s32.totalorder %v652, 127
        %v1128 = vsel %vm1127, %v1124, %v1126
        %v1129 = vsel %vm1127, %v1126, %v1124
        %v1130 = vlaneseq
        %v1131 = vshrl.u32 %v1130, 7
        %v1132 = vsub.s32 5, %v1131
        %v1133 = vrot.slane %v520, %v1132
        %v1134 = vlaneseq
        %v1135 = vshrl.u32 %v1134, 7
        %v1136 = vsub.s32 5, %v1135
        %v1137 = vrot.slane %v521, %v1136
        %v1138 = vmul.f32 %v1128, %v1133
        %v1139 = vmul.f32 %v1129, %v1137
        %v1141 = vsel %vm683, %v637, 0
        %v1144 = vsel %vm687, %v1138, 0
        %v1147 = vsel %vm687, %v1139, 0
        %1149 = vmatprep.subr.mxu0 %v1147
        %1150 = vmatpush1.msra.mxu0 %v1144
        %1151 = vmatprep.subr.mxu0 0.0
        %1152 = vmatpush1.msra.mxu0 0.0
        %1153 = vmatprep.subr.mxu0 0.0
        %1154 = vmatpush1.msra.mxu0 0.0
        %1155 = vmatprep.subr.mxu0 0.0
        %1156 = vmatpush1.msra.mxu0 0.0
        %1157 = vmatprep.subr.mxu0 0.0
        %1158 = vmatpush1.msra.mxu0 0.0
        %1159 = vmatprep.subr.mxu0 0.0
        %1160 = vmatpush1.msra.mxu0 0.0
        %1161 = vmatprep.subr.mxu0 0.0
        %1162 = vmatpush1.msra.mxu0 0.0
        %1163 = vmatprep.subr.mxu0 0.0
        %1164 = vmatpush1.msra.mxu0 0.0
        %1165 = vmatprep.subr.mxu0 0.0
        %1166 = vmatpush1.msra.mxu0 0.0
        %1167 = vmatprep.subr.mxu0 0.0
        %1168 = vmatpush1.msra.mxu0 0.0
        %1169 = vmatprep.subr.mxu0 0.0
        %1170 = vmatpush1.msra.mxu0 0.0
        %1171 = vmatprep.subr.mxu0 0.0
        %1172 = vmatpush1.msra.mxu0 0.0
        %1173 = vmatprep.subr.mxu0 0.0
        %1174 = vmatpush1.msra.mxu0 0.0
        %1175 = vmatprep.subr.mxu0 0.0
        %1176 = vmatpush1.msra.mxu0 0.0
        %1177 = vmatprep.subr.mxu0 0.0
        %1178 = vmatpush1.msra.mxu0 0.0
        %1179 = vmatprep.subr.mxu0 0.0
        %1180 = vmatpush1.msra.mxu0 0.0
        %1181 = vmatprep.subr.mxu0 0.0
        %1182 = vmatpush1.msra.mxu0 0.0
        %1183 = vmatprep.subr.mxu0 0.0
        %1184 = vmatpush1.msra.mxu0 0.0
        %1185 = vmatprep.subr.mxu0 0.0
        %1186 = vmatpush1.msra.mxu0 0.0
        %1187 = vmatprep.subr.mxu0 0.0
        %1188 = vmatpush1.msra.mxu0 0.0
        %1189 = vmatprep.subr.mxu0 0.0
        %1190 = vmatpush1.msra.mxu0 0.0
        %1191 = vmatprep.subr.mxu0 0.0
        %1192 = vmatpush1.msra.mxu0 0.0
        %1193 = vmatprep.subr.mxu0 0.0
        %1194 = vmatpush1.msra.mxu0 0.0
        %1195 = vmatprep.subr.mxu0 0.0
        %1196 = vmatpush1.msra.mxu0 0.0
        %1197 = vmatprep.subr.mxu0 0.0
        %1198 = vmatpush1.msra.mxu0 0.0
        %1199 = vmatprep.subr.mxu0 0.0
        %1200 = vmatpush1.msra.mxu0 0.0
        %1201 = vmatprep.subr.mxu0 0.0
        %1202 = vmatpush1.msra.mxu0 0.0
        %1203 = vmatprep.subr.mxu0 0.0
        %1204 = vmatpush1.msra.mxu0 0.0
        %1205 = vmatprep.subr.mxu0 0.0
        %1206 = vmatpush1.msra.mxu0 0.0
        %1207 = vmatprep.subr.mxu0 0.0
        %1208 = vmatpush1.msra.mxu0 0.0
        %1209 = vmatprep.subr.mxu0 0.0
        %1210 = vmatpush1.msra.mxu0 0.0
        %1211 = vmatprep.subr.mxu0 0.0
        %1212 = vmatpush1.msra.mxu0 0.0
        %1213 = vmatprep.mubr.f32.mxu0 0.0
        %1214 = vmatmul.mubr.f32.gmra.mrb[0].mxu0 %v1141
        %v1215 = vpop.f32.mrb[0].mxu0
        %v1216 = vadd.f32 0.0, %v1215
        %v1217 = vpop.f32.mrb[0].mxu0
        %v1218 = vadd.f32 0.0, %v1217
        %1219 = vdwg.mxu0
        %v1220 = vadd.f32 %v1121, %v1216
        %v1221 = vadd.f32 %v1122, %v1218
        %1222 = vrot.lane.b32.xlu0 %v643, 113
        %v1223 = vpop.permute.xlu0 %1222
        %1224 = vrot.lane.b32.xlu0 %v644, 113
        %v1225 = vpop.permute.xlu0 %1224
        %vm1226 = vcmp.lt.s32.totalorder %v652, 113
        %v1227 = vsel %vm1226, %v1223, %v1225
        %v1228 = vsel %vm1226, %v1225, %v1223
        %v1229 = vlaneseq
        %v1230 = vshrl.u32 %v1229, 7
        %v1231 = vsub.s32 6, %v1230
        %v1232 = vrot.slane %v520, %v1231
        %v1233 = vlaneseq
        %v1234 = vshrl.u32 %v1233, 7
        %v1235 = vsub.s32 6, %v1234
        %v1236 = vrot.slane %v521, %v1235
        %v1237 = vmul.f32 %v1227, %v1232
        %v1238 = vmul.f32 %v1228, %v1236
        %v1240 = vsel %vm683, %v638, 0
        %v1243 = vsel %vm687, %v1237, 0
        %v1246 = vsel %vm687, %v1238, 0
        %1248 = vmatprep.subr.mxu0 %v1246
        %1249 = vmatpush1.msra.mxu0 %v1243
        %1250 = vmatprep.subr.mxu0 0.0
        %1251 = vmatpush1.msra.mxu0 0.0
        %1252 = vmatprep.subr.mxu0 0.0
        %1253 = vmatpush1.msra.mxu0 0.0
        %1254 = vmatprep.subr.mxu0 0.0
        %1255 = vmatpush1.msra.mxu0 0.0
        %1256 = vmatprep.subr.mxu0 0.0
        %1257 = vmatpush1.msra.mxu0 0.0
        %1258 = vmatprep.subr.mxu0 0.0
        %1259 = vmatpush1.msra.mxu0 0.0
        %1260 = vmatprep.subr.mxu0 0.0
        %1261 = vmatpush1.msra.mxu0 0.0
        %1262 = vmatprep.subr.mxu0 0.0
        %1263 = vmatpush1.msra.mxu0 0.0
        %1264 = vmatprep.subr.mxu0 0.0
        %1265 = vmatpush1.msra.mxu0 0.0
        %1266 = vmatprep.subr.mxu0 0.0
        %1267 = vmatpush1.msra.mxu0 0.0
        %1268 = vmatprep.subr.mxu0 0.0
        %1269 = vmatpush1.msra.mxu0 0.0
        %1270 = vmatprep.subr.mxu0 0.0
        %1271 = vmatpush1.msra.mxu0 0.0
        %1272 = vmatprep.subr.mxu0 0.0
        %1273 = vmatpush1.msra.mxu0 0.0
        %1274 = vmatprep.subr.mxu0 0.0
        %1275 = vmatpush1.msra.mxu0 0.0
        %1276 = vmatprep.subr.mxu0 0.0
        %1277 = vmatpush1.msra.mxu0 0.0
        %1278 = vmatprep.subr.mxu0 0.0
        %1279 = vmatpush1.msra.mxu0 0.0
        %1280 = vmatprep.subr.mxu0 0.0
        %1281 = vmatpush1.msra.mxu0 0.0
        %1282 = vmatprep.subr.mxu0 0.0
        %1283 = vmatpush1.msra.mxu0 0.0
        %1284 = vmatprep.subr.mxu0 0.0
        %1285 = vmatpush1.msra.mxu0 0.0
        %1286 = vmatprep.subr.mxu0 0.0
        %1287 = vmatpush1.msra.mxu0 0.0
        %1288 = vmatprep.subr.mxu0 0.0
        %1289 = vmatpush1.msra.mxu0 0.0
        %1290 = vmatprep.subr.mxu0 0.0
        %1291 = vmatpush1.msra.mxu0 0.0
        %1292 = vmatprep.subr.mxu0 0.0
        %1293 = vmatpush1.msra.mxu0 0.0
        %1294 = vmatprep.subr.mxu0 0.0
        %1295 = vmatpush1.msra.mxu0 0.0
        %1296 = vmatprep.subr.mxu0 0.0
        %1297 = vmatpush1.msra.mxu0 0.0
        %1298 = vmatprep.subr.mxu0 0.0
        %1299 = vmatpush1.msra.mxu0 0.0
        %1300 = vmatprep.subr.mxu0 0.0
        %1301 = vmatpush1.msra.mxu0 0.0
        %1302 = vmatprep.subr.mxu0 0.0
        %1303 = vmatpush1.msra.mxu0 0.0
        %1304 = vmatprep.subr.mxu0 0.0
        %1305 = vmatpush1.msra.mxu0 0.0
        %1306 = vmatprep.subr.mxu0 0.0
        %1307 = vmatpush1.msra.mxu0 0.0
        %1308 = vmatprep.subr.mxu0 0.0
        %1309 = vmatpush1.msra.mxu0 0.0
        %1310 = vmatprep.subr.mxu0 0.0
        %1311 = vmatpush1.msra.mxu0 0.0
        %1312 = vmatprep.mubr.f32.mxu0 0.0
        %1313 = vmatmul.mubr.f32.gmra.mrb[0].mxu0 %v1240
        %v1314 = vpop.f32.mrb[0].mxu0
        %v1315 = vadd.f32 0.0, %v1314
        %v1316 = vpop.f32.mrb[0].mxu0
        %v1317 = vadd.f32 0.0, %v1316
        %1318 = vdwg.mxu0
        %v1319 = vadd.f32 %v1220, %v1315
        %v1320 = vadd.f32 %v1221, %v1317
        %1321 = vrot.lane.b32.xlu0 %v643, 112
        %v1322 = vpop.permute.xlu0 %1321
        %1323 = vrot.lane.b32.xlu0 %v644, 112
        %v1324 = vpop.permute.xlu0 %1323
        %vm1325 = vcmp.lt.s32.totalorder %v652, 112
        %v1326 = vsel %vm1325, %v1322, %v1324
        %v1327 = vsel %vm1325, %v1324, %v1322
        %v1328 = vlaneseq
        %v1329 = vshrl.u32 %v1328, 7
        %v1330 = vsub.s32 7, %v1329
        %v1331 = vrot.slane %v520, %v1330
        %v1332 = vlaneseq
        %v1333 = vshrl.u32 %v1332, 7
        %v1334 = vsub.s32 7, %v1333
        %v1335 = vrot.slane %v521, %v1334
        %v1336 = vmul.f32 %v1326, %v1331
        %v1337 = vmul.f32 %v1327, %v1335
        %v1339 = vsel %vm683, %v639, 0
        %v1342 = vsel %vm687, %v1336, 0
        %v1345 = vsel %vm687, %v1337, 0
        %1347 = vmatprep.subr.mxu0 %v1345
        %1348 = vmatpush1.msra.mxu0 %v1342
        %1349 = vmatprep.subr.mxu0 0.0
        %1350 = vmatpush1.msra.mxu0 0.0
        %1351 = vmatprep.subr.mxu0 0.0
        %1352 = vmatpush1.msra.mxu0 0.0
        %1353 = vmatprep.subr.mxu0 0.0
        %1354 = vmatpush1.msra.mxu0 0.0
        %1355 = vmatprep.subr.mxu0 0.0
        %1356 = vmatpush1.msra.mxu0 0.0
        %1357 = vmatprep.subr.mxu0 0.0
        %1358 = vmatpush1.msra.mxu0 0.0
        %1359 = vmatprep.subr.mxu0 0.0
        %1360 = vmatpush1.msra.mxu0 0.0
        %1361 = vmatprep.subr.mxu0 0.0
        %1362 = vmatpush1.msra.mxu0 0.0
        %1363 = vmatprep.subr.mxu0 0.0
        %1364 = vmatpush1.msra.mxu0 0.0
        %1365 = vmatprep.subr.mxu0 0.0
        %1366 = vmatpush1.msra.mxu0 0.0
        %1367 = vmatprep.subr.mxu0 0.0
        %1368 = vmatpush1.msra.mxu0 0.0
        %1369 = vmatprep.subr.mxu0 0.0
        %1370 = vmatpush1.msra.mxu0 0.0
        %1371 = vmatprep.subr.mxu0 0.0
        %1372 = vmatpush1.msra.mxu0 0.0
        %1373 = vmatprep.subr.mxu0 0.0
        %1374 = vmatpush1.msra.mxu0 0.0
        %1375 = vmatprep.subr.mxu0 0.0
        %1376 = vmatpush1.msra.mxu0 0.0
        %1377 = vmatprep.subr.mxu0 0.0
        %1378 = vmatpush1.msra.mxu0 0.0
        %1379 = vmatprep.subr.mxu0 0.0
        %1380 = vmatpush1.msra.mxu0 0.0
        %1381 = vmatprep.subr.mxu0 0.0
        %1382 = vmatpush1.msra.mxu0 0.0
        %1383 = vmatprep.subr.mxu0 0.0
        %1384 = vmatpush1.msra.mxu0 0.0
        %1385 = vmatprep.subr.mxu0 0.0
        %1386 = vmatpush1.msra.mxu0 0.0
        %1387 = vmatprep.subr.mxu0 0.0
        %1388 = vmatpush1.msra.mxu0 0.0
        %1389 = vmatprep.subr.mxu0 0.0
        %1390 = vmatpush1.msra.mxu0 0.0
        %1391 = vmatprep.subr.mxu0 0.0
        %1392 = vmatpush1.msra.mxu0 0.0
        %1393 = vmatprep.subr.mxu0 0.0
        %1394 = vmatpush1.msra.mxu0 0.0
        %1395 = vmatprep.subr.mxu0 0.0
        %1396 = vmatpush1.msra.mxu0 0.0
        %1397 = vmatprep.subr.mxu0 0.0
        %1398 = vmatpush1.msra.mxu0 0.0
        %1399 = vmatprep.subr.mxu0 0.0
        %1400 = vmatpush1.msra.mxu0 0.0
        %1401 = vmatprep.subr.mxu0 0.0
        %1402 = vmatpush1.msra.mxu0 0.0
        %1403 = vmatprep.subr.mxu0 0.0
        %1404 = vmatpush1.msra.mxu0 0.0
        %1405 = vmatprep.subr.mxu0 0.0
        %1406 = vmatpush1.msra.mxu0 0.0
        %1407 = vmatprep.subr.mxu0 0.0
        %1408 = vmatpush1.msra.mxu0 0.0
        %1409 = vmatprep.subr.mxu0 0.0
        %1410 = vmatpush1.msra.mxu0 0.0
        %1411 = vmatprep.mubr.f32.mxu0 0.0
        %1412 = vmatmul.mubr.f32.gmra.mrb[0].mxu0 %v1339
        %v1413 = vpop.f32.mrb[0].mxu0
        %v1414 = vadd.f32 0.0, %v1413
        %v1415 = vpop.f32.mrb[0].mxu0
        %v1416 = vadd.f32 0.0, %v1415
        %1417 = vdwg.mxu0
        %v1418 = vadd.f32 %v1319, %v1414
        %v1419 = vadd.f32 %v1320, %v1416
        %1420 = vrot.lane.b32.xlu0 %v643, 111
        %v1421 = vpop.permute.xlu0 %1420
        %1422 = vrot.lane.b32.xlu0 %v644, 111
        %v1423 = vpop.permute.xlu0 %1422
        %vm1424 = vcmp.lt.s32.totalorder %v652, 111
        %v1425 = vsel %vm1424, %v1421, %v1423
        %v1426 = vsel %vm1424, %v1423, %v1421
        %v1427 = vlaneseq
        %v1428 = vshrl.u32 %v1427, 7
        %v1429 = vsub.s32 0, %v1428
        %v1430 = vrot.slane %v522, %v1429
        %v1431 = vlaneseq
        %v1432 = vshrl.u32 %v1431, 7
        %v1433 = vsub.s32 0, %v1432
        %v1434 = vrot.slane %v523, %v1433
        %v1435 = vmul.f32 %v1425, %v1430
        %v1436 = vmul.f32 %v1426, %v1434
        %v1438 = vsel %vm683, %v640, 0
        %v1441 = vsel %vm687, %v1435, 0
        %v1444 = vsel %vm687, %v1436, 0
        %1446 = vmatprep.subr.mxu0 %v1444
        %1447 = vmatpush1.msra.mxu0 %v1441
        %1448 = vmatprep.subr.mxu0 0.0
        %1449 = vmatpush1.msra.mxu0 0.0
        %1450 = vmatprep.subr.mxu0 0.0
        %1451 = vmatpush1.msra.mxu0 0.0
        %1452 = vmatprep.subr.mxu0 0.0
        %1453 = vmatpush1.msra.mxu0 0.0
        %1454 = vmatprep.subr.mxu0 0.0
        %1455 = vmatpush1.msra.mxu0 0.0
        %1456 = vmatprep.subr.mxu0 0.0
        %1457 = vmatpush1.msra.mxu0 0.0
        %1458 = vmatprep.subr.mxu0 0.0
        %1459 = vmatpush1.msra.mxu0 0.0
        %1460 = vmatprep.subr.mxu0 0.0
        %1461 = vmatpush1.msra.mxu0 0.0
        %1462 = vmatprep.subr.mxu0 0.0
        %1463 = vmatpush1.msra.mxu0 0.0
        %1464 = vmatprep.subr.mxu0 0.0
        %1465 = vmatpush1.msra.mxu0 0.0
        %1466 = vmatprep.subr.mxu0 0.0
        %1467 = vmatpush1.msra.mxu0 0.0
        %1468 = vmatprep.subr.mxu0 0.0
        %1469 = vmatpush1.msra.mxu0 0.0
        %1470 = vmatprep.subr.mxu0 0.0
        %1471 = vmatpush1.msra.mxu0 0.0
        %1472 = vmatprep.subr.mxu0 0.0
        %1473 = vmatpush1.msra.mxu0 0.0
        %1474 = vmatprep.subr.mxu0 0.0
        %1475 = vmatpush1.msra.mxu0 0.0
        %1476 = vmatprep.subr.mxu0 0.0
        %1477 = vmatpush1.msra.mxu0 0.0
        %1478 = vmatprep.subr.mxu0 0.0
        %1479 = vmatpush1.msra.mxu0 0.0
        %1480 = vmatprep.subr.mxu0 0.0
        %1481 = vmatpush1.msra.mxu0 0.0
        %1482 = vmatprep.subr.mxu0 0.0
        %1483 = vmatpush1.msra.mxu0 0.0
        %1484 = vmatprep.subr.mxu0 0.0
        %1485 = vmatpush1.msra.mxu0 0.0
        %1486 = vmatprep.subr.mxu0 0.0
        %1487 = vmatpush1.msra.mxu0 0.0
        %1488 = vmatprep.subr.mxu0 0.0
        %1489 = vmatpush1.msra.mxu0 0.0
        %1490 = vmatprep.subr.mxu0 0.0
        %1491 = vmatpush1.msra.mxu0 0.0
        %1492 = vmatprep.subr.mxu0 0.0
        %1493 = vmatpush1.msra.mxu0 0.0
        %1494 = vmatprep.subr.mxu0 0.0
        %1495 = vmatpush1.msra.mxu0 0.0
        %1496 = vmatprep.subr.mxu0 0.0
        %1497 = vmatpush1.msra.mxu0 0.0
        %1498 = vmatprep.subr.mxu0 0.0
        %1499 = vmatpush1.msra.mxu0 0.0
        %1500 = vmatprep.subr.mxu0 0.0
        %1501 = vmatpush1.msra.mxu0 0.0
        %1502 = vmatprep.subr.mxu0 0.0
        %1503 = vmatpush1.msra.mxu0 0.0
        %1504 = vmatprep.subr.mxu0 0.0
        %1505 = vmatpush1.msra.mxu0 0.0
        %1506 = vmatprep.subr.mxu0 0.0
        %1507 = vmatpush1.msra.mxu0 0.0
        %1508 = vmatprep.subr.mxu0 0.0
        %1509 = vmatpush1.msra.mxu0 0.0
        %1510 = vmatprep.mubr.f32.mxu0 0.0
        %1511 = vmatmul.mubr.f32.gmra.mrb[0].mxu0 %v1438
        %v1512 = vpop.f32.mrb[0].mxu0
        %v1513 = vadd.f32 0.0, %v1512
        %v1514 = vpop.f32.mrb[0].mxu0
        %v1515 = vadd.f32 0.0, %v1514
        %1516 = vdwg.mxu0
        %v1517 = vadd.f32 %v1418, %v1513
        %v1518 = vadd.f32 %v1419, %v1515
        %v1519 = vld [vmem:[%s6] sm:$0xf]
        %1521 = vset.pattern.permute.xlu0 0
        %1522 = vperm.xlu0 %1521, %v1519
        %v1523 = vpop.permute.xlu0 %1522
        %v1525 = vmul.f32 %v1517, %v1523
        %v1526 = vmul.f32 %v1518, %v1523
        %v1527 = vld [vmem:[%s7] sm:$0xf]
        %1529 = vset.pattern.permute.xlu0 0
        %1530 = vperm.xlu0 %1529, %v1527
        %v1531 = vpop.permute.xlu0 %1530
        %v1533 = vadd.f32 %v1525, %v1531
        %v1534 = vadd.f32 %v1526, %v1531
        %v1535 = vxor.u32 %v1533, 2147483648
        %v1536 = vxor.u32 %v1534, 2147483648
        %v1537 = vmul.f32 %v1535, 1.442695
        %v1538 = vpow.pop %v1537
        %v1539 = vmul.f32 %v1536, 1.442695
        %v1540 = vpow.pop %v1539
        %v1541 = vadd.f32 %v1538, 1.0
        %v1542 = vadd.f32 %v1540, 1.0
        %v1543 = vrcp.pop %v1541
        %v1544 = vmul.f32 1.0, %v1543
        %v1545 = vrcp.pop %v1542
        %v1546 = vmul.f32 1.0, %v1545
        %v1547 = vmul.f32 %v1533, %v1544
        %v1548 = vmul.f32 %v1534, %v1546
        %v1549 = vld [vmem:[%s8] sm:$0xf]
        %v1550 = vld [vmem:[%s8 + $0x4] sm:$0xf]
        %v1551 = vld [vmem:[%s8 + $0x8] sm:$0xf]
        %v1552 = vld [vmem:[%s8 + $0xc] sm:$0xf]
        %v1553 = vld [vmem:[%s8 + $0x10] sm:$0xf]
        %v1554 = vld [vmem:[%s8 + $0x14] sm:$0xf]
        %v1555 = vld [vmem:[%s8 + $0x18] sm:$0xf]
        %v1556 = vld [vmem:[%s8 + $0x1c] sm:$0xf]
        %v1557 = vld [vmem:[%s8 + $0x20] sm:$0xf]
        %1558 = vrot.lane.b32.xlu0 %v1547, 17
        %v1559 = vpop.permute.xlu0 %1558
        %1560 = vrot.lane.b32.xlu0 %v1548, 17
        %v1561 = vpop.permute.xlu0 %1560
        %v1562 = vsel %vm653, %v1559, %v1561
        %v1563 = vsel %vm653, %v1561, %v1559
        %v1564 = vmul.f32 %v1563, %v659
        %v1565 = vmul.f32 %v1562, %v663
        %1566 = vrot.lane.b32.xlu0 %v1547, 16
        %v1567 = vpop.permute.xlu0 %1566
        %1568 = vrot.lane.b32.xlu0 %v1548, 16
        %v1569 = vpop.permute.xlu0 %1568
        %v1570 = vsel %vm670, %v1567, %v1569
        %v1571 = vsel %vm670, %v1569, %v1567
        %v1572 = vmul.f32 %v1571, %v676
        %v1573 = vmul.f32 %v1570, %v680
        %v1575 = vsel %vm683, %v1550, 0
        %v1578 = vsel %vm687, %v1572, 0
        %v1581 = vsel %vm687, %v1573, 0
        %1583 = vmatprep.subr.mxu0 %v1581
        %1584 = vmatpush1.msra.mxu0 %v1578
        %1585 = vmatprep.subr.mxu0 0.0
        %1586 = vmatpush1.msra.mxu0 0.0
        %1587 = vmatprep.subr.mxu0 0.0
        %1588 = vmatpush1.msra.mxu0 0.0
        %1589 = vmatprep.subr.mxu0 0.0
        %1590 = vmatpush1.msra.mxu0 0.0
        %1591 = vmatprep.subr.mxu0 0.0
        %1592 = vmatpush1.msra.mxu0 0.0
        %1593 = vmatprep.subr.mxu0 0.0
        %1594 = vmatpush1.msra.mxu0 0.0
        %1595 = vmatprep.subr.mxu0 0.0
        %1596 = vmatpush1.msra.mxu0 0.0
        %1597 = vmatprep.subr.mxu0 0.0
        %1598 = vmatpush1.msra.mxu0 0.0
        %1599 = vmatprep.subr.mxu0 0.0
        %1600 = vmatpush1.msra.mxu0 0.0
        %1601 = vmatprep.subr.mxu0 0.0
        %1602 = vmatpush1.msra.mxu0 0.0
        %1603 = vmatprep.subr.mxu0 0.0
        %1604 = vmatpush1.msra.mxu0 0.0
        %1605 = vmatprep.subr.mxu0 0.0
        %1606 = vmatpush1.msra.mxu0 0.0
        %1607 = vmatprep.subr.mxu0 0.0
        %1608 = vmatpush1.msra.mxu0 0.0
        %1609 = vmatprep.subr.mxu0 0.0
        %1610 = vmatpush1.msra.mxu0 0.0
        %1611 = vmatprep.subr.mxu0 0.0
        %1612 = vmatpush1.msra.mxu0 0.0
        %1613 = vmatprep.subr.mxu0 0.0
        %1614 = vmatpush1.msra.mxu0 0.0
        %1615 = vmatprep.subr.mxu0 0.0
        %1616 = vmatpush1.msra.mxu0 0.0
        %1617 = vmatprep.subr.mxu0 0.0
        %1618 = vmatpush1.msra.mxu0 0.0
        %1619 = vmatprep.subr.mxu0 0.0
        %1620 = vmatpush1.msra.mxu0 0.0
        %1621 = vmatprep.subr.mxu0 0.0
        %1622 = vmatpush1.msra.mxu0 0.0
        %1623 = vmatprep.subr.mxu0 0.0
        %1624 = vmatpush1.msra.mxu0 0.0
        %1625 = vmatprep.subr.mxu0 0.0
        %1626 = vmatpush1.msra.mxu0 0.0
        %1627 = vmatprep.subr.mxu0 0.0
        %1628 = vmatpush1.msra.mxu0 0.0
        %1629 = vmatprep.subr.mxu0 0.0
        %1630 = vmatpush1.msra.mxu0 0.0
        %1631 = vmatprep.subr.mxu0 0.0
        %1632 = vmatpush1.msra.mxu0 0.0
        %1633 = vmatprep.subr.mxu0 0.0
        %1634 = vmatpush1.msra.mxu0 0.0
        %1635 = vmatprep.subr.mxu0 0.0
        %1636 = vmatpush1.msra.mxu0 0.0
        %1637 = vmatprep.subr.mxu0 0.0
        %1638 = vmatpush1.msra.mxu0 0.0
        %1639 = vmatprep.subr.mxu0 0.0
        %1640 = vmatpush1.msra.mxu0 0.0
        %1641 = vmatprep.subr.mxu0 0.0
        %1642 = vmatpush1.msra.mxu0 0.0
        %1643 = vmatprep.subr.mxu0 0.0
        %1644 = vmatpush1.msra.mxu0 0.0
        %1645 = vmatprep.subr.mxu0 0.0
        %1646 = vmatpush1.msra.mxu0 0.0
        %1647 = vmatprep.mubr.f32.mxu0 0.0
        %1648 = vmatmul.mubr.f32.gmra.mrb[0].mxu0 %v1575
        %v1649 = vpop.f32.mrb[0].mxu0
        %v1650 = vadd.f32 0.0, %v1649
        %v1651 = vpop.f32.mrb[0].mxu0
        %v1652 = vadd.f32 0.0, %v1651
        %1653 = vdwg.mxu0
        %v1655 = vsel %vm683, %v1549, 0
        %v1658 = vsel %vm687, %v1564, 0
        %v1661 = vsel %vm687, %v1565, 0
        %1663 = vmatprep.subr.mxu0 %v1661
        %1664 = vmatpush1.msra.mxu0 %v1658
        %1665 = vmatprep.subr.mxu0 0.0
        %1666 = vmatpush1.msra.mxu0 0.0
        %1667 = vmatprep.subr.mxu0 0.0
        %1668 = vmatpush1.msra.mxu0 0.0
        %1669 = vmatprep.subr.mxu0 0.0
        %1670 = vmatpush1.msra.mxu0 0.0
        %1671 = vmatprep.subr.mxu0 0.0
        %1672 = vmatpush1.msra.mxu0 0.0
        %1673 = vmatprep.subr.mxu0 0.0
        %1674 = vmatpush1.msra.mxu0 0.0
        %1675 = vmatprep.subr.mxu0 0.0
        %1676 = vmatpush1.msra.mxu0 0.0
        %1677 = vmatprep.subr.mxu0 0.0
        %1678 = vmatpush1.msra.mxu0 0.0
        %1679 = vmatprep.subr.mxu0 0.0
        %1680 = vmatpush1.msra.mxu0 0.0
        %1681 = vmatprep.subr.mxu0 0.0
        %1682 = vmatpush1.msra.mxu0 0.0
        %1683 = vmatprep.subr.mxu0 0.0
        %1684 = vmatpush1.msra.mxu0 0.0
        %1685 = vmatprep.subr.mxu0 0.0
        %1686 = vmatpush1.msra.mxu0 0.0
        %1687 = vmatprep.subr.mxu0 0.0
        %1688 = vmatpush1.msra.mxu0 0.0
        %1689 = vmatprep.subr.mxu0 0.0
        %1690 = vmatpush1.msra.mxu0 0.0
        %1691 = vmatprep.subr.mxu0 0.0
        %1692 = vmatpush1.msra.mxu0 0.0
        %1693 = vmatprep.subr.mxu0 0.0
        %1694 = vmatpush1.msra.mxu0 0.0
        %1695 = vmatprep.subr.mxu0 0.0
        %1696 = vmatpush1.msra.mxu0 0.0
        %1697 = vmatprep.subr.mxu0 0.0
        %1698 = vmatpush1.msra.mxu0 0.0
        %1699 = vmatprep.subr.mxu0 0.0
        %1700 = vmatpush1.msra.mxu0 0.0
        %1701 = vmatprep.subr.mxu0 0.0
        %1702 = vmatpush1.msra.mxu0 0.0
        %1703 = vmatprep.subr.mxu0 0.0
        %1704 = vmatpush1.msra.mxu0 0.0
        %1705 = vmatprep.subr.mxu0 0.0
        %1706 = vmatpush1.msra.mxu0 0.0
        %1707 = vmatprep.subr.mxu0 0.0
        %1708 = vmatpush1.msra.mxu0 0.0
        %1709 = vmatprep.subr.mxu0 0.0
        %1710 = vmatpush1.msra.mxu0 0.0
        %1711 = vmatprep.subr.mxu0 0.0
        %1712 = vmatpush1.msra.mxu0 0.0
        %1713 = vmatprep.subr.mxu0 0.0
        %1714 = vmatpush1.msra.mxu0 0.0
        %1715 = vmatprep.subr.mxu0 0.0
        %1716 = vmatpush1.msra.mxu0 0.0
        %1717 = vmatprep.subr.mxu0 0.0
        %1718 = vmatpush1.msra.mxu0 0.0
        %1719 = vmatprep.subr.mxu0 0.0
        %1720 = vmatpush1.msra.mxu0 0.0
        %1721 = vmatprep.subr.mxu0 0.0
        %1722 = vmatpush1.msra.mxu0 0.0
        %1723 = vmatprep.subr.mxu0 0.0
        %1724 = vmatpush1.msra.mxu0 0.0
        %1725 = vmatprep.subr.mxu0 0.0
        %1726 = vmatpush1.msra.mxu0 0.0
        %1727 = vmatprep.mubr.f32.mxu0 0.0
        %1728 = vmatmul.mubr.f32.gmra.mrb[0].mxu0 %v1655
        %v1729 = vpop.f32.mrb[0].mxu0
        %v1730 = vadd.f32 %v1650, %v1729
        %v1731 = vpop.f32.mrb[0].mxu0
        %v1732 = vadd.f32 %v1652, %v1731
        %1733 = vdwg.mxu0
        %1734 = vrot.lane.b32.xlu0 %v1547, 15
        %v1735 = vpop.permute.xlu0 %1734
        %1736 = vrot.lane.b32.xlu0 %v1548, 15
        %v1737 = vpop.permute.xlu0 %1736
        %v1738 = vsel %vm849, %v1735, %v1737
        %v1739 = vsel %vm849, %v1737, %v1735
        %v1740 = vmul.f32 %v1739, %v855
        %v1741 = vmul.f32 %v1738, %v859
        %v1743 = vsel %vm683, %v1551, 0
        %v1746 = vsel %vm687, %v1740, 0
        %v1749 = vsel %vm687, %v1741, 0
        %1751 = vmatprep.subr.mxu0 %v1749
        %1752 = vmatpush1.msra.mxu0 %v1746
        %1753 = vmatprep.subr.mxu0 0.0
        %1754 = vmatpush1.msra.mxu0 0.0
        %1755 = vmatprep.subr.mxu0 0.0
        %1756 = vmatpush1.msra.mxu0 0.0
        %1757 = vmatprep.subr.mxu0 0.0
        %1758 = vmatpush1.msra.mxu0 0.0
        %1759 = vmatprep.subr.mxu0 0.0
        %1760 = vmatpush1.msra.mxu0 0.0
        %1761 = vmatprep.subr.mxu0 0.0
        %1762 = vmatpush1.msra.mxu0 0.0
        %1763 = vmatprep.subr.mxu0 0.0
        %1764 = vmatpush1.msra.mxu0 0.0
        %1765 = vmatprep.subr.mxu0 0.0
        %1766 = vmatpush1.msra.mxu0 0.0
        %1767 = vmatprep.subr.mxu0 0.0
        %1768 = vmatpush1.msra.mxu0 0.0
        %1769 = vmatprep.subr.mxu0 0.0
        %1770 = vmatpush1.msra.mxu0 0.0
        %1771 = vmatprep.subr.mxu0 0.0
        %1772 = vmatpush1.msra.mxu0 0.0
        %1773 = vmatprep.subr.mxu0 0.0
        %1774 = vmatpush1.msra.mxu0 0.0
        %1775 = vmatprep.subr.mxu0 0.0
        %1776 = vmatpush1.msra.mxu0 0.0
        %1777 = vmatprep.subr.mxu0 0.0
        %1778 = vmatpush1.msra.mxu0 0.0
        %1779 = vmatprep.subr.mxu0 0.0
        %1780 = vmatpush1.msra.mxu0 0.0
        %1781 = vmatprep.subr.mxu0 0.0
        %1782 = vmatpush1.msra.mxu0 0.0
        %1783 = vmatprep.subr.mxu0 0.0
        %1784 = vmatpush1.msra.mxu0 0.0
        %1785 = vmatprep.subr.mxu0 0.0
        %1786 = vmatpush1.msra.mxu0 0.0
        %1787 = vmatprep.subr.mxu0 0.0
        %1788 = vmatpush1.msra.mxu0 0.0
        %1789 = vmatprep.subr.mxu0 0.0
        %1790 = vmatpush1.msra.mxu0 0.0
        %1791 = vmatprep.subr.mxu0 0.0
        %1792 = vmatpush1.msra.mxu0 0.0
        %1793 = vmatprep.subr.mxu0 0.0
        %1794 = vmatpush1.msra.mxu0 0.0
        %1795 = vmatprep.subr.mxu0 0.0
        %1796 = vmatpush1.msra.mxu0 0.0
        %1797 = vmatprep.subr.mxu0 0.0
        %1798 = vmatpush1.msra.mxu0 0.0
        %1799 = vmatprep.subr.mxu0 0.0
        %1800 = vmatpush1.msra.mxu0 0.0
        %1801 = vmatprep.subr.mxu0 0.0
        %1802 = vmatpush1.msra.mxu0 0.0
        %1803 = vmatprep.subr.mxu0 0.0
        %1804 = vmatpush1.msra.mxu0 0.0
        %1805 = vmatprep.subr.mxu0 0.0
        %1806 = vmatpush1.msra.mxu0 0.0
        %1807 = vmatprep.subr.mxu0 0.0
        %1808 = vmatpush1.msra.mxu0 0.0
        %1809 = vmatprep.subr.mxu0 0.0
        %1810 = vmatpush1.msra.mxu0 0.0
        %1811 = vmatprep.subr.mxu0 0.0
        %1812 = vmatpush1.msra.mxu0 0.0
        %1813 = vmatprep.subr.mxu0 0.0
        %1814 = vmatpush1.msra.mxu0 0.0
        %1815 = vmatprep.mubr.f32.mxu0 0.0
        %1816 = vmatmul.mubr.f32.gmra.mrb[0].mxu0 %v1743
        %v1817 = vpop.f32.mrb[0].mxu0
        %v1818 = vadd.f32 0.0, %v1817
        %v1819 = vpop.f32.mrb[0].mxu0
        %v1820 = vadd.f32 0.0, %v1819
        %1821 = vdwg.mxu0
        %v1822 = vadd.f32 %v1730, %v1818
        %v1823 = vadd.f32 %v1732, %v1820
        %1824 = vrot.lane.b32.xlu0 %v1547, 1
        %v1825 = vpop.permute.xlu0 %1824
        %1826 = vrot.lane.b32.xlu0 %v1548, 1
        %v1827 = vpop.permute.xlu0 %1826
        %v1828 = vsel %vm948, %v1825, %v1827
        %v1829 = vsel %vm948, %v1827, %v1825
        %v1830 = vmul.f32 %v1829, %v954
        %v1831 = vmul.f32 %v1828, %v958
        %v1833 = vsel %vm683, %v1552, 0
        %v1836 = vsel %vm687, %v1830, 0
        %v1839 = vsel %vm687, %v1831, 0
        %1841 = vmatprep.subr.mxu0 %v1839
        %1842 = vmatpush1.msra.mxu0 %v1836
        %1843 = vmatprep.subr.mxu0 0.0
        %1844 = vmatpush1.msra.mxu0 0.0
        %1845 = vmatprep.subr.mxu0 0.0
        %1846 = vmatpush1.msra.mxu0 0.0
        %1847 = vmatprep.subr.mxu0 0.0
        %1848 = vmatpush1.msra.mxu0 0.0
        %1849 = vmatprep.subr.mxu0 0.0
        %1850 = vmatpush1.msra.mxu0 0.0
        %1851 = vmatprep.subr.mxu0 0.0
        %1852 = vmatpush1.msra.mxu0 0.0
        %1853 = vmatprep.subr.mxu0 0.0
        %1854 = vmatpush1.msra.mxu0 0.0
        %1855 = vmatprep.subr.mxu0 0.0
        %1856 = vmatpush1.msra.mxu0 0.0
        %1857 = vmatprep.subr.mxu0 0.0
        %1858 = vmatpush1.msra.mxu0 0.0
        %1859 = vmatprep.subr.mxu0 0.0
        %1860 = vmatpush1.msra.mxu0 0.0
        %1861 = vmatprep.subr.mxu0 0.0
        %1862 = vmatpush1.msra.mxu0 0.0
        %1863 = vmatprep.subr.mxu0 0.0
        %1864 = vmatpush1.msra.mxu0 0.0
        %1865 = vmatprep.subr.mxu0 0.0
        %1866 = vmatpush1.msra.mxu0 0.0
        %1867 = vmatprep.subr.mxu0 0.0
        %1868 = vmatpush1.msra.mxu0 0.0
        %1869 = vmatprep.subr.mxu0 0.0
        %1870 = vmatpush1.msra.mxu0 0.0
        %1871 = vmatprep.subr.mxu0 0.0
        %1872 = vmatpush1.msra.mxu0 0.0
        %1873 = vmatprep.subr.mxu0 0.0
        %1874 = vmatpush1.msra.mxu0 0.0
        %1875 = vmatprep.subr.mxu0 0.0
        %1876 = vmatpush1.msra.mxu0 0.0
        %1877 = vmatprep.subr.mxu0 0.0
        %1878 = vmatpush1.msra.mxu0 0.0
        %1879 = vmatprep.subr.mxu0 0.0
        %1880 = vmatpush1.msra.mxu0 0.0
        %1881 = vmatprep.subr.mxu0 0.0
        %1882 = vmatpush1.msra.mxu0 0.0
        %1883 = vmatprep.subr.mxu0 0.0
        %1884 = vmatpush1.msra.mxu0 0.0
        %1885 = vmatprep.subr.mxu0 0.0
        %1886 = vmatpush1.msra.mxu0 0.0
        %1887 = vmatprep.subr.mxu0 0.0
        %1888 = vmatpush1.msra.mxu0 0.0
        %1889 = vmatprep.subr.mxu0 0.0
        %1890 = vmatpush1.msra.mxu0 0.0
        %1891 = vmatprep.subr.mxu0 0.0
        %1892 = vmatpush1.msra.mxu0 0.0
        %1893 = vmatprep.subr.mxu0 0.0
        %1894 = vmatpush1.msra.mxu0 0.0
        %1895 = vmatprep.subr.mxu0 0.0
        %1896 = vmatpush1.msra.mxu0 0.0
        %1897 = vmatprep.subr.mxu0 0.0
        %1898 = vmatpush1.msra.mxu0 0.0
        %1899 = vmatprep.subr.mxu0 0.0
        %1900 = vmatpush1.msra.mxu0 0.0
        %1901 = vmatprep.subr.mxu0 0.0
        %1902 = vmatpush1.msra.mxu0 0.0
        %1903 = vmatprep.subr.mxu0 0.0
        %1904 = vmatpush1.msra.mxu0 0.0
        %1905 = vmatprep.mubr.f32.mxu0 0.0
        %1906 = vmatmul.mubr.f32.gmra.mrb[0].mxu0 %v1833
        %v1907 = vpop.f32.mrb[0].mxu0
        %v1908 = vadd.f32 0.0, %v1907
        %v1909 = vpop.f32.mrb[0].mxu0
        %v1910 = vadd.f32 0.0, %v1909
        %1911 = vdwg.mxu0
        %v1912 = vadd.f32 %v1822, %v1908
        %v1913 = vadd.f32 %v1823, %v1910
        %v1915 = vsel %vm683, %v1553, 0
        %v1918 = vsel %vm687, %v1547, 0
        %v1921 = vsel %vm687, %v1548, 0
        %1923 = vmatprep.subr.mxu0 %v1921
        %1924 = vmatpush1.msra.mxu0 %v1918
        %1925 = vmatprep.subr.mxu0 0.0
        %1926 = vmatpush1.msra.mxu0 0.0
        %1927 = vmatprep.subr.mxu0 0.0
        %1928 = vmatpush1.msra.mxu0 0.0
        %1929 = vmatprep.subr.mxu0 0.0
        %1930 = vmatpush1.msra.mxu0 0.0
        %1931 = vmatprep.subr.mxu0 0.0
        %1932 = vmatpush1.msra.mxu0 0.0
        %1933 = vmatprep.subr.mxu0 0.0
        %1934 = vmatpush1.msra.mxu0 0.0
        %1935 = vmatprep.subr.mxu0 0.0
        %1936 = vmatpush1.msra.mxu0 0.0
        %1937 = vmatprep.subr.mxu0 0.0
        %1938 = vmatpush1.msra.mxu0 0.0
        %1939 = vmatprep.subr.mxu0 0.0
        %1940 = vmatpush1.msra.mxu0 0.0
        %1941 = vmatprep.subr.mxu0 0.0
        %1942 = vmatpush1.msra.mxu0 0.0
        %1943 = vmatprep.subr.mxu0 0.0
        %1944 = vmatpush1.msra.mxu0 0.0
        %1945 = vmatprep.subr.mxu0 0.0
        %1946 = vmatpush1.msra.mxu0 0.0
        %1947 = vmatprep.subr.mxu0 0.0
        %1948 = vmatpush1.msra.mxu0 0.0
        %1949 = vmatprep.subr.mxu0 0.0
        %1950 = vmatpush1.msra.mxu0 0.0
        %1951 = vmatprep.subr.mxu0 0.0
        %1952 = vmatpush1.msra.mxu0 0.0
        %1953 = vmatprep.subr.mxu0 0.0
        %1954 = vmatpush1.msra.mxu0 0.0
        %1955 = vmatprep.subr.mxu0 0.0
        %1956 = vmatpush1.msra.mxu0 0.0
        %1957 = vmatprep.subr.mxu0 0.0
        %1958 = vmatpush1.msra.mxu0 0.0
        %1959 = vmatprep.subr.mxu0 0.0
        %1960 = vmatpush1.msra.mxu0 0.0
        %1961 = vmatprep.subr.mxu0 0.0
        %1962 = vmatpush1.msra.mxu0 0.0
        %1963 = vmatprep.subr.mxu0 0.0
        %1964 = vmatpush1.msra.mxu0 0.0
        %1965 = vmatprep.subr.mxu0 0.0
        %1966 = vmatpush1.msra.mxu0 0.0
        %1967 = vmatprep.subr.mxu0 0.0
        %1968 = vmatpush1.msra.mxu0 0.0
        %1969 = vmatprep.subr.mxu0 0.0
        %1970 = vmatpush1.msra.mxu0 0.0
        %1971 = vmatprep.subr.mxu0 0.0
        %1972 = vmatpush1.msra.mxu0 0.0
        %1973 = vmatprep.subr.mxu0 0.0
        %1974 = vmatpush1.msra.mxu0 0.0
        %1975 = vmatprep.subr.mxu0 0.0
        %1976 = vmatpush1.msra.mxu0 0.0
        %1977 = vmatprep.subr.mxu0 0.0
        %1978 = vmatpush1.msra.mxu0 0.0
        %1979 = vmatprep.subr.mxu0 0.0
        %1980 = vmatpush1.msra.mxu0 0.0
        %1981 = vmatprep.subr.mxu0 0.0
        %1982 = vmatpush1.msra.mxu0 0.0
        %1983 = vmatprep.subr.mxu0 0.0
        %1984 = vmatpush1.msra.mxu0 0.0
        %1985 = vmatprep.subr.mxu0 0.0
        %1986 = vmatpush1.msra.mxu0 0.0
        %1987 = vmatprep.mubr.f32.mxu0 0.0
        %1988 = vmatmul.mubr.f32.gmra.mrb[0].mxu0 %v1915
        %v1989 = vpop.f32.mrb[0].mxu0
        %v1990 = vadd.f32 0.0, %v1989
        %v1991 = vpop.f32.mrb[0].mxu0
        %v1992 = vadd.f32 0.0, %v1991
        %1993 = vdwg.mxu0
        %v1994 = vadd.f32 %v1912, %v1990
        %v1995 = vadd.f32 %v1913, %v1992
        %1996 = vrot.lane.b32.xlu0 %v1547, 127
        %v1997 = vpop.permute.xlu0 %1996
        %1998 = vrot.lane.b32.xlu0 %v1548, 127
        %v1999 = vpop.permute.xlu0 %1998
        %v2000 = vsel %vm1127, %v1997, %v1999
        %v2001 = vsel %vm1127, %v1999, %v1997
        %v2002 = vmul.f32 %v2000, %v1133
        %v2003 = vmul.f32 %v2001, %v1137
        %v2005 = vsel %vm683, %v1554, 0
        %v2008 = vsel %vm687, %v2002, 0
        %v2011 = vsel %vm687, %v2003, 0
        %2013 = vmatprep.subr.mxu0 %v2011
        %2014 = vmatpush1.msra.mxu0 %v2008
        %2015 = vmatprep.subr.mxu0 0.0
        %2016 = vmatpush1.msra.mxu0 0.0
        %2017 = vmatprep.subr.mxu0 0.0
        %2018 = vmatpush1.msra.mxu0 0.0
        %2019 = vmatprep.subr.mxu0 0.0
        %2020 = vmatpush1.msra.mxu0 0.0
        %2021 = vmatprep.subr.mxu0 0.0
        %2022 = vmatpush1.msra.mxu0 0.0
        %2023 = vmatprep.subr.mxu0 0.0
        %2024 = vmatpush1.msra.mxu0 0.0
        %2025 = vmatprep.subr.mxu0 0.0
        %2026 = vmatpush1.msra.mxu0 0.0
        %2027 = vmatprep.subr.mxu0 0.0
        %2028 = vmatpush1.msra.mxu0 0.0
        %2029 = vmatprep.subr.mxu0 0.0
        %2030 = vmatpush1.msra.mxu0 0.0
        %2031 = vmatprep.subr.mxu0 0.0
        %2032 = vmatpush1.msra.mxu0 0.0
        %2033 = vmatprep.subr.mxu0 0.0
        %2034 = vmatpush1.msra.mxu0 0.0
        %2035 = vmatprep.subr.mxu0 0.0
        %2036 = vmatpush1.msra.mxu0 0.0
        %2037 = vmatprep.subr.mxu0 0.0
        %2038 = vmatpush1.msra.mxu0 0.0
        %2039 = vmatprep.subr.mxu0 0.0
        %2040 = vmatpush1.msra.mxu0 0.0
        %2041 = vmatprep.subr.mxu0 0.0
        %2042 = vmatpush1.msra.mxu0 0.0
        %2043 = vmatprep.subr.mxu0 0.0
        %2044 = vmatpush1.msra.mxu0 0.0
        %2045 = vmatprep.subr.mxu0 0.0
        %2046 = vmatpush1.msra.mxu0 0.0
        %2047 = vmatprep.subr.mxu0 0.0
        %2048 = vmatpush1.msra.mxu0 0.0
        %2049 = vmatprep.subr.mxu0 0.0
        %2050 = vmatpush1.msra.mxu0 0.0
        %2051 = vmatprep.subr.mxu0 0.0
        %2052 = vmatpush1.msra.mxu0 0.0
        %2053 = vmatprep.subr.mxu0 0.0
        %2054 = vmatpush1.msra.mxu0 0.0
        %2055 = vmatprep.subr.mxu0 0.0
        %2056 = vmatpush1.msra.mxu0 0.0
        %2057 = vmatprep.subr.mxu0 0.0
        %2058 = vmatpush1.msra.mxu0 0.0
        %2059 = vmatprep.subr.mxu0 0.0
        %2060 = vmatpush1.msra.mxu0 0.0
        %2061 = vmatprep.subr.mxu0 0.0
        %2062 = vmatpush1.msra.mxu0 0.0
        %2063 = vmatprep.subr.mxu0 0.0
        %2064 = vmatpush1.msra.mxu0 0.0
        %2065 = vmatprep.subr.mxu0 0.0
        %2066 = vmatpush1.msra.mxu0 0.0
        %2067 = vmatprep.subr.mxu0 0.0
        %2068 = vmatpush1.msra.mxu0 0.0
        %2069 = vmatprep.subr.mxu0 0.0
        %2070 = vmatpush1.msra.mxu0 0.0
        %2071 = vmatprep.subr.mxu0 0.0
        %2072 = vmatpush1.msra.mxu0 0.0
        %2073 = vmatprep.subr.mxu0 0.0
        %2074 = vmatpush1.msra.mxu0 0.0
        %2075 = vmatprep.subr.mxu0 0.0
        %2076 = vmatpush1.msra.mxu0 0.0
        %2077 = vmatprep.mubr.f32.mxu0 0.0
        %2078 = vmatmul.mubr.f32.gmra.mrb[0].mxu0 %v2005
        %v2079 = vpop.f32.mrb[0].mxu0
        %v2080 = vadd.f32 0.0, %v2079
        %v2081 = vpop.f32.mrb[0].mxu0
        %v2082 = vadd.f32 0.0, %v2081
        %2083 = vdwg.mxu0
        %v2084 = vadd.f32 %v1994, %v2080
        %v2085 = vadd.f32 %v1995, %v2082
        %2086 = vrot.lane.b32.xlu0 %v1547, 113
        %v2087 = vpop.permute.xlu0 %2086
        %2088 = vrot.lane.b32.xlu0 %v1548, 113
        %v2089 = vpop.permute.xlu0 %2088
        %v2090 = vsel %vm1226, %v2087, %v2089
        %v2091 = vsel %vm1226, %v2089, %v2087
        %v2092 = vmul.f32 %v2090, %v1232
        %v2093 = vmul.f32 %v2091, %v1236
        %v2095 = vsel %vm683, %v1555, 0
        %v2098 = vsel %vm687, %v2092, 0
        %v2101 = vsel %vm687, %v2093, 0
        %2103 = vmatprep.subr.mxu0 %v2101
        %2104 = vmatpush1.msra.mxu0 %v2098
        %2105 = vmatprep.subr.mxu0 0.0
        %2106 = vmatpush1.msra.mxu0 0.0
        %2107 = vmatprep.subr.mxu0 0.0
        %2108 = vmatpush1.msra.mxu0 0.0
        %2109 = vmatprep.subr.mxu0 0.0
        %2110 = vmatpush1.msra.mxu0 0.0
        %2111 = vmatprep.subr.mxu0 0.0
        %2112 = vmatpush1.msra.mxu0 0.0
        %2113 = vmatprep.subr.mxu0 0.0
        %2114 = vmatpush1.msra.mxu0 0.0
        %2115 = vmatprep.subr.mxu0 0.0
        %2116 = vmatpush1.msra.mxu0 0.0
        %2117 = vmatprep.subr.mxu0 0.0
        %2118 = vmatpush1.msra.mxu0 0.0
        %2119 = vmatprep.subr.mxu0 0.0
        %2120 = vmatpush1.msra.mxu0 0.0
        %2121 = vmatprep.subr.mxu0 0.0
        %2122 = vmatpush1.msra.mxu0 0.0
        %2123 = vmatprep.subr.mxu0 0.0
        %2124 = vmatpush1.msra.mxu0 0.0
        %2125 = vmatprep.subr.mxu0 0.0
        %2126 = vmatpush1.msra.mxu0 0.0
        %2127 = vmatprep.subr.mxu0 0.0
        %2128 = vmatpush1.msra.mxu0 0.0
        %2129 = vmatprep.subr.mxu0 0.0
        %2130 = vmatpush1.msra.mxu0 0.0
        %2131 = vmatprep.subr.mxu0 0.0
        %2132 = vmatpush1.msra.mxu0 0.0
        %2133 = vmatprep.subr.mxu0 0.0
        %2134 = vmatpush1.msra.mxu0 0.0
        %2135 = vmatprep.subr.mxu0 0.0
        %2136 = vmatpush1.msra.mxu0 0.0
        %2137 = vmatprep.subr.mxu0 0.0
        %2138 = vmatpush1.msra.mxu0 0.0
        %2139 = vmatprep.subr.mxu0 0.0
        %2140 = vmatpush1.msra.mxu0 0.0
        %2141 = vmatprep.subr.mxu0 0.0
        %2142 = vmatpush1.msra.mxu0 0.0
        %2143 = vmatprep.subr.mxu0 0.0
        %2144 = vmatpush1.msra.mxu0 0.0
        %2145 = vmatprep.subr.mxu0 0.0
        %2146 = vmatpush1.msra.mxu0 0.0
        %2147 = vmatprep.subr.mxu0 0.0
        %2148 = vmatpush1.msra.mxu0 0.0
        %2149 = vmatprep.subr.mxu0 0.0
        %2150 = vmatpush1.msra.mxu0 0.0
        %2151 = vmatprep.subr.mxu0 0.0
        %2152 = vmatpush1.msra.mxu0 0.0
        %2153 = vmatprep.subr.mxu0 0.0
        %2154 = vmatpush1.msra.mxu0 0.0
        %2155 = vmatprep.subr.mxu0 0.0
        %2156 = vmatpush1.msra.mxu0 0.0
        %2157 = vmatprep.subr.mxu0 0.0
        %2158 = vmatpush1.msra.mxu0 0.0
        %2159 = vmatprep.subr.mxu0 0.0
        %2160 = vmatpush1.msra.mxu0 0.0
        %2161 = vmatprep.subr.mxu0 0.0
        %2162 = vmatpush1.msra.mxu0 0.0
        %2163 = vmatprep.subr.mxu0 0.0
        %2164 = vmatpush1.msra.mxu0 0.0
        %2165 = vmatprep.subr.mxu0 0.0
        %2166 = vmatpush1.msra.mxu0 0.0
        %2167 = vmatprep.mubr.f32.mxu0 0.0
        %2168 = vmatmul.mubr.f32.gmra.mrb[0].mxu0 %v2095
        %v2169 = vpop.f32.mrb[0].mxu0
        %v2170 = vadd.f32 0.0, %v2169
        %v2171 = vpop.f32.mrb[0].mxu0
        %v2172 = vadd.f32 0.0, %v2171
        %2173 = vdwg.mxu0
        %v2174 = vadd.f32 %v2084, %v2170
        %v2175 = vadd.f32 %v2085, %v2172
        %2176 = vrot.lane.b32.xlu0 %v1547, 112
        %v2177 = vpop.permute.xlu0 %2176
        %2178 = vrot.lane.b32.xlu0 %v1548, 112
        %v2179 = vpop.permute.xlu0 %2178
        %v2180 = vsel %vm1325, %v2177, %v2179
        %v2181 = vsel %vm1325, %v2179, %v2177
        %v2182 = vmul.f32 %v2180, %v1331
        %v2183 = vmul.f32 %v2181, %v1335
        %v2185 = vsel %vm683, %v1556, 0
        %v2188 = vsel %vm687, %v2182, 0
        %v2191 = vsel %vm687, %v2183, 0
        %2193 = vmatprep.subr.mxu0 %v2191
        %2194 = vmatpush1.msra.mxu0 %v2188
        %2195 = vmatprep.subr.mxu0 0.0
        %2196 = vmatpush1.msra.mxu0 0.0
        %2197 = vmatprep.subr.mxu0 0.0
        %2198 = vmatpush1.msra.mxu0 0.0
        %2199 = vmatprep.subr.mxu0 0.0
        %2200 = vmatpush1.msra.mxu0 0.0
        %2201 = vmatprep.subr.mxu0 0.0
        %2202 = vmatpush1.msra.mxu0 0.0
        %2203 = vmatprep.subr.mxu0 0.0
        %2204 = vmatpush1.msra.mxu0 0.0
        %2205 = vmatprep.subr.mxu0 0.0
        %2206 = vmatpush1.msra.mxu0 0.0
        %2207 = vmatprep.subr.mxu0 0.0
        %2208 = vmatpush1.msra.mxu0 0.0
        %2209 = vmatprep.subr.mxu0 0.0
        %2210 = vmatpush1.msra.mxu0 0.0
        %2211 = vmatprep.subr.mxu0 0.0
        %2212 = vmatpush1.msra.mxu0 0.0
        %2213 = vmatprep.subr.mxu0 0.0
        %2214 = vmatpush1.msra.mxu0 0.0
        %2215 = vmatprep.subr.mxu0 0.0
        %2216 = vmatpush1.msra.mxu0 0.0
        %2217 = vmatprep.subr.mxu0 0.0
        %2218 = vmatpush1.msra.mxu0 0.0
        %2219 = vmatprep.subr.mxu0 0.0
        %2220 = vmatpush1.msra.mxu0 0.0
        %2221 = vmatprep.subr.mxu0 0.0
        %2222 = vmatpush1.msra.mxu0 0.0
        %2223 = vmatprep.subr.mxu0 0.0
        %2224 = vmatpush1.msra.mxu0 0.0
        %2225 = vmatprep.subr.mxu0 0.0
        %2226 = vmatpush1.msra.mxu0 0.0
        %2227 = vmatprep.subr.mxu0 0.0
        %2228 = vmatpush1.msra.mxu0 0.0
        %2229 = vmatprep.subr.mxu0 0.0
        %2230 = vmatpush1.msra.mxu0 0.0
        %2231 = vmatprep.subr.mxu0 0.0
        %2232 = vmatpush1.msra.mxu0 0.0
        %2233 = vmatprep.subr.mxu0 0.0
        %2234 = vmatpush1.msra.mxu0 0.0
        %2235 = vmatprep.subr.mxu0 0.0
        %2236 = vmatpush1.msra.mxu0 0.0
        %2237 = vmatprep.subr.mxu0 0.0
        %2238 = vmatpush1.msra.mxu0 0.0
        %2239 = vmatprep.subr.mxu0 0.0
        %2240 = vmatpush1.msra.mxu0 0.0
        %2241 = vmatprep.subr.mxu0 0.0
        %2242 = vmatpush1.msra.mxu0 0.0
        %2243 = vmatprep.subr.mxu0 0.0
        %2244 = vmatpush1.msra.mxu0 0.0
        %2245 = vmatprep.subr.mxu0 0.0
        %2246 = vmatpush1.msra.mxu0 0.0
        %2247 = vmatprep.subr.mxu0 0.0
        %2248 = vmatpush1.msra.mxu0 0.0
        %2249 = vmatprep.subr.mxu0 0.0
        %2250 = vmatpush1.msra.mxu0 0.0
        %2251 = vmatprep.subr.mxu0 0.0
        %2252 = vmatpush1.msra.mxu0 0.0
        %2253 = vmatprep.subr.mxu0 0.0
        %2254 = vmatpush1.msra.mxu0 0.0
        %2255 = vmatprep.subr.mxu0 0.0
        %2256 = vmatpush1.msra.mxu0 0.0
        %2257 = vmatprep.mubr.f32.mxu0 0.0
        %2258 = vmatmul.mubr.f32.gmra.mrb[0].mxu0 %v2185
        %v2259 = vpop.f32.mrb[0].mxu0
        %v2260 = vadd.f32 0.0, %v2259
        %v2261 = vpop.f32.mrb[0].mxu0
        %v2262 = vadd.f32 0.0, %v2261
        %2263 = vdwg.mxu0
        %v2264 = vadd.f32 %v2174, %v2260
        %v2265 = vadd.f32 %v2175, %v2262
        %2266 = vrot.lane.b32.xlu0 %v1547, 111
        %v2267 = vpop.permute.xlu0 %2266
        %2268 = vrot.lane.b32.xlu0 %v1548, 111
        %v2269 = vpop.permute.xlu0 %2268
        %v2270 = vsel %vm1424, %v2267, %v2269
        %v2271 = vsel %vm1424, %v2269, %v2267
        %v2272 = vmul.f32 %v2270, %v1430
        %v2273 = vmul.f32 %v2271, %v1434
        %v2275 = vsel %vm683, %v1557, 0
        %v2278 = vsel %vm687, %v2272, 0
        %v2281 = vsel %vm687, %v2273, 0
        %2283 = vmatprep.subr.mxu0 %v2281
        %2284 = vmatpush1.msra.mxu0 %v2278
        %2285 = vmatprep.subr.mxu0 0.0
        %2286 = vmatpush1.msra.mxu0 0.0
        %2287 = vmatprep.subr.mxu0 0.0
        %2288 = vmatpush1.msra.mxu0 0.0
        %2289 = vmatprep.subr.mxu0 0.0
        %2290 = vmatpush1.msra.mxu0 0.0
        %2291 = vmatprep.subr.mxu0 0.0
        %2292 = vmatpush1.msra.mxu0 0.0
        %2293 = vmatprep.subr.mxu0 0.0
        %2294 = vmatpush1.msra.mxu0 0.0
        %2295 = vmatprep.subr.mxu0 0.0
        %2296 = vmatpush1.msra.mxu0 0.0
        %2297 = vmatprep.subr.mxu0 0.0
        %2298 = vmatpush1.msra.mxu0 0.0
        %2299 = vmatprep.subr.mxu0 0.0
        %2300 = vmatpush1.msra.mxu0 0.0
        %2301 = vmatprep.subr.mxu0 0.0
        %2302 = vmatpush1.msra.mxu0 0.0
        %2303 = vmatprep.subr.mxu0 0.0
        %2304 = vmatpush1.msra.mxu0 0.0
        %2305 = vmatprep.subr.mxu0 0.0
        %2306 = vmatpush1.msra.mxu0 0.0
        %2307 = vmatprep.subr.mxu0 0.0
        %2308 = vmatpush1.msra.mxu0 0.0
        %2309 = vmatprep.subr.mxu0 0.0
        %2310 = vmatpush1.msra.mxu0 0.0
        %2311 = vmatprep.subr.mxu0 0.0
        %2312 = vmatpush1.msra.mxu0 0.0
        %2313 = vmatprep.subr.mxu0 0.0
        %2314 = vmatpush1.msra.mxu0 0.0
        %2315 = vmatprep.subr.mxu0 0.0
        %2316 = vmatpush1.msra.mxu0 0.0
        %2317 = vmatprep.subr.mxu0 0.0
        %2318 = vmatpush1.msra.mxu0 0.0
        %2319 = vmatprep.subr.mxu0 0.0
        %2320 = vmatpush1.msra.mxu0 0.0
        %2321 = vmatprep.subr.mxu0 0.0
        %2322 = vmatpush1.msra.mxu0 0.0
        %2323 = vmatprep.subr.mxu0 0.0
        %2324 = vmatpush1.msra.mxu0 0.0
        %2325 = vmatprep.subr.mxu0 0.0
        %2326 = vmatpush1.msra.mxu0 0.0
        %2327 = vmatprep.subr.mxu0 0.0
        %2328 = vmatpush1.msra.mxu0 0.0
        %2329 = vmatprep.subr.mxu0 0.0
        %2330 = vmatpush1.msra.mxu0 0.0
        %2331 = vmatprep.subr.mxu0 0.0
        %2332 = vmatpush1.msra.mxu0 0.0
        %2333 = vmatprep.subr.mxu0 0.0
        %2334 = vmatpush1.msra.mxu0 0.0
        %2335 = vmatprep.subr.mxu0 0.0
        %2336 = vmatpush1.msra.mxu0 0.0
        %2337 = vmatprep.subr.mxu0 0.0
        %2338 = vmatpush1.msra.mxu0 0.0
        %2339 = vmatprep.subr.mxu0 0.0
        %2340 = vmatpush1.msra.mxu0 0.0
        %2341 = vmatprep.subr.mxu0 0.0
        %2342 = vmatpush1.msra.mxu0 0.0
        %2343 = vmatprep.subr.mxu0 0.0
        %2344 = vmatpush1.msra.mxu0 0.0
        %2345 = vmatprep.subr.mxu0 0.0
        %2346 = vmatpush1.msra.mxu0 0.0
        %2347 = vmatprep.mubr.f32.mxu0 0.0
        %2348 = vmatmul.mubr.f32.gmra.mrb[0].mxu0 %v2275
        %v2349 = vpop.f32.mrb[0].mxu0
        %v2350 = vadd.f32 0.0, %v2349
        %v2351 = vpop.f32.mrb[0].mxu0
        %v2352 = vadd.f32 0.0, %v2351
        %2353 = vdwg.mxu0
        %v2354 = vadd.f32 %v2264, %v2350
        %v2355 = vadd.f32 %v2265, %v2352
        %v2356 = vld [vmem:[%s9] sm:$0xf]
        %2358 = vset.pattern.permute.xlu0 0
        %2359 = vperm.xlu0 %2358, %v2356
        %v2360 = vpop.permute.xlu0 %2359
        %v2362 = vmul.f32 %v2354, %v2360
        %v2363 = vmul.f32 %v2355, %v2360
        %v2364 = vld [vmem:[%s10] sm:$0xf]
        %2366 = vset.pattern.permute.xlu0 0
        %2367 = vperm.xlu0 %2366, %v2364
        %v2368 = vpop.permute.xlu0 %2367
        %v2370 = vadd.f32 %v2362, %v2368
        %v2371 = vadd.f32 %v2363, %v2368
        %v2372 = vxor.u32 %v2370, 2147483648
        %v2373 = vxor.u32 %v2371, 2147483648
        %v2374 = vmul.f32 %v2372, 1.442695
        %v2375 = vpow.pop %v2374
        %v2376 = vmul.f32 %v2373, 1.442695
        %v2377 = vpow.pop %v2376
        %v2378 = vadd.f32 %v2375, 1.0
        %v2379 = vadd.f32 %v2377, 1.0
        %v2380 = vrcp.pop %v2378
        %v2381 = vmul.f32 1.0, %v2380
        %v2382 = vrcp.pop %v2379
        %v2383 = vmul.f32 1.0, %v2382
        %v2384 = vmul.f32 %v2370, %v2381
        %v2385 = vmul.f32 %v2371, %v2383
        %2386 = vmatprep.subr.mxu0 %v2385
        %2387 = vmatpush1.xpose.msra.mxu0 %v2384
        %2388 = vmatprep.subr.mxu0 0.0
        %2389 = vmatpush1.xpose.msra.mxu0 0.0
        %2390 = vmatprep.subr.mxu0 0.0
        %2391 = vmatpush1.xpose.msra.mxu0 0.0
        %2392 = vmatprep.subr.mxu0 0.0
        %2393 = vmatpush1.xpose.msra.mxu0 0.0
        %2394 = vmatprep.subr.mxu0 0.0
        %2395 = vmatpush1.xpose.msra.mxu0 0.0
        %2396 = vmatprep.subr.mxu0 0.0
        %2397 = vmatpush1.xpose.msra.mxu0 0.0
        %2398 = vmatprep.subr.mxu0 0.0
        %2399 = vmatpush1.xpose.msra.mxu0 0.0
        %2400 = vmatprep.subr.mxu0 0.0
        %2401 = vmatpush1.xpose.msra.mxu0 0.0
        %2402 = vmatprep.subr.mxu0 0.0
        %2403 = vmatpush1.xpose.msra.mxu0 0.0
        %2404 = vmatprep.subr.mxu0 0.0
        %2405 = vmatpush1.xpose.msra.mxu0 0.0
        %2406 = vmatprep.subr.mxu0 0.0
        %2407 = vmatpush1.xpose.msra.mxu0 0.0
        %2408 = vmatprep.subr.mxu0 0.0
        %2409 = vmatpush1.xpose.msra.mxu0 0.0
        %2410 = vmatprep.subr.mxu0 0.0
        %2411 = vmatpush1.xpose.msra.mxu0 0.0
        %2412 = vmatprep.subr.mxu0 0.0
        %2413 = vmatpush1.xpose.msra.mxu0 0.0
        %2414 = vmatprep.subr.mxu0 0.0
        %2415 = vmatpush1.xpose.msra.mxu0 0.0
        %2416 = vmatprep.subr.mxu0 0.0
        %2417 = vmatpush1.xpose.msra.mxu0 0.0
        %2418 = vmatprep.subr.mxu0 0.0
        %2419 = vmatpush1.xpose.msra.mxu0 0.0
        %2420 = vmatprep.subr.mxu0 0.0
        %2421 = vmatpush1.xpose.msra.mxu0 0.0
        %2422 = vmatprep.subr.mxu0 0.0
        %2423 = vmatpush1.xpose.msra.mxu0 0.0
        %2424 = vmatprep.subr.mxu0 0.0
        %2425 = vmatpush1.xpose.msra.mxu0 0.0
        %2426 = vmatprep.subr.mxu0 0.0
        %2427 = vmatpush1.xpose.msra.mxu0 0.0
        %2428 = vmatprep.subr.mxu0 0.0
        %2429 = vmatpush1.xpose.msra.mxu0 0.0
        %2430 = vmatprep.subr.mxu0 0.0
        %2431 = vmatpush1.xpose.msra.mxu0 0.0
        %2432 = vmatprep.subr.mxu0 0.0
        %2433 = vmatpush1.xpose.msra.mxu0 0.0
        %2434 = vmatprep.subr.mxu0 0.0
        %2435 = vmatpush1.xpose.msra.mxu0 0.0
        %2436 = vmatprep.subr.mxu0 0.0
        %2437 = vmatpush1.xpose.msra.mxu0 0.0
        %2438 = vmatprep.subr.mxu0 0.0
        %2439 = vmatpush1.xpose.msra.mxu0 0.0
        %2440 = vmatprep.subr.mxu0 0.0
        %2441 = vmatpush1.xpose.msra.mxu0 0.0
        %2442 = vmatprep.subr.mxu0 0.0
        %2443 = vmatpush1.xpose.msra.mxu0 0.0
        %2444 = vmatprep.subr.mxu0 0.0
        %2445 = vmatpush1.xpose.msra.mxu0 0.0
        %2446 = vmatprep.subr.mxu0 0.0
        %2447 = vmatpush1.xpose.msra.mxu0 0.0
        %2448 = vmatprep.subr.mxu0 0.0
        %2449 = vmatpush1.xpose.msra.mxu0 0.0
        %2450 = vmatprep.mubr.f32.mxu0 %v2385
        %2451 = vmatmul.mubr.f32.gmra.mrb[0].mxu0 %v2384
        %v2452 = vpop.f32.mrb[0].mxu0
        %v2453 = vadd.f32 0.0, %v2452
        %v2454 = vpop.f32.mrb[0].mxu0
        %2455 = vdwg.mxu0
        %v2456 = vmul.f32 %v2453, 0.5
        %vm2457 = vcmask 27648
        %v2458 = vsel %vm2457, %v2456, -inf
        %2459 = vmax.xlane.f32.xlu0 %v2458
        %v2460 = vpop.xlane.xlu0 %2459
        %v2461 = vsub.f32 %v2456, %v2460
        %v2462 = vmul.f32 %v2461, 1.442695
        %v2463 = vpow.pop %v2462
        %v2464 = vsel %vm2457, %v2463, 0.0
        %2465 = vadd.xlane.f32.xlu0 %v2464
        %v2466 = vpop.xlane.xlu0 %2465
        %v2467 = vrcp.pop %v2466
        %v2468 = vmul.f32 %v2463, %v2467
        %v2470 = vsel %vm683, %v2468, 0
        %v2473 = vsel %vm687, %v2384, 0
        %v2476 = vsel %vm687, %v2385, 0
        %2478 = vmatprep.subr.mxu0 %v2476
        %2479 = vmatpush1.msra.mxu0 %v2473
        %2480 = vmatprep.subr.mxu0 0.0
        %2481 = vmatpush1.msra.mxu0 0.0
        %2482 = vmatprep.subr.mxu0 0.0
        %2483 = vmatpush1.msra.mxu0 0.0
        %2484 = vmatprep.subr.mxu0 0.0
        %2485 = vmatpush1.msra.mxu0 0.0
        %2486 = vmatprep.subr.mxu0 0.0
        %2487 = vmatpush1.msra.mxu0 0.0
        %2488 = vmatprep.subr.mxu0 0.0
        %2489 = vmatpush1.msra.mxu0 0.0
        %2490 = vmatprep.subr.mxu0 0.0
        %2491 = vmatpush1.msra.mxu0 0.0
        %2492 = vmatprep.subr.mxu0 0.0
        %2493 = vmatpush1.msra.mxu0 0.0
        %2494 = vmatprep.subr.mxu0 0.0
        %2495 = vmatpush1.msra.mxu0 0.0
        %2496 = vmatprep.subr.mxu0 0.0
        %2497 = vmatpush1.msra.mxu0 0.0
        %2498 = vmatprep.subr.mxu0 0.0
        %2499 = vmatpush1.msra.mxu0 0.0
        %2500 = vmatprep.subr.mxu0 0.0
        %2501 = vmatpush1.msra.mxu0 0.0
        %2502 = vmatprep.subr.mxu0 0.0
        %2503 = vmatpush1.msra.mxu0 0.0
        %2504 = vmatprep.subr.mxu0 0.0
        %2505 = vmatpush1.msra.mxu0 0.0
        %2506 = vmatprep.subr.mxu0 0.0
        %2507 = vmatpush1.msra.mxu0 0.0
        %2508 = vmatprep.subr.mxu0 0.0
        %2509 = vmatpush1.msra.mxu0 0.0
        %2510 = vmatprep.subr.mxu0 0.0
        %2511 = vmatpush1.msra.mxu0 0.0
        %2512 = vmatprep.subr.mxu0 0.0
        %2513 = vmatpush1.msra.mxu0 0.0
        %2514 = vmatprep.subr.mxu0 0.0
        %2515 = vmatpush1.msra.mxu0 0.0
        %2516 = vmatprep.subr.mxu0 0.0
        %2517 = vmatpush1.msra.mxu0 0.0
        %2518 = vmatprep.subr.mxu0 0.0
        %2519 = vmatpush1.msra.mxu0 0.0
        %2520 = vmatprep.subr.mxu0 0.0
        %2521 = vmatpush1.msra.mxu0 0.0
        %2522 = vmatprep.subr.mxu0 0.0
        %2523 = vmatpush1.msra.mxu0 0.0
        %2524 = vmatprep.subr.mxu0 0.0
        %2525 = vmatpush1.msra.mxu0 0.0
        %2526 = vmatprep.subr.mxu0 0.0
        %2527 = vmatpush1.msra.mxu0 0.0
        %2528 = vmatprep.subr.mxu0 0.0
        %2529 = vmatpush1.msra.mxu0 0.0
        %2530 = vmatprep.subr.mxu0 0.0
        %2531 = vmatpush1.msra.mxu0 0.0
        %2532 = vmatprep.subr.mxu0 0.0
        %2533 = vmatpush1.msra.mxu0 0.0
        %2534 = vmatprep.subr.mxu0 0.0
        %2535 = vmatpush1.msra.mxu0 0.0
        %2536 = vmatprep.subr.mxu0 0.0
        %2537 = vmatpush1.msra.mxu0 0.0
        %2538 = vmatprep.subr.mxu0 0.0
        %2539 = vmatpush1.msra.mxu0 0.0
        %2540 = vmatprep.subr.mxu0 0.0
        %2541 = vmatpush1.msra.mxu0 0.0
        %2542 = vmatprep.mubr.f32.mxu0 0.0
        %2543 = vmatmul.mubr.f32.gmra.mrb[0].mxu0 %v2470
        %v2544 = vpop.f32.mrb[0].mxu0
        %v2545 = vadd.f32 0.0, %v2544
        %v2546 = vpop.f32.mrb[0].mxu0
        %v2547 = vadd.f32 0.0, %v2546
        %2548 = vdwg.mxu0
        %v2549 = vld [vmem:[%s11] sm:$0xff]
        %v2550 = vld [vmem:[%s12] sm:$0xff]
        %v2552 = vsel %vm683, %v2550, 0
        %2554 = vmatprep.subr.mxu0 %v1048
        %2555 = vmatpush1.msra.mxu0 %v1046
        %2556 = vmatprep.subr.mxu0 0.0
        %2557 = vmatpush1.msra.mxu0 0.0
        %2558 = vmatprep.subr.mxu0 0.0
        %2559 = vmatpush1.msra.mxu0 0.0
        %2560 = vmatprep.subr.mxu0 0.0
        %2561 = vmatpush1.msra.mxu0 0.0
        %2562 = vmatprep.subr.mxu0 0.0
        %2563 = vmatpush1.msra.mxu0 0.0
        %2564 = vmatprep.subr.mxu0 0.0
        %2565 = vmatpush1.msra.mxu0 0.0
        %2566 = vmatprep.subr.mxu0 0.0
        %2567 = vmatpush1.msra.mxu0 0.0
        %2568 = vmatprep.subr.mxu0 0.0
        %2569 = vmatpush1.msra.mxu0 0.0
        %2570 = vmatprep.subr.mxu0 0.0
        %2571 = vmatpush1.msra.mxu0 0.0
        %2572 = vmatprep.subr.mxu0 0.0
        %2573 = vmatpush1.msra.mxu0 0.0
        %2574 = vmatprep.subr.mxu0 0.0
        %2575 = vmatpush1.msra.mxu0 0.0
        %2576 = vmatprep.subr.mxu0 0.0
        %2577 = vmatpush1.msra.mxu0 0.0
        %2578 = vmatprep.subr.mxu0 0.0
        %2579 = vmatpush1.msra.mxu0 0.0
        %2580 = vmatprep.subr.mxu0 0.0
        %2581 = vmatpush1.msra.mxu0 0.0
        %2582 = vmatprep.subr.mxu0 0.0
        %2583 = vmatpush1.msra.mxu0 0.0
        %2584 = vmatprep.subr.mxu0 0.0
        %2585 = vmatpush1.msra.mxu0 0.0
        %2586 = vmatprep.subr.mxu0 0.0
        %2587 = vmatpush1.msra.mxu0 0.0
        %2588 = vmatprep.subr.mxu0 0.0
        %2589 = vmatpush1.msra.mxu0 0.0
        %2590 = vmatprep.subr.mxu0 0.0
        %2591 = vmatpush1.msra.mxu0 0.0
        %2592 = vmatprep.subr.mxu0 0.0
        %2593 = vmatpush1.msra.mxu0 0.0
        %2594 = vmatprep.subr.mxu0 0.0
        %2595 = vmatpush1.msra.mxu0 0.0
        %2596 = vmatprep.subr.mxu0 0.0
        %2597 = vmatpush1.msra.mxu0 0.0
        %2598 = vmatprep.subr.mxu0 0.0
        %2599 = vmatpush1.msra.mxu0 0.0
        %2600 = vmatprep.subr.mxu0 0.0
        %2601 = vmatpush1.msra.mxu0 0.0
        %2602 = vmatprep.subr.mxu0 0.0
        %2603 = vmatpush1.msra.mxu0 0.0
        %2604 = vmatprep.subr.mxu0 0.0
        %2605 = vmatpush1.msra.mxu0 0.0
        %2606 = vmatprep.subr.mxu0 0.0
        %2607 = vmatpush1.msra.mxu0 0.0
        %2608 = vmatprep.subr.mxu0 0.0
        %2609 = vmatpush1.msra.mxu0 0.0
        %2610 = vmatprep.subr.mxu0 0.0
        %2611 = vmatpush1.msra.mxu0 0.0
        %2612 = vmatprep.subr.mxu0 0.0
        %2613 = vmatpush1.msra.mxu0 0.0
        %2614 = vmatprep.subr.mxu0 0.0
        %2615 = vmatpush1.msra.mxu0 0.0
        %2616 = vmatprep.subr.mxu0 0.0
        %2617 = vmatpush1.msra.mxu0 0.0
        %2618 = vmatprep.mubr.f32.mxu0 0.0
        %2619 = vmatmul.mubr.f32.gmra.mrb[0].mxu0 %v2552
        %v2620 = vpop.f32.mrb[0].mxu0
        %v2621 = vadd.f32 0.0, %v2620
        %v2622 = vpop.f32.mrb[0].mxu0
        %v2623 = vadd.f32 0.0, %v2622
        %2624 = vdwg.mxu0
        %v2626 = vsel %vm683, %v2549, 0
        %v2628 = vsel %vm687, %v630, 0
        %v2630 = vsel %vm687, %v631, 0
        %2632 = vmatprep.subr.mxu0 %v2630
        %2633 = vmatpush1.msra.mxu0 %v2628
        %2634 = vmatprep.subr.mxu0 0.0
        %2635 = vmatpush1.msra.mxu0 0.0
        %2636 = vmatprep.subr.mxu0 0.0
        %2637 = vmatpush1.msra.mxu0 0.0
        %2638 = vmatprep.subr.mxu0 0.0
        %2639 = vmatpush1.msra.mxu0 0.0
        %2640 = vmatprep.subr.mxu0 0.0
        %2641 = vmatpush1.msra.mxu0 0.0
        %2642 = vmatprep.subr.mxu0 0.0
        %2643 = vmatpush1.msra.mxu0 0.0
        %2644 = vmatprep.subr.mxu0 0.0
        %2645 = vmatpush1.msra.mxu0 0.0
        %2646 = vmatprep.subr.mxu0 0.0
        %2647 = vmatpush1.msra.mxu0 0.0
        %2648 = vmatprep.subr.mxu0 0.0
        %2649 = vmatpush1.msra.mxu0 0.0
        %2650 = vmatprep.subr.mxu0 0.0
        %2651 = vmatpush1.msra.mxu0 0.0
        %2652 = vmatprep.subr.mxu0 0.0
        %2653 = vmatpush1.msra.mxu0 0.0
        %2654 = vmatprep.subr.mxu0 0.0
        %2655 = vmatpush1.msra.mxu0 0.0
        %2656 = vmatprep.subr.mxu0 0.0
        %2657 = vmatpush1.msra.mxu0 0.0
        %2658 = vmatprep.subr.mxu0 0.0
        %2659 = vmatpush1.msra.mxu0 0.0
        %2660 = vmatprep.subr.mxu0 0.0
        %2661 = vmatpush1.msra.mxu0 0.0
        %2662 = vmatprep.subr.mxu0 0.0
        %2663 = vmatpush1.msra.mxu0 0.0
        %2664 = vmatprep.subr.mxu0 0.0
        %2665 = vmatpush1.msra.mxu0 0.0
        %2666 = vmatprep.subr.mxu0 0.0
        %2667 = vmatpush1.msra.mxu0 0.0
        %2668 = vmatprep.subr.mxu0 0.0
        %2669 = vmatpush1.msra.mxu0 0.0
        %2670 = vmatprep.subr.mxu0 0.0
        %2671 = vmatpush1.msra.mxu0 0.0
        %2672 = vmatprep.subr.mxu0 0.0
        %2673 = vmatpush1.msra.mxu0 0.0
        %2674 = vmatprep.subr.mxu0 0.0
        %2675 = vmatpush1.msra.mxu0 0.0
        %2676 = vmatprep.subr.mxu0 0.0
        %2677 = vmatpush1.msra.mxu0 0.0
        %2678 = vmatprep.subr.mxu0 0.0
        %2679 = vmatpush1.msra.mxu0 0.0
        %2680 = vmatprep.subr.mxu0 0.0
        %2681 = vmatpush1.msra.mxu0 0.0
        %2682 = vmatprep.subr.mxu0 0.0
        %2683 = vmatpush1.msra.mxu0 0.0
        %2684 = vmatprep.subr.mxu0 0.0
        %2685 = vmatpush1.msra.mxu0 0.0
        %2686 = vmatprep.subr.mxu0 0.0
        %2687 = vmatpush1.msra.mxu0 0.0
        %2688 = vmatprep.subr.mxu0 0.0
        %2689 = vmatpush1.msra.mxu0 0.0
        %2690 = vmatprep.subr.mxu0 0.0
        %2691 = vmatpush1.msra.mxu0 0.0
        %2692 = vmatprep.subr.mxu0 0.0
        %2693 = vmatpush1.msra.mxu0 0.0
        %2694 = vmatprep.subr.mxu0 0.0
        %2695 = vmatpush1.msra.mxu0 0.0
        %2696 = vmatprep.mubr.f32.mxu0 0.0
        %2697 = vmatmul.mubr.f32.gmra.mrb[0].mxu0 %v2626
        %v2698 = vpop.f32.mrb[0].mxu0
        %v2699 = vadd.f32 %v2621, %v2698
        %v2700 = vpop.f32.mrb[0].mxu0
        %v2701 = vadd.f32 %v2623, %v2700
        %2702 = vdwg.mxu0
        %v2703 = vld [vmem:[%s13] sm:$0xff]
        %v2705 = vsel %vm683, %v2703, 0
        %v2708 = vsel %vm687, %v2545, 0
        %v2711 = vsel %vm687, %v2547, 0
        %2713 = vmatprep.subr.mxu0 %v2711
        %2714 = vmatpush1.msra.mxu0 %v2708
        %2715 = vmatprep.subr.mxu0 0.0
        %2716 = vmatpush1.msra.mxu0 0.0
        %2717 = vmatprep.subr.mxu0 0.0
        %2718 = vmatpush1.msra.mxu0 0.0
        %2719 = vmatprep.subr.mxu0 0.0
        %2720 = vmatpush1.msra.mxu0 0.0
        %2721 = vmatprep.subr.mxu0 0.0
        %2722 = vmatpush1.msra.mxu0 0.0
        %2723 = vmatprep.subr.mxu0 0.0
        %2724 = vmatpush1.msra.mxu0 0.0
        %2725 = vmatprep.subr.mxu0 0.0
        %2726 = vmatpush1.msra.mxu0 0.0
        %2727 = vmatprep.subr.mxu0 0.0
        %2728 = vmatpush1.msra.mxu0 0.0
        %2729 = vmatprep.subr.mxu0 0.0
        %2730 = vmatpush1.msra.mxu0 0.0
        %2731 = vmatprep.subr.mxu0 0.0
        %2732 = vmatpush1.msra.mxu0 0.0
        %2733 = vmatprep.subr.mxu0 0.0
        %2734 = vmatpush1.msra.mxu0 0.0
        %2735 = vmatprep.subr.mxu0 0.0
        %2736 = vmatpush1.msra.mxu0 0.0
        %2737 = vmatprep.subr.mxu0 0.0
        %2738 = vmatpush1.msra.mxu0 0.0
        %2739 = vmatprep.subr.mxu0 0.0
        %2740 = vmatpush1.msra.mxu0 0.0
        %2741 = vmatprep.subr.mxu0 0.0
        %2742 = vmatpush1.msra.mxu0 0.0
        %2743 = vmatprep.subr.mxu0 0.0
        %2744 = vmatpush1.msra.mxu0 0.0
        %2745 = vmatprep.subr.mxu0 0.0
        %2746 = vmatpush1.msra.mxu0 0.0
        %2747 = vmatprep.subr.mxu0 0.0
        %2748 = vmatpush1.msra.mxu0 0.0
        %2749 = vmatprep.subr.mxu0 0.0
        %2750 = vmatpush1.msra.mxu0 0.0
        %2751 = vmatprep.subr.mxu0 0.0
        %2752 = vmatpush1.msra.mxu0 0.0
        %2753 = vmatprep.subr.mxu0 0.0
        %2754 = vmatpush1.msra.mxu0 0.0
        %2755 = vmatprep.subr.mxu0 0.0
        %2756 = vmatpush1.msra.mxu0 0.0
        %2757 = vmatprep.subr.mxu0 0.0
        %2758 = vmatpush1.msra.mxu0 0.0
        %2759 = vmatprep.subr.mxu0 0.0
        %2760 = vmatpush1.msra.mxu0 0.0
        %2761 = vmatprep.subr.mxu0 0.0
        %2762 = vmatpush1.msra.mxu0 0.0
        %2763 = vmatprep.subr.mxu0 0.0
        %2764 = vmatpush1.msra.mxu0 0.0
        %2765 = vmatprep.subr.mxu0 0.0
        %2766 = vmatpush1.msra.mxu0 0.0
        %2767 = vmatprep.subr.mxu0 0.0
        %2768 = vmatpush1.msra.mxu0 0.0
        %2769 = vmatprep.subr.mxu0 0.0
        %2770 = vmatpush1.msra.mxu0 0.0
        %2771 = vmatprep.subr.mxu0 0.0
        %2772 = vmatpush1.msra.mxu0 0.0
        %2773 = vmatprep.subr.mxu0 0.0
        %2774 = vmatpush1.msra.mxu0 0.0
        %2775 = vmatprep.subr.mxu0 0.0
        %2776 = vmatpush1.msra.mxu0 0.0
        %2777 = vmatprep.mubr.f32.mxu0 0.0
        %2778 = vmatmul.mubr.f32.gmra.mrb[0].mxu0 %v2705
        %v2779 = vpop.f32.mrb[0].mxu0
        %v2780 = vadd.f32 0.0, %v2779
        %v2781 = vpop.f32.mrb[0].mxu0
        %v2782 = vadd.f32 0.0, %v2781
        %2783 = vdwg.mxu0
        %v2784 = vadd.f32 %v2699, %v2780
        %v2785 = vadd.f32 %v2701, %v2782
        %v2786 = vld [vmem:[%s14] sm:$0xff]
        %2788 = vset.pattern.permute.xlu0 0
        %2789 = vperm.xlu0 %2788, %v2786
        %v2790 = vpop.permute.xlu0 %2789
        %v2792 = vmul.f32 %v2784, %v2790
        %v2793 = vmul.f32 %v2785, %v2790
        %v2794 = vld [vmem:[%s15] sm:$0xff]
        %2796 = vset.pattern.permute.xlu0 0
        %2797 = vperm.xlu0 %2796, %v2794
        %v2798 = vpop.permute.xlu0 %2797
        %v2800 = vadd.f32 %v2792, %v2798
        %v2801 = vadd.f32 %v2793, %v2798
        %v2802 = vxor.u32 %v2800, 2147483648
        %v2803 = vxor.u32 %v2801, 2147483648
        %v2804 = vmul.f32 %v2802, 1.442695
        %v2805 = vpow.pop %v2804
        %v2806 = vmul.f32 %v2803, 1.442695
        %v2807 = vpow.pop %v2806
        %v2808 = vadd.f32 %v2805, 1.0
        %v2809 = vadd.f32 %v2807, 1.0
        %v2810 = vrcp.pop %v2808
        %v2811 = vmul.f32 1.0, %v2810
        %v2812 = vrcp.pop %v2809
        %v2813 = vmul.f32 1.0, %v2812
        %v2814 = vmul.f32 %v2800, %v2811
        %v2815 = vmul.f32 %v2801, %v2813
        %2816 = vst [vmem:[%s514] sm:$0xff] %v2814
        %2817 = vst [vmem:[%s514 + $0x8] sm:$0xff] %v2815
        %s2818 = sand.u32 %s379, 1
        %s2819 = scalar_lea.sflag [#allocation3], %s2818
        %s2820 = sand.u32 %s379, 1
        %s2821 = smul.addr %s2820, 16
        %s2822 = scalar_lea.vmem [#allocation2], %s2821
        // Predicated region
        $region85: #{tpu_custom_call.1} parent=83 // pred_check
          %p2823 = pneg %p389
        $region86: #{tpu_custom_call.1} parent=83 // pred_check_branch
          %2825 = sbr.rel (%p2823) target = $region88
        $region87: #{tpu_custom_call.1} parent=83 // pred_region
          %s2827 = ssub.s32 256, 256
          %2828 = vsyncadd %s2819, %s2827
          %s2829 = smul.addr %s30, 2
          %s2830 = smul.addr %s2829, 128
          %s2831 = scalar_lea.hbm %s16, %s2830
          %s2833 = sshll.u32 %s2822, 4
          %s2834 = int_to_ptr.vmem [resolvable:$true] %s2833
          %2836 = dma.vmem_to_hbm [thread:$0]  %s2834, 256, %s2831, %s2819
        $region88: #{tpu_custom_call.1} parent=83 // pred_fallthru
          _
      $region84: #{tpu_custom_call.1} parent=5 // pred_fallthru
        _
      %p2837 = scmp.le.s32.totalorder 2, %s25
      // Predicated region
      $region89: #{tpu_custom_call.1} parent=5 // pred_check
        %p2838 = pneg %p2837
      $region90: #{tpu_custom_call.1} parent=5 // pred_check_branch
        %2840 = sbr.rel (%p2838) target = $region92
      $region91: #{tpu_custom_call.1} parent=5 // pred_region
        %s2841 = ssub.s32 %s25, 2
        // Predicated region
        $region93: #{tpu_custom_call.1} parent=91 // pred_check
          %p2842 = pneg %p395
        $region94: #{tpu_custom_call.1} parent=91 // pred_check_branch
          %2844 = sbr.rel (%p2842) target = $region96
        $region95: #{tpu_custom_call.1} parent=91 // pred_region
          %s2845 = sand.u32 %s380, 1
          %s2846 = scalar_lea.sflag [#allocation3], %s2845
          %s2847 = sand.u32 %s380, 1
          %s2848 = smul.addr %s2847, 16
          %s2849 = scalar_lea.vmem [#allocation2], %s2848
          %2850 = dma.done %s2846, 256
        $region96: #{tpu_custom_call.1} parent=91 // pred_fallthru
          _
      $region92: #{tpu_custom_call.1} parent=5 // pred_fallthru
        _
    $region6: #{tpu_custom_call.1} parent=1 // loop_footer
      %s29 = sadd.s32 1, %s25
    $region7: #{tpu_custom_call.1} parent=1 // loop_footer_branch
      %24 = sbr.rel target = $region3
    $region8: #{tpu_custom_call.1} parent=1 // loop_exit
      _
    %2851 = vsyncpa [#allocation3], 1
    %s2852 = scalar_lea.sflag [#allocation3], 1
    %2853 = vsyncpa %s2852, 1

</llo_original>
